<compile_context>
chip_gen: v6e
topology: v6e:2x2x1
jax: 0.10.0
libtpu: 0.0.40
codegen_flags: <defaults>
</compile_context>

<pallas_src>
import jax
import jax.numpy as jnp
import numpy as np
from jax.experimental import pallas as pl
from jax.experimental.pallas import tpu as pltpu

# ---- module hyper-params (globals in the original PyTorch file) -------------
COMBINE_DOC_EMB_LEN = 16
EMBEDDING_DIMS = {"os": 8, "uid": 8, "zip_code": 8}
HEAD = 2
ATT_HIDDEN = 40
SIDE_DIM = EMBEDDING_DIMS["uid"] + EMBEDDING_DIMS["os"] + EMBEDDING_DIMS["zip_code"]
ATT_IN = 4 * COMBINE_DOC_EMB_LEN + SIDE_DIM  # 4*16 + 24 = 88
EPS = 1e-12  # F.normalize default eps


# =============================================================================
# Fused GSU kernel: trans nets + head split + both attention branches
# =============================================================================
def _prelu(h, alpha):
    return jnp.where(h > 0, h, alpha * h)


def _l2_normalize(h):
    # F.normalize(p=2, dim=-1): x / max(||x||, eps)
    n = jnp.sqrt(jnp.sum(h * h, axis=-1, keepdims=True))
    return h / jnp.maximum(n, EPS)


def gsu_fused_kernel(scal_ref,                        # SMEM (7,) f32 scalars
                     lx_ref, nx_ref, y_ref, side_ref,  # data (batch tile)
                     wy_ref, by_ref,                   # transY
                     wlx_ref, blx_ref,                 # transLocalX
                     wnx_ref, bnx_ref,                 # transNonLocalX
                     w1l_ref, b1l_ref, w2l_ref,        # local attention net
                     w1n_ref, b1n_ref, w2n_ref,        # nonlocal attention net
                     lout_ref, nout_ref, lpat_ref, npat_ref):
    f32 = jnp.float32
    cde = COMBINE_DOC_EMB_LEN

    # Scalars from SMEM (scalar path): PReLU alphas + final-linear biases.
    a_y, a_lx, a_nx = scal_ref[0], scal_ref[1], scal_ref[2]
    a1_l, b2_l = scal_ref[3], scal_ref[4]
    a1_n, b2_n = scal_ref[5], scal_ref[6]

    lx = lx_ref[...]                       # (TB, S_l, cde)
    nx = nx_ref[...]                       # (TB, S_n, cde)
    tb, s_l, _ = lx.shape
    s_n = nx.shape[1]
    side = side_ref[...]                   # (TB, SIDE_DIM)

    def trans(x2d, w_ref, b_ref, alpha):
        h = jnp.dot(x2d, w_ref[...], preferred_element_type=f32) + b_ref[...]
        return _l2_normalize(_prelu(h, alpha))

    # Linear -> PReLU -> L2 normalize.  Normalization is over the full
    # head*cde feature axis (before the head split), as in the PyTorch module.
    y_t = trans(y_ref[...], wy_ref, by_ref, a_y)                       # (TB, 2*cde)
    lx_t = trans(lx.reshape(tb * s_l, cde), wlx_ref, blx_ref, a_lx)    # (TB*S_l, 2*cde)
    nx_t = trans(nx.reshape(tb * s_n, cde), wnx_ref, bnx_ref, a_nx)    # (TB*S_n, 2*cde)
    lx_t = lx_t.reshape(tb, s_l, HEAD * cde)
    nx_t = nx_t.reshape(tb, s_n, HEAD * cde)

    def attention(x3, w1_ref, b1_ref, w2_ref, a1, b2, out_ref, pat_ref):
        s = x3.shape[1]
        # Row blocks of the (88, 40) first linear.  Feature order in the
        # original concat is [x, x*y, x-y, y, side] (all offsets 8-aligned).
        w_x = w1_ref[0 * cde:1 * cde, :]
        w_xy = w1_ref[1 * cde:2 * cde, :]
        w_xmy = w1_ref[2 * cde:3 * cde, :]
        w_y = w1_ref[3 * cde:4 * cde, :]
        w_s = w1_ref[4 * cde:, :]                                      # (24, 40)

        # S-invariant contribution (side + b1), hoisted out of the per-token
        # work: computed once per batch row instead of once per (s, head).
        side_bias = jnp.dot(side, w_s, preferred_element_type=f32) + b1_ref[...]

        for h in range(HEAD):                                          # unrolled
            x_h = x3[:, :, h * cde:(h + 1) * cde]                      # (TB, S, cde)
            y_h = y_t[:, h * cde:(h + 1) * cde]                        # (TB, cde)
            # y contribution is also S-invariant -> folded into the bias.
            bias = side_bias + jnp.dot(y_h, w_y, preferred_element_type=f32)

            y_b = y_h[:, None, :]                                      # (TB, 1, cde)
            x2 = x_h.reshape(tb * s, cde)
            xy2 = (x_h * y_b).reshape(tb * s, cde)
            xmy2 = (x_h - y_b).reshape(tb * s, cde)

            h1 = (jnp.dot(x2, w_x, preferred_element_type=f32)
                  + jnp.dot(xy2, w_xy, preferred_element_type=f32)
                  + jnp.dot(xmy2, w_xmy, preferred_element_type=f32))
            h1 = h1.reshape(tb, s, ATT_HIDDEN) + bias[:, None, :]
            h1 = _prelu(h1, a1)

            logits = jnp.dot(h1.reshape(tb * s, ATT_HIDDEN), w2_ref[...],
                             preferred_element_type=f32) + b2          # (TB*S, 1)
            logits = logits.reshape(tb, s, 1)

            pat_ref[:, h, :] = logits[:, :, 0]                         # lane-dense (TB, S)
            # attention output: sum_s x_h[s] * p_attn[s]
            out_ref[:, h * cde:(h + 1) * cde] = jnp.sum(x_h * logits, axis=1)

    attention(lx_t, w1l_ref, b1l_ref, w2l_ref, a1_l, b2_l, lout_ref, lpat_ref)
    attention(nx_t, w1n_ref, b1n_ref, w2n_ref, a1_n, b2_n, nout_ref, npat_ref)


# =============================================================================
# Wrapper: single pallas_call, gridded over batch tiles
# =============================================================================
def _pick_batch_tile(b):
    # Largest divisor of b in {64, 32, 16, 8}: keeps the sublane axis of the
    # 2-D blocks 8-aligned and double-buffered tiles small (VMEM headroom on
    # v7x's 64 MiB/TC).  Otherwise fall back to a single whole-batch block.
    for cand in (64, 32, 16, 8):
        if b % cand == 0:
            return cand
    return b


def gsu_forward(params, local_x, nonlocal_x, y, uid_embs, os_embs, zip_embs,
                is_debug=False):
    b, s_l, cde = local_x.shape
    s_n = nonlocal_x.shape[1]
    hd = HEAD * cde

    # (B, 24) side features; same order as torch.cat([uid, os, zip]).
    side = jnp.concatenate([uid_embs, os_embs, zip_embs], axis=-1)

    # Pack all true scalars (PReLU alphas, final-linear biases) for SMEM.
    scal = jnp.stack([
        params["transY"]["a"][0, 0],
        params["transLocalX"]["a"][0, 0],
        params["transNonLocalX"]["a"][0, 0],
        params["local_att"]["a1"][0, 0], params["local_att"]["b2"][0, 0],
        params["nonlocal_att"]["a1"][0, 0], params["nonlocal_att"]["b2"][0, 0],
    ]).astype(jnp.float32)

    weights = [
        params["transY"]["w"], params["transY"]["b"],
        params["transLocalX"]["w"], params["transLocalX"]["b"],
        params["transNonLocalX"]["w"], params["transNonLocalX"]["b"],
        params["local_att"]["w1"], params["local_att"]["b1"], params["local_att"]["w2"],
        params["nonlocal_att"]["w1"], params["nonlocal_att"]["b1"], params["nonlocal_att"]["w2"],
    ]

    tb = _pick_batch_tile(b)
    grid = (b // tb,)

    in_specs = [
        pl.BlockSpec(memory_space=pltpu.MemorySpace.SMEM),       # scalars
        pl.BlockSpec((tb, s_l, cde), lambda i: (i, 0, 0)),       # local_x
        pl.BlockSpec((tb, s_n, cde), lambda i: (i, 0, 0)),       # nonlocal_x
        pl.BlockSpec((tb, cde), lambda i: (i, 0)),               # y
        pl.BlockSpec((tb, SIDE_DIM), lambda i: (i, 0)),          # side
    ] + [pl.BlockSpec(w.shape, lambda i: (0, 0)) for w in weights]  # resident weights

    out_shape = (
        jax.ShapeDtypeStruct((b, hd), jnp.float32),              # local attention out
        jax.ShapeDtypeStruct((b, hd), jnp.float32),              # nonlocal attention out
        jax.ShapeDtypeStruct((b, HEAD, s_l), jnp.float32),       # local p_attn (lane-dense)
        jax.ShapeDtypeStruct((b, HEAD, s_n), jnp.float32),       # nonlocal p_attn
    )
    out_specs = (
        pl.BlockSpec((tb, hd), lambda i: (i, 0)),
        pl.BlockSpec((tb, hd), lambda i: (i, 0)),
        pl.BlockSpec((tb, HEAD, s_l), lambda i: (i, 0, 0)),
        pl.BlockSpec((tb, HEAD, s_n), lambda i: (i, 0, 0)),
    )

    local_embs, nonlocal_embs, local_p, nonlocal_p = pl.pallas_call(
        gsu_fused_kernel,
        out_shape=out_shape,
        grid=grid,
        in_specs=in_specs,
        out_specs=out_specs,
        compiler_params=pltpu.CompilerParams(
            dimension_semantics=("parallel",)),
    )(scal, local_x, nonlocal_x, y, side, *weights)

    if is_debug:
        return local_p, local_embs, nonlocal_p, nonlocal_embs
    return local_embs, nonlocal_embs


# =============================================================================
# Parameter init (PReLU alpha=0.25 like torch; small random linears)
# =============================================================================
def init_params(key):
    def lin(key, din, dout, scale=0.1):
        kw, kb = jax.random.split(key)
        w = jax.random.normal(kw, (din, dout), jnp.float32) * scale
        b = jax.random.normal(kb, (1, dout), jnp.float32) * scale
        return w, b

    keys = jax.random.split(key, 8)
    p = {}
    for name, k in zip(("transY", "transLocalX", "transNonLocalX"), keys[:3]):
        w, b = lin(k, COMBINE_DOC_EMB_LEN, HEAD * COMBINE_DOC_EMB_LEN)
        p[name] = {"w": w, "b": b, "a": jnp.full((1, 1), 0.25, jnp.float32)}
    for name, k1, k2 in zip(("local_att", "nonlocal_att"), keys[3:5], keys[5:7]):
        w1, b1 = lin(k1, ATT_IN, ATT_HIDDEN)
        w2, b2 = lin(k2, ATT_HIDDEN, 1)
        p[name] = {"w1": w1, "b1": b1, "a1": jnp.full((1, 1), 0.25, jnp.float32),
                   "w2": w2, "b2": b2}
    return p


# =============================================================================
# Pure-JAX reference (mirrors the PyTorch forward exactly, concat and all)
# =============================================================================
def gsu_reference(params, local_x, nonlocal_x, y, uid_embs, os_embs, zip_embs):
    def lin_prelu(x, w, bb, a):
        h = x @ w + bb
        return jnp.where(h > 0, h, a[0, 0] * h)

    def normalize(x):
        n = jnp.sqrt(jnp.sum(x * x, axis=-1, keepdims=True))
        return x / jnp.maximum(n, EPS)

    b = local_x.shape[0]
    cde = COMBINE_DOC_EMB_LEN
    side = jnp.concatenate([uid_embs, os_embs, zip_embs], axis=-1)

    def trans(name, x):
        pp = params[name]
        return normalize(lin_prelu(x, pp["w"], pp["b"], pp["a"]))

    def branch(att_name, x_trans, y_trans):
        pp = params[att_name]
        s = x_trans.shape[1]
        xh = x_trans.reshape(b, s, HEAD, cde).transpose(0, 2, 1, 3)        # (B,H,S,cde)
        ye = jnp.broadcast_to(y_trans[:, None, :], (b, s, HEAD * cde))
        yh = ye.reshape(b, s, HEAD, cde).transpose(0, 2, 1, 3)
        sd = jnp.broadcast_to(side[:, None, None, :], (b, HEAD, s, SIDE_DIM))
        feat = jnp.concatenate([xh, xh * yh, xh - yh, yh, sd], axis=-1)    # (B,H,S,88)
        h = lin_prelu(feat, pp["w1"], pp["b1"], pp["a1"])
        logits = h @ pp["w2"] + pp["b2"]                                   # (B,H,S,1)
        p_attn = logits[..., 0]                                            # (B,H,S)
        out = jnp.sum(xh * logits, axis=2).reshape(b, HEAD * cde)
        return p_attn, out

    lt = trans("transLocalX", local_x)
    nt = trans("transNonLocalX", nonlocal_x)
    yt = trans("transY", y)
    lp, lo = branch("local_att", lt, yt)
    npat, no = branch("nonlocal_att", nt, yt)
    return lp, lo, npat, no


if __name__ == "__main__":
    key = jax.random.PRNGKey(0)
    kp, k1, k2, k3, k4, k5, k6 = jax.random.split(key, 7)

    B, S_LOCAL, S_NONLOCAL = 2, 8, 8
    params = init_params(kp)
    local_x = jax.random.normal(k1, (B, S_LOCAL, COMBINE_DOC_EMB_LEN), jnp.float32)
    nonlocal_x = jax.random.normal(k2, (B, S_NONLOCAL, COMBINE_DOC_EMB_LEN), jnp.float32)
    y = jax.random.normal(k3, (B, COMBINE_DOC_EMB_LEN), jnp.float32)
    uid_embs = jax.random.normal(k4, (B, EMBEDDING_DIMS["uid"]), jnp.float32)
    os_embs = jax.random.normal(k5, (B, EMBEDDING_DIMS["os"]), jnp.float32)
    zip_embs = jax.random.normal(k6, (B, EMBEDDING_DIMS["zip_code"]), jnp.float32)

    fwd = jax.jit(lambda *args: gsu_forward(params, *args, is_debug=True))
    local_p, local_embs, nonlocal_p, nonlocal_embs = jax.block_until_ready(
        fwd(local_x, nonlocal_x, y, uid_embs, os_embs, zip_embs))

    ref_lp, ref_lo, ref_np, ref_no = gsu_reference(
        params, local_x, nonlocal_x, y, uid_embs, os_embs, zip_embs)

    # Tolerance allows for TPU default matmul precision (bf16 passes) combined
    # with the block-wise first-layer matmul decomposition inside the kernel;
    # structural bugs would produce O(0.1) errors and still fail this check.
    tol = dict(rtol=2e-3, atol=2e-3)
    np.testing.assert_allclose(np.asarray(local_embs), np.asarray(ref_lo), **tol)
    np.testing.assert_allclose(np.asarray(nonlocal_embs), np.asarray(ref_no), **tol)
    np.testing.assert_allclose(np.asarray(local_p), np.asarray(ref_lp), **tol)
    np.testing.assert_allclose(np.asarray(nonlocal_p), np.asarray(ref_np), **tol)
    print("KERNEL_OK")
</pallas_src>

<mosaic_0001>
module attributes {stable_mosaic.version = 11 : i64} {
  func.func @gsu_fused_kernel(%arg0: i32, %arg1: memref<7xf32, #tpu.memory_space<smem>>, %arg2: memref<2x8x16xf32, #tpu.memory_space<vmem>>, %arg3: memref<2x8x16xf32, #tpu.memory_space<vmem>>, %arg4: memref<2x16xf32, #tpu.memory_space<vmem>>, %arg5: memref<2x24xf32, #tpu.memory_space<vmem>>, %arg6: memref<16x32xf32, #tpu.memory_space<vmem>>, %arg7: memref<1x32xf32, #tpu.memory_space<vmem>>, %arg8: memref<16x32xf32, #tpu.memory_space<vmem>>, %arg9: memref<1x32xf32, #tpu.memory_space<vmem>>, %arg10: memref<16x32xf32, #tpu.memory_space<vmem>>, %arg11: memref<1x32xf32, #tpu.memory_space<vmem>>, %arg12: memref<88x40xf32, #tpu.memory_space<vmem>>, %arg13: memref<1x40xf32, #tpu.memory_space<vmem>>, %arg14: memref<40x1xf32, #tpu.memory_space<vmem>>, %arg15: memref<88x40xf32, #tpu.memory_space<vmem>>, %arg16: memref<1x40xf32, #tpu.memory_space<vmem>>, %arg17: memref<40x1xf32, #tpu.memory_space<vmem>>, %arg18: memref<2x32xf32, #tpu.memory_space<vmem>>, %arg19: memref<2x32xf32, #tpu.memory_space<vmem>>, %arg20: memref<2x2x8xf32, #tpu.memory_space<vmem>>, %arg21: memref<2x2x8xf32, #tpu.memory_space<vmem>>) attributes {dimension_semantics = [#tpu.dimension_semantics<parallel>], iteration_bounds = array<i64: 1>, scalar_prefetch = 0 : i64, scratch_operands = 0 : i64, tpu.core_type = #tpu.core_type<tc>, window_params = [{transform_indices = @transform_0, window_bounds = array<i64: 7>}, {transform_indices = @transform_1, window_bounds = array<i64: 2, 8, 16>}, {transform_indices = @transform_2, window_bounds = array<i64: 2, 8, 16>}, {transform_indices = @transform_3, window_bounds = array<i64: 2, 16>}, {transform_indices = @transform_4, window_bounds = array<i64: 2, 24>}, {pipeline_mode = #tpu.pipeline_mode<synchronous>, transform_indices = @transform_5, window_bounds = array<i64: 16, 32>}, {pipeline_mode = #tpu.pipeline_mode<synchronous>, transform_indices = @transform_6, window_bounds = array<i64: 1, 32>}, {pipeline_mode = #tpu.pipeline_mode<synchronous>, transform_indices = @transform_7, window_bounds = array<i64: 16, 32>}, {pipeline_mode = #tpu.pipeline_mode<synchronous>, transform_indices = @transform_8, window_bounds = array<i64: 1, 32>}, {pipeline_mode = #tpu.pipeline_mode<synchronous>, transform_indices = @transform_9, window_bounds = array<i64: 16, 32>}, {pipeline_mode = #tpu.pipeline_mode<synchronous>, transform_indices = @transform_10, window_bounds = array<i64: 1, 32>}, {pipeline_mode = #tpu.pipeline_mode<synchronous>, transform_indices = @transform_11, window_bounds = array<i64: 88, 40>}, {pipeline_mode = #tpu.pipeline_mode<synchronous>, transform_indices = @transform_12, window_bounds = array<i64: 1, 40>}, {pipeline_mode = #tpu.pipeline_mode<synchronous>, transform_indices = @transform_13, window_bounds = array<i64: 40, 1>}, {pipeline_mode = #tpu.pipeline_mode<synchronous>, transform_indices = @transform_14, window_bounds = array<i64: 88, 40>}, {pipeline_mode = #tpu.pipeline_mode<synchronous>, transform_indices = @transform_15, window_bounds = array<i64: 1, 40>}, {pipeline_mode = #tpu.pipeline_mode<synchronous>, transform_indices = @transform_16, window_bounds = array<i64: 40, 1>}, {transform_indices = @transform_17, window_bounds = array<i64: 2, 32>}, {transform_indices = @transform_18, window_bounds = array<i64: 2, 32>}, {transform_indices = @transform_19, window_bounds = array<i64: 2, 2, 8>}, {transform_indices = @transform_20, window_bounds = array<i64: 2, 2, 8>}]} {
    %c0 = arith.constant 0 : index
    %0 = memref.load %arg1[%c0] : memref<7xf32, #tpu.memory_space<smem>>
    %c1 = arith.constant 1 : index
    %1 = memref.load %arg1[%c1] : memref<7xf32, #tpu.memory_space<smem>>
    %c2 = arith.constant 2 : index
    %2 = memref.load %arg1[%c2] : memref<7xf32, #tpu.memory_space<smem>>
    %c3 = arith.constant 3 : index
    %3 = memref.load %arg1[%c3] : memref<7xf32, #tpu.memory_space<smem>>
    %c4 = arith.constant 4 : index
    %4 = memref.load %arg1[%c4] : memref<7xf32, #tpu.memory_space<smem>>
    %c5 = arith.constant 5 : index
    %5 = memref.load %arg1[%c5] : memref<7xf32, #tpu.memory_space<smem>>
    %c6 = arith.constant 6 : index
    %6 = memref.load %arg1[%c6] : memref<7xf32, #tpu.memory_space<smem>>
    %c0_0 = arith.constant 0 : index
    %c0_1 = arith.constant 0 : index
    %c0_2 = arith.constant 0 : index
    %7 = vector.load %arg2[%c0_0, %c0_1, %c0_2] : memref<2x8x16xf32, #tpu.memory_space<vmem>>, vector<2x8x16xf32>
    %c0_3 = arith.constant 0 : index
    %c0_4 = arith.constant 0 : index
    %c0_5 = arith.constant 0 : index
    %8 = vector.load %arg3[%c0_3, %c0_4, %c0_5] : memref<2x8x16xf32, #tpu.memory_space<vmem>>, vector<2x8x16xf32>
    %c0_6 = arith.constant 0 : index
    %c0_7 = arith.constant 0 : index
    %9 = vector.load %arg5[%c0_6, %c0_7] : memref<2x24xf32, #tpu.memory_space<vmem>>, vector<2x24xf32>
    %c0_8 = arith.constant 0 : index
    %c0_9 = arith.constant 0 : index
    %10 = vector.load %arg4[%c0_8, %c0_9] : memref<2x16xf32, #tpu.memory_space<vmem>>, vector<2x16xf32>
    %c0_10 = arith.constant 0 : index
    %c0_11 = arith.constant 0 : index
    %11 = vector.load %arg6[%c0_10, %c0_11] : memref<16x32xf32, #tpu.memory_space<vmem>>, vector<16x32xf32>
    %cst = arith.constant dense<0.000000e+00> : vector<2x32xf32>
    %12 = tpu.matmul %10, %11, %cst {dimension_numbers = #tpu.dot_dimension_numbers<[1], [0], [0], [1], [0, 0, 1, 1], [], []>} : vector<2x16xf32>, vector<16x32xf32>, vector<2x32xf32> -> vector<2x32xf32>
    %c0_12 = arith.constant 0 : index
    %c0_13 = arith.constant 0 : index
    %13 = vector.load %arg7[%c0_12, %c0_13] : memref<1x32xf32, #tpu.memory_space<vmem>>, vector<1x32xf32>
    %14 = vector.broadcast %13 : vector<1x32xf32> to vector<2x32xf32>
    %15 = arith.addf %12, %14 : vector<2x32xf32>
    %cst_14 = arith.constant 0.000000e+00 : f32
    %16 = vector.broadcast %cst_14 : f32 to vector<2x32xf32>
    %17 = arith.cmpf ogt, %15, %16 : vector<2x32xf32>
    %18 = vector.broadcast %0 : f32 to vector<2x32xf32>
    %19 = arith.mulf %18, %15 : vector<2x32xf32>
    %20 = arith.select %17, %15, %19 : vector<2x32xi1>, vector<2x32xf32>
    %21 = arith.mulf %20, %20 : vector<2x32xf32>
    %cst_15 = arith.constant dense<0.000000e+00> : vector<2xf32>
    %22 = vector.multi_reduction <add>, %21, %cst_15 [1] : vector<2x32xf32> to vector<2xf32>
    %23 = vector.shape_cast %22 : vector<2xf32> to vector<2x1xf32>
    %24 = math.sqrt %23 : vector<2x1xf32>
    %cst_16 = arith.constant 9.99999996E-13 : f32
    %25 = vector.broadcast %cst_16 : f32 to vector<2x1xf32>
    %26 = arith.maximumf %24, %25 : vector<2x1xf32>
    %27 = vector.broadcast %26 : vector<2x1xf32> to vector<2x32xf32>
    %28 = arith.divf %20, %27 : vector<2x32xf32>
    %29 = vector.shape_cast %7 : vector<2x8x16xf32> to vector<16x16xf32>
    %c0_17 = arith.constant 0 : index
    %c0_18 = arith.constant 0 : index
    %30 = vector.load %arg8[%c0_17, %c0_18] : memref<16x32xf32, #tpu.memory_space<vmem>>, vector<16x32xf32>
    %cst_19 = arith.constant dense<0.000000e+00> : vector<16x32xf32>
    %31 = tpu.matmul %29, %30, %cst_19 {dimension_numbers = #tpu.dot_dimension_numbers<[1], [0], [0], [1], [0, 0, 1, 1], [], []>} : vector<16x16xf32>, vector<16x32xf32>, vector<16x32xf32> -> vector<16x32xf32>
    %c0_20 = arith.constant 0 : index
    %c0_21 = arith.constant 0 : index
    %32 = vector.load %arg9[%c0_20, %c0_21] : memref<1x32xf32, #tpu.memory_space<vmem>>, vector<1x32xf32>
    %33 = vector.broadcast %32 : vector<1x32xf32> to vector<16x32xf32>
    %34 = arith.addf %31, %33 : vector<16x32xf32>
    %cst_22 = arith.constant 0.000000e+00 : f32
    %35 = vector.broadcast %cst_22 : f32 to vector<16x32xf32>
    %36 = arith.cmpf ogt, %34, %35 : vector<16x32xf32>
    %37 = vector.broadcast %1 : f32 to vector<16x32xf32>
    %38 = arith.mulf %37, %34 : vector<16x32xf32>
    %39 = arith.select %36, %34, %38 : vector<16x32xi1>, vector<16x32xf32>
    %40 = arith.mulf %39, %39 : vector<16x32xf32>
    %cst_23 = arith.constant dense<0.000000e+00> : vector<16xf32>
    %41 = vector.multi_reduction <add>, %40, %cst_23 [1] : vector<16x32xf32> to vector<16xf32>
    %42 = vector.shape_cast %41 : vector<16xf32> to vector<16x1xf32>
    %43 = math.sqrt %42 : vector<16x1xf32>
    %cst_24 = arith.constant 9.99999996E-13 : f32
    %44 = vector.broadcast %cst_24 : f32 to vector<16x1xf32>
    %45 = arith.maximumf %43, %44 : vector<16x1xf32>
    %46 = vector.broadcast %45 : vector<16x1xf32> to vector<16x32xf32>
    %47 = arith.divf %39, %46 : vector<16x32xf32>
    %48 = vector.shape_cast %8 : vector<2x8x16xf32> to vector<16x16xf32>
    %c0_25 = arith.constant 0 : index
    %c0_26 = arith.constant 0 : index
    %49 = vector.load %arg10[%c0_25, %c0_26] : memref<16x32xf32, #tpu.memory_space<vmem>>, vector<16x32xf32>
    %cst_27 = arith.constant dense<0.000000e+00> : vector<16x32xf32>
    %50 = tpu.matmul %48, %49, %cst_27 {dimension_numbers = #tpu.dot_dimension_numbers<[1], [0], [0], [1], [0, 0, 1, 1], [], []>} : vector<16x16xf32>, vector<16x32xf32>, vector<16x32xf32> -> vector<16x32xf32>
    %c0_28 = arith.constant 0 : index
    %c0_29 = arith.constant 0 : index
    %51 = vector.load %arg11[%c0_28, %c0_29] : memref<1x32xf32, #tpu.memory_space<vmem>>, vector<1x32xf32>
    %52 = vector.broadcast %51 : vector<1x32xf32> to vector<16x32xf32>
    %53 = arith.addf %50, %52 : vector<16x32xf32>
    %cst_30 = arith.constant 0.000000e+00 : f32
    %54 = vector.broadcast %cst_30 : f32 to vector<16x32xf32>
    %55 = arith.cmpf ogt, %53, %54 : vector<16x32xf32>
    %56 = vector.broadcast %2 : f32 to vector<16x32xf32>
    %57 = arith.mulf %56, %53 : vector<16x32xf32>
    %58 = arith.select %55, %53, %57 : vector<16x32xi1>, vector<16x32xf32>
    %59 = arith.mulf %58, %58 : vector<16x32xf32>
    %cst_31 = arith.constant dense<0.000000e+00> : vector<16xf32>
    %60 = vector.multi_reduction <add>, %59, %cst_31 [1] : vector<16x32xf32> to vector<16xf32>
    %61 = vector.shape_cast %60 : vector<16xf32> to vector<16x1xf32>
    %62 = math.sqrt %61 : vector<16x1xf32>
    %cst_32 = arith.constant 9.99999996E-13 : f32
    %63 = vector.broadcast %cst_32 : f32 to vector<16x1xf32>
    %64 = arith.maximumf %62, %63 : vector<16x1xf32>
    %65 = vector.broadcast %64 : vector<16x1xf32> to vector<16x32xf32>
    %66 = arith.divf %58, %65 : vector<16x32xf32>
    %67 = vector.shape_cast %47 : vector<16x32xf32> to vector<2x8x32xf32>
    %68 = vector.shape_cast %66 : vector<16x32xf32> to vector<2x8x32xf32>
    %c0_33 = arith.constant 0 : index
    %c0_34 = arith.constant 0 : index
    %69 = vector.load %arg12[%c0_33, %c0_34] : memref<88x40xf32, #tpu.memory_space<vmem>>, vector<16x40xf32>
    %c16 = arith.constant 16 : index
    %c0_35 = arith.constant 0 : index
    %70 = vector.load %arg12[%c16, %c0_35] : memref<88x40xf32, #tpu.memory_space<vmem>>, vector<16x40xf32>
    %c32 = arith.constant 32 : index
    %c0_36 = arith.constant 0 : index
    %71 = vector.load %arg12[%c32, %c0_36] : memref<88x40xf32, #tpu.memory_space<vmem>>, vector<16x40xf32>
    %c48 = arith.constant 48 : index
    %c0_37 = arith.constant 0 : index
    %72 = vector.load %arg12[%c48, %c0_37] : memref<88x40xf32, #tpu.memory_space<vmem>>, vector<16x40xf32>
    %c64 = arith.constant 64 : index
    %c0_38 = arith.constant 0 : index
    %73 = vector.load %arg12[%c64, %c0_38] : memref<88x40xf32, #tpu.memory_space<vmem>>, vector<24x40xf32>
    %cst_39 = arith.constant dense<0.000000e+00> : vector<2x40xf32>
    %74 = tpu.matmul %9, %73, %cst_39 {dimension_numbers = #tpu.dot_dimension_numbers<[1], [0], [0], [1], [0, 0, 1, 1], [], []>} : vector<2x24xf32>, vector<24x40xf32>, vector<2x40xf32> -> vector<2x40xf32>
    %c0_40 = arith.constant 0 : index
    %c0_41 = arith.constant 0 : index
    %75 = vector.load %arg13[%c0_40, %c0_41] : memref<1x40xf32, #tpu.memory_space<vmem>>, vector<1x40xf32>
    %76 = vector.broadcast %75 : vector<1x40xf32> to vector<2x40xf32>
    %77 = arith.addf %74, %76 : vector<2x40xf32>
    %78 = vector.extract_strided_slice %67 {offsets = [0, 0, 0], sizes = [2, 8, 16], strides = [1, 1, 1]} : vector<2x8x32xf32> to vector<2x8x16xf32>
    %79 = vector.extract_strided_slice %28 {offsets = [0, 0], sizes = [2, 16], strides = [1, 1]} : vector<2x32xf32> to vector<2x16xf32>
    %cst_42 = arith.constant dense<0.000000e+00> : vector<2x40xf32>
    %80 = tpu.matmul %79, %72, %cst_42 {dimension_numbers = #tpu.dot_dimension_numbers<[1], [0], [0], [1], [0, 0, 1, 1], [], []>} : vector<2x16xf32>, vector<16x40xf32>, vector<2x40xf32> -> vector<2x40xf32>
    %81 = arith.addf %77, %80 : vector<2x40xf32>
    %82 = vector.shape_cast %79 : vector<2x16xf32> to vector<2x1x16xf32>
    %83 = vector.shape_cast %78 : vector<2x8x16xf32> to vector<16x16xf32>
    %84 = vector.broadcast %82 : vector<2x1x16xf32> to vector<2x8x16xf32>
    %85 = arith.mulf %78, %84 : vector<2x8x16xf32>
    %86 = vector.shape_cast %85 : vector<2x8x16xf32> to vector<16x16xf32>
    %87 = vector.broadcast %82 : vector<2x1x16xf32> to vector<2x8x16xf32>
    %88 = arith.subf %78, %87 : vector<2x8x16xf32>
    %89 = vector.shape_cast %88 : vector<2x8x16xf32> to vector<16x16xf32>
    %cst_43 = arith.constant dense<0.000000e+00> : vector<16x40xf32>
    %90 = tpu.matmul %83, %69, %cst_43 {dimension_numbers = #tpu.dot_dimension_numbers<[1], [0], [0], [1], [0, 0, 1, 1], [], []>} : vector<16x16xf32>, vector<16x40xf32>, vector<16x40xf32> -> vector<16x40xf32>
    %cst_44 = arith.constant dense<0.000000e+00> : vector<16x40xf32>
    %91 = tpu.matmul %86, %70, %cst_44 {dimension_numbers = #tpu.dot_dimension_numbers<[1], [0], [0], [1], [0, 0, 1, 1], [], []>} : vector<16x16xf32>, vector<16x40xf32>, vector<16x40xf32> -> vector<16x40xf32>
    %92 = arith.addf %90, %91 : vector<16x40xf32>
    %cst_45 = arith.constant dense<0.000000e+00> : vector<16x40xf32>
    %93 = tpu.matmul %89, %71, %cst_45 {dimension_numbers = #tpu.dot_dimension_numbers<[1], [0], [0], [1], [0, 0, 1, 1], [], []>} : vector<16x16xf32>, vector<16x40xf32>, vector<16x40xf32> -> vector<16x40xf32>
    %94 = arith.addf %92, %93 : vector<16x40xf32>
    %95 = vector.shape_cast %94 : vector<16x40xf32> to vector<2x8x40xf32>
    %96 = vector.shape_cast %81 : vector<2x40xf32> to vector<2x1x40xf32>
    %97 = vector.broadcast %96 : vector<2x1x40xf32> to vector<2x8x40xf32>
    %98 = arith.addf %95, %97 : vector<2x8x40xf32>
    %cst_46 = arith.constant 0.000000e+00 : f32
    %99 = vector.broadcast %cst_46 : f32 to vector<2x8x40xf32>
    %100 = arith.cmpf ogt, %98, %99 : vector<2x8x40xf32>
    %101 = vector.broadcast %3 : f32 to vector<2x8x40xf32>
    %102 = arith.mulf %101, %98 : vector<2x8x40xf32>
    %103 = arith.select %100, %98, %102 : vector<2x8x40xi1>, vector<2x8x40xf32>
    %104 = vector.shape_cast %103 : vector<2x8x40xf32> to vector<16x40xf32>
    %c0_47 = arith.constant 0 : index
    %c0_48 = arith.constant 0 : index
    %105 = vector.load %arg14[%c0_47, %c0_48] : memref<40x1xf32, #tpu.memory_space<vmem>>, vector<40x1xf32>
    %cst_49 = arith.constant dense<0.000000e+00> : vector<16x1xf32>
    %106 = tpu.matmul %104, %105, %cst_49 {dimension_numbers = #tpu.dot_dimension_numbers<[1], [0], [0], [1], [0, 0, 1, 1], [], []>} : vector<16x40xf32>, vector<40x1xf32>, vector<16x1xf32> -> vector<16x1xf32>
    %107 = vector.broadcast %4 : f32 to vector<16x1xf32>
    %108 = arith.addf %106, %107 : vector<16x1xf32>
    %109 = vector.shape_cast %108 : vector<16x1xf32> to vector<2x8x1xf32>
    %110 = vector.shape_cast %109 : vector<2x8x1xf32> to vector<2x8xf32>
    %c0_50 = arith.constant 0 : index
    %c0_51 = arith.constant 0 : index
    %c0_52 = arith.constant 0 : index
    %111 = vector.load %arg20[%c0_50, %c0_51, %c0_52] : memref<2x2x8xf32, #tpu.memory_space<vmem>>, vector<2x1x8xf32>
    %112 = vector.shape_cast %111 : vector<2x1x8xf32> to vector<2x8xf32>
    %113 = vector.shape_cast %110 : vector<2x8xf32> to vector<2x1x8xf32>
    tpu.vector_store %arg20[%c0_50, %c0_51, %c0_52], %113 {strides = array<i32>} : memref<2x2x8xf32, #tpu.memory_space<vmem>>, vector<2x1x8xf32>,
    %114 = vector.broadcast %109 : vector<2x8x1xf32> to vector<2x8x16xf32>
    %115 = arith.mulf %78, %114 : vector<2x8x16xf32>
    %cst_53 = arith.constant dense<0.000000e+00> : vector<2x16xf32>
    %116 = vector.multi_reduction <add>, %115, %cst_53 [1] : vector<2x8x16xf32> to vector<2x16xf32>
    %c0_54 = arith.constant 0 : index
    %c0_55 = arith.constant 0 : index
    %117 = vector.load %arg18[%c0_54, %c0_55] : memref<2x32xf32, #tpu.memory_space<vmem>>, vector<2x16xf32>
    tpu.vector_store %arg18[%c0_54, %c0_55], %116 {strides = array<i32>} : memref<2x32xf32, #tpu.memory_space<vmem>>, vector<2x16xf32>,
    %118 = vector.extract_strided_slice %67 {offsets = [0, 0, 16], sizes = [2, 8, 16], strides = [1, 1, 1]} : vector<2x8x32xf32> to vector<2x8x16xf32>
    %119 = vector.extract_strided_slice %28 {offsets = [0, 16], sizes = [2, 16], strides = [1, 1]} : vector<2x32xf32> to vector<2x16xf32>
    %cst_56 = arith.constant dense<0.000000e+00> : vector<2x40xf32>
    %120 = tpu.matmul %119, %72, %cst_56 {dimension_numbers = #tpu.dot_dimension_numbers<[1], [0], [0], [1], [0, 0, 1, 1], [], []>} : vector<2x16xf32>, vector<16x40xf32>, vector<2x40xf32> -> vector<2x40xf32>
    %121 = arith.addf %77, %120 : vector<2x40xf32>
    %122 = vector.shape_cast %119 : vector<2x16xf32> to vector<2x1x16xf32>
    %123 = vector.shape_cast %118 : vector<2x8x16xf32> to vector<16x16xf32>
    %124 = vector.broadcast %122 : vector<2x1x16xf32> to vector<2x8x16xf32>
    %125 = arith.mulf %118, %124 : vector<2x8x16xf32>
    %126 = vector.shape_cast %125 : vector<2x8x16xf32> to vector<16x16xf32>
    %127 = vector.broadcast %122 : vector<2x1x16xf32> to vector<2x8x16xf32>
    %128 = arith.subf %118, %127 : vector<2x8x16xf32>
    %129 = vector.shape_cast %128 : vector<2x8x16xf32> to vector<16x16xf32>
    %cst_57 = arith.constant dense<0.000000e+00> : vector<16x40xf32>
    %130 = tpu.matmul %123, %69, %cst_57 {dimension_numbers = #tpu.dot_dimension_numbers<[1], [0], [0], [1], [0, 0, 1, 1], [], []>} : vector<16x16xf32>, vector<16x40xf32>, vector<16x40xf32> -> vector<16x40xf32>
    %cst_58 = arith.constant dense<0.000000e+00> : vector<16x40xf32>
    %131 = tpu.matmul %126, %70, %cst_58 {dimension_numbers = #tpu.dot_dimension_numbers<[1], [0], [0], [1], [0, 0, 1, 1], [], []>} : vector<16x16xf32>, vector<16x40xf32>, vector<16x40xf32> -> vector<16x40xf32>
    %132 = arith.addf %130, %131 : vector<16x40xf32>
    %cst_59 = arith.constant dense<0.000000e+00> : vector<16x40xf32>
    %133 = tpu.matmul %129, %71, %cst_59 {dimension_numbers = #tpu.dot_dimension_numbers<[1], [0], [0], [1], [0, 0, 1, 1], [], []>} : vector<16x16xf32>, vector<16x40xf32>, vector<16x40xf32> -> vector<16x40xf32>
    %134 = arith.addf %132, %133 : vector<16x40xf32>
    %135 = vector.shape_cast %134 : vector<16x40xf32> to vector<2x8x40xf32>
    %136 = vector.shape_cast %121 : vector<2x40xf32> to vector<2x1x40xf32>
    %137 = vector.broadcast %136 : vector<2x1x40xf32> to vector<2x8x40xf32>
    %138 = arith.addf %135, %137 : vector<2x8x40xf32>
    %cst_60 = arith.constant 0.000000e+00 : f32
    %139 = vector.broadcast %cst_60 : f32 to vector<2x8x40xf32>
    %140 = arith.cmpf ogt, %138, %139 : vector<2x8x40xf32>
    %141 = vector.broadcast %3 : f32 to vector<2x8x40xf32>
    %142 = arith.mulf %141, %138 : vector<2x8x40xf32>
    %143 = arith.select %140, %138, %142 : vector<2x8x40xi1>, vector<2x8x40xf32>
    %144 = vector.shape_cast %143 : vector<2x8x40xf32> to vector<16x40xf32>
    %c0_61 = arith.constant 0 : index
    %c0_62 = arith.constant 0 : index
    %145 = vector.load %arg14[%c0_61, %c0_62] : memref<40x1xf32, #tpu.memory_space<vmem>>, vector<40x1xf32>
    %cst_63 = arith.constant dense<0.000000e+00> : vector<16x1xf32>
    %146 = tpu.matmul %144, %145, %cst_63 {dimension_numbers = #tpu.dot_dimension_numbers<[1], [0], [0], [1], [0, 0, 1, 1], [], []>} : vector<16x40xf32>, vector<40x1xf32>, vector<16x1xf32> -> vector<16x1xf32>
    %147 = vector.broadcast %4 : f32 to vector<16x1xf32>
    %148 = arith.addf %146, %147 : vector<16x1xf32>
    %149 = vector.shape_cast %148 : vector<16x1xf32> to vector<2x8x1xf32>
    %150 = vector.shape_cast %149 : vector<2x8x1xf32> to vector<2x8xf32>
    %c0_64 = arith.constant 0 : index
    %c1_65 = arith.constant 1 : index
    %c0_66 = arith.constant 0 : index
    %151 = vector.load %arg20[%c0_64, %c1_65, %c0_66] : memref<2x2x8xf32, #tpu.memory_space<vmem>>, vector<2x1x8xf32>
    %152 = vector.shape_cast %151 : vector<2x1x8xf32> to vector<2x8xf32>
    %153 = vector.shape_cast %150 : vector<2x8xf32> to vector<2x1x8xf32>
    tpu.vector_store %arg20[%c0_64, %c1_65, %c0_66], %153 {strides = array<i32>} : memref<2x2x8xf32, #tpu.memory_space<vmem>>, vector<2x1x8xf32>,
    %154 = vector.broadcast %149 : vector<2x8x1xf32> to vector<2x8x16xf32>
    %155 = arith.mulf %118, %154 : vector<2x8x16xf32>
    %cst_67 = arith.constant dense<0.000000e+00> : vector<2x16xf32>
    %156 = vector.multi_reduction <add>, %155, %cst_67 [1] : vector<2x8x16xf32> to vector<2x16xf32>
    %c0_68 = arith.constant 0 : index
    %c16_69 = arith.constant 16 : index
    %157 = vector.load %arg18[%c0_68, %c16_69] : memref<2x32xf32, #tpu.memory_space<vmem>>, vector<2x16xf32>
    tpu.vector_store %arg18[%c0_68, %c16_69], %156 {strides = array<i32>} : memref<2x32xf32, #tpu.memory_space<vmem>>, vector<2x16xf32>,
    %c0_70 = arith.constant 0 : index
    %c0_71 = arith.constant 0 : index
    %158 = vector.load %arg15[%c0_70, %c0_71] : memref<88x40xf32, #tpu.memory_space<vmem>>, vector<16x40xf32>
    %c16_72 = arith.constant 16 : index
    %c0_73 = arith.constant 0 : index
    %159 = vector.load %arg15[%c16_72, %c0_73] : memref<88x40xf32, #tpu.memory_space<vmem>>, vector<16x40xf32>
    %c32_74 = arith.constant 32 : index
    %c0_75 = arith.constant 0 : index
    %160 = vector.load %arg15[%c32_74, %c0_75] : memref<88x40xf32, #tpu.memory_space<vmem>>, vector<16x40xf32>
    %c48_76 = arith.constant 48 : index
    %c0_77 = arith.constant 0 : index
    %161 = vector.load %arg15[%c48_76, %c0_77] : memref<88x40xf32, #tpu.memory_space<vmem>>, vector<16x40xf32>
    %c64_78 = arith.constant 64 : index
    %c0_79 = arith.constant 0 : index
    %162 = vector.load %arg15[%c64_78, %c0_79] : memref<88x40xf32, #tpu.memory_space<vmem>>, vector<24x40xf32>
    %cst_80 = arith.constant dense<0.000000e+00> : vector<2x40xf32>
    %163 = tpu.matmul %9, %162, %cst_80 {dimension_numbers = #tpu.dot_dimension_numbers<[1], [0], [0], [1], [0, 0, 1, 1], [], []>} : vector<2x24xf32>, vector<24x40xf32>, vector<2x40xf32> -> vector<2x40xf32>
    %c0_81 = arith.constant 0 : index
    %c0_82 = arith.constant 0 : index
    %164 = vector.load %arg16[%c0_81, %c0_82] : memref<1x40xf32, #tpu.memory_space<vmem>>, vector<1x40xf32>
    %165 = vector.broadcast %164 : vector<1x40xf32> to vector<2x40xf32>
    %166 = arith.addf %163, %165 : vector<2x40xf32>
    %167 = vector.extract_strided_slice %68 {offsets = [0, 0, 0], sizes = [2, 8, 16], strides = [1, 1, 1]} : vector<2x8x32xf32> to vector<2x8x16xf32>
    %168 = vector.extract_strided_slice %28 {offsets = [0, 0], sizes = [2, 16], strides = [1, 1]} : vector<2x32xf32> to vector<2x16xf32>
    %cst_83 = arith.constant dense<0.000000e+00> : vector<2x40xf32>
    %169 = tpu.matmul %168, %161, %cst_83 {dimension_numbers = #tpu.dot_dimension_numbers<[1], [0], [0], [1], [0, 0, 1, 1], [], []>} : vector<2x16xf32>, vector<16x40xf32>, vector<2x40xf32> -> vector<2x40xf32>
    %170 = arith.addf %166, %169 : vector<2x40xf32>
    %171 = vector.shape_cast %168 : vector<2x16xf32> to vector<2x1x16xf32>
    %172 = vector.shape_cast %167 : vector<2x8x16xf32> to vector<16x16xf32>
    %173 = vector.broadcast %171 : vector<2x1x16xf32> to vector<2x8x16xf32>
    %174 = arith.mulf %167, %173 : vector<2x8x16xf32>
    %175 = vector.shape_cast %174 : vector<2x8x16xf32> to vector<16x16xf32>
    %176 = vector.broadcast %171 : vector<2x1x16xf32> to vector<2x8x16xf32>
    %177 = arith.subf %167, %176 : vector<2x8x16xf32>
    %178 = vector.shape_cast %177 : vector<2x8x16xf32> to vector<16x16xf32>
    %cst_84 = arith.constant dense<0.000000e+00> : vector<16x40xf32>
    %179 = tpu.matmul %172, %158, %cst_84 {dimension_numbers = #tpu.dot_dimension_numbers<[1], [0], [0], [1], [0, 0, 1, 1], [], []>} : vector<16x16xf32>, vector<16x40xf32>, vector<16x40xf32> -> vector<16x40xf32>
    %cst_85 = arith.constant dense<0.000000e+00> : vector<16x40xf32>
    %180 = tpu.matmul %175, %159, %cst_85 {dimension_numbers = #tpu.dot_dimension_numbers<[1], [0], [0], [1], [0, 0, 1, 1], [], []>} : vector<16x16xf32>, vector<16x40xf32>, vector<16x40xf32> -> vector<16x40xf32>
    %181 = arith.addf %179, %180 : vector<16x40xf32>
    %cst_86 = arith.constant dense<0.000000e+00> : vector<16x40xf32>
    %182 = tpu.matmul %178, %160, %cst_86 {dimension_numbers = #tpu.dot_dimension_numbers<[1], [0], [0], [1], [0, 0, 1, 1], [], []>} : vector<16x16xf32>, vector<16x40xf32>, vector<16x40xf32> -> vector<16x40xf32>
    %183 = arith.addf %181, %182 : vector<16x40xf32>
    %184 = vector.shape_cast %183 : vector<16x40xf32> to vector<2x8x40xf32>
    %185 = vector.shape_cast %170 : vector<2x40xf32> to vector<2x1x40xf32>
    %186 = vector.broadcast %185 : vector<2x1x40xf32> to vector<2x8x40xf32>
    %187 = arith.addf %184, %186 : vector<2x8x40xf32>
    %cst_87 = arith.constant 0.000000e+00 : f32
    %188 = vector.broadcast %cst_87 : f32 to vector<2x8x40xf32>
    %189 = arith.cmpf ogt, %187, %188 : vector<2x8x40xf32>
    %190 = vector.broadcast %5 : f32 to vector<2x8x40xf32>
    %191 = arith.mulf %190, %187 : vector<2x8x40xf32>
    %192 = arith.select %189, %187, %191 : vector<2x8x40xi1>, vector<2x8x40xf32>
    %193 = vector.shape_cast %192 : vector<2x8x40xf32> to vector<16x40xf32>
    %c0_88 = arith.constant 0 : index
    %c0_89 = arith.constant 0 : index
    %194 = vector.load %arg17[%c0_88, %c0_89] : memref<40x1xf32, #tpu.memory_space<vmem>>, vector<40x1xf32>
    %cst_90 = arith.constant dense<0.000000e+00> : vector<16x1xf32>
    %195 = tpu.matmul %193, %194, %cst_90 {dimension_numbers = #tpu.dot_dimension_numbers<[1], [0], [0], [1], [0, 0, 1, 1], [], []>} : vector<16x40xf32>, vector<40x1xf32>, vector<16x1xf32> -> vector<16x1xf32>
    %196 = vector.broadcast %6 : f32 to vector<16x1xf32>
    %197 = arith.addf %195, %196 : vector<16x1xf32>
    %198 = vector.shape_cast %197 : vector<16x1xf32> to vector<2x8x1xf32>
    %199 = vector.shape_cast %198 : vector<2x8x1xf32> to vector<2x8xf32>
    %c0_91 = arith.constant 0 : index
    %c0_92 = arith.constant 0 : index
    %c0_93 = arith.constant 0 : index
    %200 = vector.load %arg21[%c0_91, %c0_92, %c0_93] : memref<2x2x8xf32, #tpu.memory_space<vmem>>, vector<2x1x8xf32>
    %201 = vector.shape_cast %200 : vector<2x1x8xf32> to vector<2x8xf32>
    %202 = vector.shape_cast %199 : vector<2x8xf32> to vector<2x1x8xf32>
    tpu.vector_store %arg21[%c0_91, %c0_92, %c0_93], %202 {strides = array<i32>} : memref<2x2x8xf32, #tpu.memory_space<vmem>>, vector<2x1x8xf32>,
    %203 = vector.broadcast %198 : vector<2x8x1xf32> to vector<2x8x16xf32>
    %204 = arith.mulf %167, %203 : vector<2x8x16xf32>
    %cst_94 = arith.constant dense<0.000000e+00> : vector<2x16xf32>
    %205 = vector.multi_reduction <add>, %204, %cst_94 [1] : vector<2x8x16xf32> to vector<2x16xf32>
    %c0_95 = arith.constant 0 : index
    %c0_96 = arith.constant 0 : index
    %206 = vector.load %arg19[%c0_95, %c0_96] : memref<2x32xf32, #tpu.memory_space<vmem>>, vector<2x16xf32>
    tpu.vector_store %arg19[%c0_95, %c0_96], %205 {strides = array<i32>} : memref<2x32xf32, #tpu.memory_space<vmem>>, vector<2x16xf32>,
    %207 = vector.extract_strided_slice %68 {offsets = [0, 0, 16], sizes = [2, 8, 16], strides = [1, 1, 1]} : vector<2x8x32xf32> to vector<2x8x16xf32>
    %208 = vector.extract_strided_slice %28 {offsets = [0, 16], sizes = [2, 16], strides = [1, 1]} : vector<2x32xf32> to vector<2x16xf32>
    %cst_97 = arith.constant dense<0.000000e+00> : vector<2x40xf32>
    %209 = tpu.matmul %208, %161, %cst_97 {dimension_numbers = #tpu.dot_dimension_numbers<[1], [0], [0], [1], [0, 0, 1, 1], [], []>} : vector<2x16xf32>, vector<16x40xf32>, vector<2x40xf32> -> vector<2x40xf32>
    %210 = arith.addf %166, %209 : vector<2x40xf32>
    %211 = vector.shape_cast %208 : vector<2x16xf32> to vector<2x1x16xf32>
    %212 = vector.shape_cast %207 : vector<2x8x16xf32> to vector<16x16xf32>
    %213 = vector.broadcast %211 : vector<2x1x16xf32> to vector<2x8x16xf32>
    %214 = arith.mulf %207, %213 : vector<2x8x16xf32>
    %215 = vector.shape_cast %214 : vector<2x8x16xf32> to vector<16x16xf32>
    %216 = vector.broadcast %211 : vector<2x1x16xf32> to vector<2x8x16xf32>
    %217 = arith.subf %207, %216 : vector<2x8x16xf32>
    %218 = vector.shape_cast %217 : vector<2x8x16xf32> to vector<16x16xf32>
    %cst_98 = arith.constant dense<0.000000e+00> : vector<16x40xf32>
    %219 = tpu.matmul %212, %158, %cst_98 {dimension_numbers = #tpu.dot_dimension_numbers<[1], [0], [0], [1], [0, 0, 1, 1], [], []>} : vector<16x16xf32>, vector<16x40xf32>, vector<16x40xf32> -> vector<16x40xf32>
    %cst_99 = arith.constant dense<0.000000e+00> : vector<16x40xf32>
    %220 = tpu.matmul %215, %159, %cst_99 {dimension_numbers = #tpu.dot_dimension_numbers<[1], [0], [0], [1], [0, 0, 1, 1], [], []>} : vector<16x16xf32>, vector<16x40xf32>, vector<16x40xf32> -> vector<16x40xf32>
    %221 = arith.addf %219, %220 : vector<16x40xf32>
    %cst_100 = arith.constant dense<0.000000e+00> : vector<16x40xf32>
    %222 = tpu.matmul %218, %160, %cst_100 {dimension_numbers = #tpu.dot_dimension_numbers<[1], [0], [0], [1], [0, 0, 1, 1], [], []>} : vector<16x16xf32>, vector<16x40xf32>, vector<16x40xf32> -> vector<16x40xf32>
    %223 = arith.addf %221, %222 : vector<16x40xf32>
    %224 = vector.shape_cast %223 : vector<16x40xf32> to vector<2x8x40xf32>
    %225 = vector.shape_cast %210 : vector<2x40xf32> to vector<2x1x40xf32>
    %226 = vector.broadcast %225 : vector<2x1x40xf32> to vector<2x8x40xf32>
    %227 = arith.addf %224, %226 : vector<2x8x40xf32>
    %cst_101 = arith.constant 0.000000e+00 : f32
    %228 = vector.broadcast %cst_101 : f32 to vector<2x8x40xf32>
    %229 = arith.cmpf ogt, %227, %228 : vector<2x8x40xf32>
    %230 = vector.broadcast %5 : f32 to vector<2x8x40xf32>
    %231 = arith.mulf %230, %227 : vector<2x8x40xf32>
    %232 = arith.select %229, %227, %231 : vector<2x8x40xi1>, vector<2x8x40xf32>
    %233 = vector.shape_cast %232 : vector<2x8x40xf32> to vector<16x40xf32>
    %c0_102 = arith.constant 0 : index
    %c0_103 = arith.constant 0 : index
    %234 = vector.load %arg17[%c0_102, %c0_103] : memref<40x1xf32, #tpu.memory_space<vmem>>, vector<40x1xf32>
    %cst_104 = arith.constant dense<0.000000e+00> : vector<16x1xf32>
    %235 = tpu.matmul %233, %234, %cst_104 {dimension_numbers = #tpu.dot_dimension_numbers<[1], [0], [0], [1], [0, 0, 1, 1], [], []>} : vector<16x40xf32>, vector<40x1xf32>, vector<16x1xf32> -> vector<16x1xf32>
    %236 = vector.broadcast %6 : f32 to vector<16x1xf32>
    %237 = arith.addf %235, %236 : vector<16x1xf32>
    %238 = vector.shape_cast %237 : vector<16x1xf32> to vector<2x8x1xf32>
    %239 = vector.shape_cast %238 : vector<2x8x1xf32> to vector<2x8xf32>
    %c0_105 = arith.constant 0 : index
    %c1_106 = arith.constant 1 : index
    %c0_107 = arith.constant 0 : index
    %240 = vector.load %arg21[%c0_105, %c1_106, %c0_107] : memref<2x2x8xf32, #tpu.memory_space<vmem>>, vector<2x1x8xf32>
    %241 = vector.shape_cast %240 : vector<2x1x8xf32> to vector<2x8xf32>
    %242 = vector.shape_cast %239 : vector<2x8xf32> to vector<2x1x8xf32>
    tpu.vector_store %arg21[%c0_105, %c1_106, %c0_107], %242 {strides = array<i32>} : memref<2x2x8xf32, #tpu.memory_space<vmem>>, vector<2x1x8xf32>,
    %243 = vector.broadcast %238 : vector<2x8x1xf32> to vector<2x8x16xf32>
    %244 = arith.mulf %207, %243 : vector<2x8x16xf32>
    %cst_108 = arith.constant dense<0.000000e+00> : vector<2x16xf32>
    %245 = vector.multi_reduction <add>, %244, %cst_108 [1] : vector<2x8x16xf32> to vector<2x16xf32>
    %c0_109 = arith.constant 0 : index
    %c16_110 = arith.constant 16 : index
    %246 = vector.load %arg19[%c0_109, %c16_110] : memref<2x32xf32, #tpu.memory_space<vmem>>, vector<2x16xf32>
    tpu.vector_store %arg19[%c0_109, %c16_110], %245 {strides = array<i32>} : memref<2x32xf32, #tpu.memory_space<vmem>>, vector<2x16xf32>,
    return
  }
  func.func @transform_0(%arg0: i32) -> i32 {
    %c0_i32 = arith.constant 0 : i32
    %c0_i32_0 = arith.constant 0 : i32
    return %c0_i32 : i32
  }
  func.func @transform_1(%arg0: i32) -> (i32, i32, i32) {
    %c0_i32 = arith.constant 0 : i32
    %c0_i32_0 = arith.constant 0 : i32
    %c0_i32_1 = arith.constant 0 : i32
    return %arg0, %c0_i32, %c0_i32_0 : i32, i32, i32
  }
  func.func @transform_2(%arg0: i32) -> (i32, i32, i32) {
    %c0_i32 = arith.constant 0 : i32
    %c0_i32_0 = arith.constant 0 : i32
    %c0_i32_1 = arith.constant 0 : i32
    return %arg0, %c0_i32, %c0_i32_0 : i32, i32, i32
  }
  func.func @transform_3(%arg0: i32) -> (i32, i32) {
    %c0_i32 = arith.constant 0 : i32
    %c0_i32_0 = arith.constant 0 : i32
    return %arg0, %c0_i32 : i32, i32
  }
  func.func @transform_4(%arg0: i32) -> (i32, i32) {
    %c0_i32 = arith.constant 0 : i32
    %c0_i32_0 = arith.constant 0 : i32
    return %arg0, %c0_i32 : i32, i32
  }
  func.func @transform_5(%arg0: i32) -> (i32, i32) {
    %c0_i32 = arith.constant 0 : i32
    %c0_i32_0 = arith.constant 0 : i32
    %c0_i32_1 = arith.constant 0 : i32
    return %c0_i32, %c0_i32_0 : i32, i32
  }
  func.func @transform_6(%arg0: i32) -> (i32, i32) {
    %c0_i32 = arith.constant 0 : i32
    %c0_i32_0 = arith.constant 0 : i32
    %c0_i32_1 = arith.constant 0 : i32
    return %c0_i32, %c0_i32_0 : i32, i32
  }
  func.func @transform_7(%arg0: i32) -> (i32, i32) {
    %c0_i32 = arith.constant 0 : i32
    %c0_i32_0 = arith.constant 0 : i32
    %c0_i32_1 = arith.constant 0 : i32
    return %c0_i32, %c0_i32_0 : i32, i32
  }
  func.func @transform_8(%arg0: i32) -> (i32, i32) {
    %c0_i32 = arith.constant 0 : i32
    %c0_i32_0 = arith.constant 0 : i32
    %c0_i32_1 = arith.constant 0 : i32
    return %c0_i32, %c0_i32_0 : i32, i32
  }
  func.func @transform_9(%arg0: i32) -> (i32, i32) {
    %c0_i32 = arith.constant 0 : i32
    %c0_i32_0 = arith.constant 0 : i32
    %c0_i32_1 = arith.constant 0 : i32
    return %c0_i32, %c0_i32_0 : i32, i32
  }
  func.func @transform_10(%arg0: i32) -> (i32, i32) {
    %c0_i32 = arith.constant 0 : i32
    %c0_i32_0 = arith.constant 0 : i32
    %c0_i32_1 = arith.constant 0 : i32
    return %c0_i32, %c0_i32_0 : i32, i32
  }
  func.func @transform_11(%arg0: i32) -> (i32, i32) {
    %c0_i32 = arith.constant 0 : i32
    %c0_i32_0 = arith.constant 0 : i32
    %c0_i32_1 = arith.constant 0 : i32
    return %c0_i32, %c0_i32_0 : i32, i32
  }
  func.func @transform_12(%arg0: i32) -> (i32, i32) {
    %c0_i32 = arith.constant 0 : i32
    %c0_i32_0 = arith.constant 0 : i32
    %c0_i32_1 = arith.constant 0 : i32
    return %c0_i32, %c0_i32_0 : i32, i32
  }
  func.func @transform_13(%arg0: i32) -> (i32, i32) {
    %c0_i32 = arith.constant 0 : i32
    %c0_i32_0 = arith.constant 0 : i32
    %c0_i32_1 = arith.constant 0 : i32
    return %c0_i32, %c0_i32_0 : i32, i32
  }
  func.func @transform_14(%arg0: i32) -> (i32, i32) {
    %c0_i32 = arith.constant 0 : i32
    %c0_i32_0 = arith.constant 0 : i32
    %c0_i32_1 = arith.constant 0 : i32
    return %c0_i32, %c0_i32_0 : i32, i32
  }
  func.func @transform_15(%arg0: i32) -> (i32, i32) {
    %c0_i32 = arith.constant 0 : i32
    %c0_i32_0 = arith.constant 0 : i32
    %c0_i32_1 = arith.constant 0 : i32
    return %c0_i32, %c0_i32_0 : i32, i32
  }
  func.func @transform_16(%arg0: i32) -> (i32, i32) {
    %c0_i32 = arith.constant 0 : i32
    %c0_i32_0 = arith.constant 0 : i32
    %c0_i32_1 = arith.constant 0 : i32
    return %c0_i32, %c0_i32_0 : i32, i32
  }
  func.func @transform_17(%arg0: i32) -> (i32, i32) {
    %c0_i32 = arith.constant 0 : i32
    %c0_i32_0 = arith.constant 0 : i32
    return %arg0, %c0_i32 : i32, i32
  }
  func.func @transform_18(%arg0: i32) -> (i32, i32) {
    %c0_i32 = arith.constant 0 : i32
    %c0_i32_0 = arith.constant 0 : i32
    return %arg0, %c0_i32 : i32, i32
  }
  func.func @transform_19(%arg0: i32) -> (i32, i32, i32) {
    %c0_i32 = arith.constant 0 : i32
    %c0_i32_0 = arith.constant 0 : i32
    %c0_i32_1 = arith.constant 0 : i32
    return %arg0, %c0_i32, %c0_i32_0 : i32, i32, i32
  }
  func.func @transform_20(%arg0: i32) -> (i32, i32, i32) {
    %c0_i32 = arith.constant 0 : i32
    %c0_i32_0 = arith.constant 0 : i32
    %c0_i32_1 = arith.constant 0 : i32
    return %arg0, %c0_i32, %c0_i32_0 : i32, i32, i32
  }
}

</mosaic_0001>

<llo_original>
// kernel: _lambda_.1
$region0: #{_lambda_.1}
  #allocation0 [shape = 'u32[]', space=smem, size = 0x4, offset = 0x4, fixed_abs, tag = 'smem constant byte address 0x4 - core index']
  #allocation1 [shape = 'u32[144,128]{1,0:T(1,128)}', space=vmem, size = 0x12000, scoped, tag = 'internal scratch']
  %s0 = inlined_call_operand.hbm [shape: f32[7], index: 0, kind: input, shape index: {}]
  %s1 = inlined_call_operand.hbm [shape: f32[2,8,16], index: 1, kind: input, shape index: {}]
  %s2 = inlined_call_operand.hbm [shape: f32[2,8,16], index: 2, kind: input, shape index: {}]
  %s3 = inlined_call_operand.hbm [shape: f32[2,16], index: 3, kind: input, shape index: {}]
  %s4 = inlined_call_operand.vmem [shape: f32[2,24], index: 4, kind: input, shape index: {}]
  %s5 = inlined_call_operand.hbm [shape: f32[16,32], index: 5, kind: input, shape index: {}]
  %s6 = inlined_call_operand.hbm [shape: f32[1,32], index: 6, kind: input, shape index: {}]
  %s7 = inlined_call_operand.hbm [shape: f32[16,32], index: 7, kind: input, shape index: {}]
  %s8 = inlined_call_operand.hbm [shape: f32[1,32], index: 8, kind: input, shape index: {}]
  %s9 = inlined_call_operand.hbm [shape: f32[16,32], index: 9, kind: input, shape index: {}]
  %s10 = inlined_call_operand.hbm [shape: f32[1,32], index: 10, kind: input, shape index: {}]
  %s11 = inlined_call_operand.hbm [shape: f32[88,40], index: 11, kind: input, shape index: {}]
  %s12 = inlined_call_operand.hbm [shape: f32[1,40], index: 12, kind: input, shape index: {}]
  %s13 = inlined_call_operand.hbm [shape: f32[40,1], index: 13, kind: input, shape index: {}]
  %s14 = inlined_call_operand.hbm [shape: f32[88,40], index: 14, kind: input, shape index: {}]
  %s15 = inlined_call_operand.hbm [shape: f32[1,40], index: 15, kind: input, shape index: {}]
  %s16 = inlined_call_operand.vmem [shape: f32[40,1], index: 16, kind: input, shape index: {}]
  %s17 = inlined_call_operand.hbm [shape: f32[2,32], index: 17, kind: output, shape index: {0}]
  %s18 = inlined_call_operand.hbm [shape: f32[2,32], index: 18, kind: output, shape index: {1}]
  %s19 = inlined_call_operand.hbm [shape: f32[2,2,8], index: 19, kind: output, shape index: {2}]
  %s20 = inlined_call_operand.hbm [shape: f32[2,2,8], index: 20, kind: output, shape index: {3}]
  %21 = xla_tuple %s17, %s18, %s19, %s20
  %s22 = sld [smem:[#allocation0]]
  $region162: #{_lambda_.1} parent=0
    _
  %s24 = ssub.s32 1, %s22
  %s25 = scalar_select 0, %s24, %s22
  $region1: #{_lambda_.1} parent=0
    #allocation2 [shape = 'u8[512]{0}', space=smem, size = 0x200, scoped, tag = 'input window, operand 0, single buffered']
    #allocation3 [shape = 's32[1]{0}', space=sflag, size = 0x4, scoped, tag = 'scoped memory for _lambda_.1']
    #allocation4 [shape = 's32[1]{0}', space=sflag, size = 0x4, scoped, tag = 'scoped memory for _lambda_.1']
    #allocation5 [shape = 's32[1]{0}', space=sflag, size = 0x4, scoped, tag = 'scoped memory for _lambda_.1']
    #allocation6 [shape = 'u8[8192]{0}', space=vmem, size = 0x2000, scoped, tag = 'input window, operand 1, single buffered']
    #allocation7 [shape = 'u8[8192]{0}', space=vmem, size = 0x2000, scoped, tag = 'input window, operand 2, single buffered']
    #allocation8 [shape = 's32[1]{0}', space=sflag, size = 0x4, scoped, tag = 'scoped memory for _lambda_.1']
    #allocation9 [shape = 'u8[1024]{0}', space=vmem, size = 0x400, scoped, tag = 'input window, operand 3, single buffered']
    #allocation10 [shape = 'u8[8192]{0}', space=vmem, size = 0x2000, scoped, tag = 'input window, operand 5, single buffered']
    #allocation11 [shape = 's32[1]{0}', space=sflag, size = 0x4, scoped, tag = 'scoped memory for _lambda_.1']
    #allocation12 [shape = 'u8[512]{0}', space=vmem, size = 0x400, scoped, tag = 'input window, operand 6, single buffered']
    #allocation13 [shape = 'u8[8192]{0}', space=vmem, size = 0x2000, scoped, tag = 'input window, operand 7, single buffered']
    #allocation14 [shape = 's32[1]{0}', space=sflag, size = 0x4, scoped, tag = 'scoped memory for _lambda_.1']
    #allocation15 [shape = 'u8[512]{0}', space=vmem, size = 0x400, scoped, tag = 'input window, operand 8, single buffered']
    #allocation16 [shape = 'u8[8192]{0}', space=vmem, size = 0x2000, scoped, tag = 'input window, operand 9, single buffered']
    #allocation17 [shape = 's32[1]{0}', space=sflag, size = 0x4, scoped, tag = 'scoped memory for _lambda_.1']
    #allocation18 [shape = 'u8[512]{0}', space=vmem, size = 0x400, scoped, tag = 'input window, operand 10, single buffered']
    #allocation19 [shape = 'u8[45056]{0}', space=vmem, size = 0xb000, scoped, tag = 'input window, operand 11, single buffered']
    #allocation20 [shape = 's32[1]{0}', space=sflag, size = 0x4, scoped, tag = 'scoped memory for _lambda_.1']
    #allocation21 [shape = 'u8[512]{0}', space=vmem, size = 0x400, scoped, tag = 'input window, operand 12, single buffered']
    #allocation22 [shape = 'u8[20480]{0}', space=vmem, size = 0x5000, scoped, tag = 'input window, operand 13, single buffered']
    #allocation23 [shape = 's32[1]{0}', space=sflag, size = 0x4, scoped, tag = 'scoped memory for _lambda_.1']
    #allocation24 [shape = 'u8[45056]{0}', space=vmem, size = 0xb000, scoped, tag = 'input window, operand 14, single buffered']
    #allocation25 [shape = 'u8[512]{0}', space=vmem, size = 0x400, scoped, tag = 'input window, operand 15, single buffered']
    #allocation26 [shape = 's32[1]{0}', space=sflag, size = 0x4, scoped, tag = 'scoped memory for _lambda_.1']
    #allocation27 [shape = 'u8[1024]{0}', space=vmem, size = 0x400, scoped, tag = 'output window, operand 0, single buffered']
    #allocation28 [shape = 'u8[1024]{0}', space=vmem, size = 0x400, scoped, tag = 'output window, operand 1, single buffered']
    #allocation29 [shape = 's32[1]{0}', space=sflag, size = 0x4, scoped, tag = 'scoped memory for _lambda_.1']
    #allocation30 [shape = 'u8[2048]{0}', space=vmem, size = 0x800, scoped, tag = 'output window, operand 2, single buffered']
    #allocation31 [shape = 'u8[2048]{0}', space=vmem, size = 0x800, scoped, tag = 'output window, operand 3, single buffered']
    #allocation32 [shape = 's32[1]{0}', space=sflag, size = 0x4, scoped, tag = 'scoped memory for _lambda_.1']
    %26 = vsyncpa [#allocation5], 0
    %27 = vsyncpa [#allocation3], 0
    %28 = vsyncpa [#allocation8], 0
    %29 = vsyncpa [#allocation11], 0
    %30 = vsyncpa [#allocation14], 0
    %31 = vsyncpa [#allocation17], 0
    %32 = vsyncpa [#allocation20], 0
    %33 = vsyncpa [#allocation23], 0
    %34 = vsyncpa [#allocation26], 0
    %35 = vsyncpa [#allocation4], 0
    %36 = vsyncpa [#allocation29], 0
    %37 = vsyncpa [#allocation32], 0
    // Predicated region
    $region2: #{_lambda_.1} parent=1 // pred_check
      _
    $region3: #{_lambda_.1} parent=1 // pred_check_branch
      %39 = sbr.rel (0) target = $region5
    $region4: #{_lambda_.1} parent=1 // pred_region
      %s41 = ssub.s32 16, 16
      %42 = vsyncadd [#allocation5], %s41
      %45 = dma.hbm_to_smem %s0, 16, [#allocation2], [#allocation5]
    $region5: #{_lambda_.1} parent=1 // pred_fallthru
      _
    // Predicated region
    $region6: #{_lambda_.1} parent=1 // pred_check
      _
    $region7: #{_lambda_.1} parent=1 // pred_check_branch
      %47 = sbr.rel (0) target = $region9
    $region8: #{_lambda_.1} parent=1 // pred_region
      %s49 = ssub.s32 256, 256
      %50 = vsyncadd [#allocation3], %s49
      %s51 = sshll.u32 [#allocation6], 4
      %s52 = int_to_ptr.vmem [resolvable:$true] %s51
      %57 = dma.hbm_to_vmem [thread:$0]  %s1, 256, %s52, [#allocation3], 128, 128, 8
    $region9: #{_lambda_.1} parent=1 // pred_fallthru
      _
    // Predicated region
    $region10: #{_lambda_.1} parent=1 // pred_check
      _
    $region11: #{_lambda_.1} parent=1 // pred_check_branch
      %59 = sbr.rel (0) target = $region13
    $region12: #{_lambda_.1} parent=1 // pred_region
      %s61 = ssub.s32 256, 256
      %62 = vsyncadd [#allocation8], %s61
      %s63 = sshll.u32 [#allocation7], 4
      %s64 = int_to_ptr.vmem [resolvable:$true] %s63
      %69 = dma.hbm_to_vmem [thread:$0]  %s2, 256, %s64, [#allocation8], 128, 128, 8
    $region13: #{_lambda_.1} parent=1 // pred_fallthru
      _
    // Predicated region
    $region14: #{_lambda_.1} parent=1 // pred_check
      _
    $region15: #{_lambda_.1} parent=1 // pred_check_branch
      %71 = sbr.rel (0) target = $region17
    $region16: #{_lambda_.1} parent=1 // pred_region
      %s73 = ssub.s32 32, 32
      %74 = vsyncadd [#allocation8], %s73
      %s76 = sshll.u32 [#allocation9], 4
      %s77 = int_to_ptr.vmem [resolvable:$true] %s76
      %79 = dma.hbm_to_vmem [thread:$0]  %s3, 32, %s77, [#allocation8]
    $region17: #{_lambda_.1} parent=1 // pred_fallthru
      _
    // Predicated region
    $region18: #{_lambda_.1} parent=1 // pred_check
      _
    $region19: #{_lambda_.1} parent=1 // pred_check_branch
      %81 = sbr.rel (0) target = $region21
    $region20: #{_lambda_.1} parent=1 // pred_region
      _
    $region21: #{_lambda_.1} parent=1 // pred_fallthru
      _
    // Predicated region
    $region22: #{_lambda_.1} parent=1 // pred_check
      _
    $region23: #{_lambda_.1} parent=1 // pred_check_branch
      %83 = sbr.rel (0) target = $region25
    $region24: #{_lambda_.1} parent=1 // pred_region
      %s85 = ssub.s32 256, 256
      %86 = vsyncadd [#allocation11], %s85
      %s87 = sshll.u32 [#allocation10], 4
      %s88 = int_to_ptr.vmem [resolvable:$true] %s87
      %93 = dma.hbm_to_vmem [thread:$0]  %s5, 256, %s88, [#allocation11], 128, 128, 8
    $region25: #{_lambda_.1} parent=1 // pred_fallthru
      _
    // Predicated region
    $region26: #{_lambda_.1} parent=1 // pred_check
      _
    $region27: #{_lambda_.1} parent=1 // pred_check_branch
      %95 = sbr.rel (0) target = $region29
    $region28: #{_lambda_.1} parent=1 // pred_region
      %s97 = ssub.s32 16, 16
      %98 = vsyncadd [#allocation11], %s97
      %s100 = sshll.u32 [#allocation12], 4
      %s101 = int_to_ptr.vmem [resolvable:$true] %s100
      %103 = dma.hbm_to_vmem [thread:$0]  %s6, 16, %s101, [#allocation11]
    $region29: #{_lambda_.1} parent=1 // pred_fallthru
      _
    // Predicated region
    $region30: #{_lambda_.1} parent=1 // pred_check
      _
    $region31: #{_lambda_.1} parent=1 // pred_check_branch
      %105 = sbr.rel (0) target = $region33
    $region32: #{_lambda_.1} parent=1 // pred_region
      %s107 = ssub.s32 256, 256
      %108 = vsyncadd [#allocation14], %s107
      %s109 = sshll.u32 [#allocation13], 4
      %s110 = int_to_ptr.vmem [resolvable:$true] %s109
      %115 = dma.hbm_to_vmem [thread:$0]  %s7, 256, %s110, [#allocation14], 128, 128, 8
    $region33: #{_lambda_.1} parent=1 // pred_fallthru
      _
    // Predicated region
    $region34: #{_lambda_.1} parent=1 // pred_check
      _
    $region35: #{_lambda_.1} parent=1 // pred_check_branch
      %117 = sbr.rel (0) target = $region37
    $region36: #{_lambda_.1} parent=1 // pred_region
      %s119 = ssub.s32 16, 16
      %120 = vsyncadd [#allocation14], %s119
      %s122 = sshll.u32 [#allocation15], 4
      %s123 = int_to_ptr.vmem [resolvable:$true] %s122
      %125 = dma.hbm_to_vmem [thread:$0]  %s8, 16, %s123, [#allocation14]
    $region37: #{_lambda_.1} parent=1 // pred_fallthru
      _
    // Predicated region
    $region38: #{_lambda_.1} parent=1 // pred_check
      _
    $region39: #{_lambda_.1} parent=1 // pred_check_branch
      %127 = sbr.rel (0) target = $region41
    $region40: #{_lambda_.1} parent=1 // pred_region
      %s129 = ssub.s32 256, 256
      %130 = vsyncadd [#allocation17], %s129
      %s131 = sshll.u32 [#allocation16], 4
      %s132 = int_to_ptr.vmem [resolvable:$true] %s131
      %137 = dma.hbm_to_vmem [thread:$0]  %s9, 256, %s132, [#allocation17], 128, 128, 8
    $region41: #{_lambda_.1} parent=1 // pred_fallthru
      _
    // Predicated region
    $region42: #{_lambda_.1} parent=1 // pred_check
      _
    $region43: #{_lambda_.1} parent=1 // pred_check_branch
      %139 = sbr.rel (0) target = $region45
    $region44: #{_lambda_.1} parent=1 // pred_region
      %s141 = ssub.s32 16, 16
      %142 = vsyncadd [#allocation17], %s141
      %s144 = sshll.u32 [#allocation18], 4
      %s145 = int_to_ptr.vmem [resolvable:$true] %s144
      %147 = dma.hbm_to_vmem [thread:$0]  %s10, 16, %s145, [#allocation17]
    $region45: #{_lambda_.1} parent=1 // pred_fallthru
      _
    // Predicated region
    $region46: #{_lambda_.1} parent=1 // pred_check
      _
    $region47: #{_lambda_.1} parent=1 // pred_check_branch
      %149 = sbr.rel (0) target = $region49
    $region48: #{_lambda_.1} parent=1 // pred_region
      %s151 = ssub.s32 1408, 1408
      %152 = vsyncadd [#allocation20], %s151
      %s153 = sshll.u32 [#allocation19], 4
      %s154 = int_to_ptr.vmem [resolvable:$true] %s153
      %159 = dma.hbm_to_vmem [thread:$0]  %s11, 1408, %s154, [#allocation20], 128, 128, 8
    $region49: #{_lambda_.1} parent=1 // pred_fallthru
      _
    // Predicated region
    $region50: #{_lambda_.1} parent=1 // pred_check
      _
    $region51: #{_lambda_.1} parent=1 // pred_check_branch
      %161 = sbr.rel (0) target = $region53
    $region52: #{_lambda_.1} parent=1 // pred_region
      %s163 = ssub.s32 16, 16
      %164 = vsyncadd [#allocation20], %s163
      %s166 = sshll.u32 [#allocation21], 4
      %s167 = int_to_ptr.vmem [resolvable:$true] %s166
      %169 = dma.hbm_to_vmem [thread:$0]  %s12, 16, %s167, [#allocation20]
    $region53: #{_lambda_.1} parent=1 // pred_fallthru
      _
    // Predicated region
    $region54: #{_lambda_.1} parent=1 // pred_check
      _
    $region55: #{_lambda_.1} parent=1 // pred_check_branch
      %171 = sbr.rel (0) target = $region57
    $region56: #{_lambda_.1} parent=1 // pred_region
      %s173 = ssub.s32 640, 640
      %174 = vsyncadd [#allocation23], %s173
      %s175 = sshll.u32 [#allocation22], 4
      %s176 = int_to_ptr.vmem [resolvable:$true] %s175
      %181 = dma.hbm_to_vmem [thread:$0]  %s13, 640, %s176, [#allocation23], 128, 128, 8
    $region57: #{_lambda_.1} parent=1 // pred_fallthru
      _
    // Predicated region
    $region58: #{_lambda_.1} parent=1 // pred_check
      _
    $region59: #{_lambda_.1} parent=1 // pred_check_branch
      %183 = sbr.rel (0) target = $region61
    $region60: #{_lambda_.1} parent=1 // pred_region
      %s185 = ssub.s32 1408, 1408
      %186 = vsyncadd [#allocation23], %s185
      %s187 = sshll.u32 [#allocation24], 4
      %s188 = int_to_ptr.vmem [resolvable:$true] %s187
      %193 = dma.hbm_to_vmem [thread:$0]  %s14, 1408, %s188, [#allocation23], 128, 128, 8
    $region61: #{_lambda_.1} parent=1 // pred_fallthru
      _
    // Predicated region
    $region62: #{_lambda_.1} parent=1 // pred_check
      _
    $region63: #{_lambda_.1} parent=1 // pred_check_branch
      %195 = sbr.rel (0) target = $region65
    $region64: #{_lambda_.1} parent=1 // pred_region
      %s197 = ssub.s32 16, 16
      %198 = vsyncadd [#allocation26], %s197
      %s200 = sshll.u32 [#allocation25], 4
      %s201 = int_to_ptr.vmem [resolvable:$true] %s200
      %203 = dma.hbm_to_vmem [thread:$0]  %s15, 16, %s201, [#allocation26]
    $region65: #{_lambda_.1} parent=1 // pred_fallthru
      _
    // Predicated region
    $region66: #{_lambda_.1} parent=1 // pred_check
      _
    $region67: #{_lambda_.1} parent=1 // pred_check_branch
      %205 = sbr.rel (0) target = $region69
    $region68: #{_lambda_.1} parent=1 // pred_region
      _
    $region69: #{_lambda_.1} parent=1 // pred_fallthru
      _
    // Predicated region
    $region70: #{_lambda_.1} parent=1 // pred_check
      _
    $region71: #{_lambda_.1} parent=1 // pred_check_branch
      %207 = sbr.rel (0) target = $region73
    $region72: #{_lambda_.1} parent=1 // pred_region
      %208 = dma.done [#allocation5], 16
    $region73: #{_lambda_.1} parent=1 // pred_fallthru
      _
    // Predicated region
    $region74: #{_lambda_.1} parent=1 // pred_check
      _
    $region75: #{_lambda_.1} parent=1 // pred_check_branch
      %210 = sbr.rel (0) target = $region77
    $region76: #{_lambda_.1} parent=1 // pred_region
      %211 = dma.done [#allocation3], 256
    $region77: #{_lambda_.1} parent=1 // pred_fallthru
      _
    // Predicated region
    $region78: #{_lambda_.1} parent=1 // pred_check
      _
    $region79: #{_lambda_.1} parent=1 // pred_check_branch
      %213 = sbr.rel (0) target = $region81
    $region80: #{_lambda_.1} parent=1 // pred_region
      %214 = dma.done [#allocation8], 256
    $region81: #{_lambda_.1} parent=1 // pred_fallthru
      _
    // Predicated region
    $region82: #{_lambda_.1} parent=1 // pred_check
      _
    $region83: #{_lambda_.1} parent=1 // pred_check_branch
      %216 = sbr.rel (0) target = $region85
    $region84: #{_lambda_.1} parent=1 // pred_region
      %217 = dma.done [#allocation8], 32
    $region85: #{_lambda_.1} parent=1 // pred_fallthru
      _
    // Predicated region
    $region86: #{_lambda_.1} parent=1 // pred_check
      _
    $region87: #{_lambda_.1} parent=1 // pred_check_branch
      %219 = sbr.rel (0) target = $region89
    $region88: #{_lambda_.1} parent=1 // pred_region
      %220 = dma.done [#allocation11], 256
    $region89: #{_lambda_.1} parent=1 // pred_fallthru
      _
    // Predicated region
    $region90: #{_lambda_.1} parent=1 // pred_check
      _
    $region91: #{_lambda_.1} parent=1 // pred_check_branch
      %222 = sbr.rel (0) target = $region93
    $region92: #{_lambda_.1} parent=1 // pred_region
      %223 = dma.done [#allocation11], 16
    $region93: #{_lambda_.1} parent=1 // pred_fallthru
      _
    // Predicated region
    $region94: #{_lambda_.1} parent=1 // pred_check
      _
    $region95: #{_lambda_.1} parent=1 // pred_check_branch
      %225 = sbr.rel (0) target = $region97
    $region96: #{_lambda_.1} parent=1 // pred_region
      %226 = dma.done [#allocation14], 256
    $region97: #{_lambda_.1} parent=1 // pred_fallthru
      _
    // Predicated region
    $region98: #{_lambda_.1} parent=1 // pred_check
      _
    $region99: #{_lambda_.1} parent=1 // pred_check_branch
      %228 = sbr.rel (0) target = $region101
    $region100: #{_lambda_.1} parent=1 // pred_region
      %229 = dma.done [#allocation14], 16
    $region101: #{_lambda_.1} parent=1 // pred_fallthru
      _
    // Predicated region
    $region102: #{_lambda_.1} parent=1 // pred_check
      _
    $region103: #{_lambda_.1} parent=1 // pred_check_branch
      %231 = sbr.rel (0) target = $region105
    $region104: #{_lambda_.1} parent=1 // pred_region
      %232 = dma.done [#allocation17], 256
    $region105: #{_lambda_.1} parent=1 // pred_fallthru
      _
    // Predicated region
    $region106: #{_lambda_.1} parent=1 // pred_check
      _
    $region107: #{_lambda_.1} parent=1 // pred_check_branch
      %234 = sbr.rel (0) target = $region109
    $region108: #{_lambda_.1} parent=1 // pred_region
      %235 = dma.done [#allocation17], 16
    $region109: #{_lambda_.1} parent=1 // pred_fallthru
      _
    // Predicated region
    $region110: #{_lambda_.1} parent=1 // pred_check
      _
    $region111: #{_lambda_.1} parent=1 // pred_check_branch
      %237 = sbr.rel (0) target = $region113
    $region112: #{_lambda_.1} parent=1 // pred_region
      %238 = dma.done [#allocation20], 1408
    $region113: #{_lambda_.1} parent=1 // pred_fallthru
      _
    // Predicated region
    $region114: #{_lambda_.1} parent=1 // pred_check
      _
    $region115: #{_lambda_.1} parent=1 // pred_check_branch
      %240 = sbr.rel (0) target = $region117
    $region116: #{_lambda_.1} parent=1 // pred_region
      %241 = dma.done [#allocation20], 16
    $region117: #{_lambda_.1} parent=1 // pred_fallthru
      _
    // Predicated region
    $region118: #{_lambda_.1} parent=1 // pred_check
      _
    $region119: #{_lambda_.1} parent=1 // pred_check_branch
      %243 = sbr.rel (0) target = $region121
    $region120: #{_lambda_.1} parent=1 // pred_region
      %244 = dma.done [#allocation23], 640
    $region121: #{_lambda_.1} parent=1 // pred_fallthru
      _
    // Predicated region
    $region122: #{_lambda_.1} parent=1 // pred_check
      _
    $region123: #{_lambda_.1} parent=1 // pred_check_branch
      %246 = sbr.rel (0) target = $region125
    $region124: #{_lambda_.1} parent=1 // pred_region
      %247 = dma.done [#allocation23], 1408
    $region125: #{_lambda_.1} parent=1 // pred_fallthru
      _
    // Predicated region
    $region126: #{_lambda_.1} parent=1 // pred_check
      _
    $region127: #{_lambda_.1} parent=1 // pred_check_branch
      %249 = sbr.rel (0) target = $region129
    $region128: #{_lambda_.1} parent=1 // pred_region
      %250 = dma.done [#allocation26], 16
    $region129: #{_lambda_.1} parent=1 // pred_fallthru
      _
    %251 = sfence
    %s252 = sld [smem:[#allocation2]]
    %s253 = sld [smem:[#allocation2 + $0x1]]
    %s254 = sld [smem:[#allocation2 + $0x2]]
    %s255 = sld [smem:[#allocation2 + $0x3]]
    %s256 = sld [smem:[#allocation2 + $0x4]]
    %s257 = sld [smem:[#allocation2 + $0x5]]
    %s258 = sld [smem:[#allocation2 + $0x6]]
    %v259 = vld [vmem:[#allocation6] sm:$0xff]
    %v260 = vld [vmem:[#allocation6 + $0x8] sm:$0xff]
    %v261 = vld [vmem:[#allocation7] sm:$0xff]
    %v262 = vld [vmem:[#allocation7 + $0x8] sm:$0xff]
    %v263 = vld [vmem:[%s4] sm:$0x3]
    %v264 = vld [vmem:[#allocation9] sm:$0x3]
    %v265 = vld [vmem:[#allocation10] sm:$0xff]
    %v266 = vld [vmem:[#allocation10 + $0x8] sm:$0xff]
    %v267 = vld [vmem:[#allocation12] sm:$0x1]
    %v269 = vlaneseq
    %v270 = vshrl.u32 %v269, 7
    %v271 = vsub.s32 0, %v270
    %v272 = vrot.slane %v267, %v271
    %vm274 = vcmask 130048
    %v276 = vsel %vm274, %v264, 0
    %278 = vmatprep.subr.mxu0 0.0
    %279 = vmatpush1.msra.mxu0 0.0
    %280 = vmatprep.subr.mxu0 0.0
    %281 = vmatpush1.msra.mxu0 0.0
    %282 = vmatprep.subr.mxu0 0.0
    %283 = vmatpush1.msra.mxu0 0.0
    %284 = vmatprep.subr.mxu0 0.0
    %285 = vmatpush1.msra.mxu0 0.0
    %286 = vmatprep.subr.mxu0 0.0
    %287 = vmatpush1.msra.mxu0 0.0
    %288 = vmatprep.subr.mxu0 0.0
    %289 = vmatpush1.msra.mxu0 0.0
    %290 = vmatprep.subr.mxu0 0.0
    %291 = vmatpush1.msra.mxu0 0.0
    %292 = vmatprep.subr.mxu0 0.0
    %293 = vmatpush1.msra.mxu0 0.0
    %294 = vmatprep.subr.mxu0 0.0
    %295 = vmatpush1.msra.mxu0 0.0
    %296 = vmatprep.subr.mxu0 0.0
    %297 = vmatpush1.msra.mxu0 0.0
    %298 = vmatprep.subr.mxu0 0.0
    %299 = vmatpush1.msra.mxu0 0.0
    %300 = vmatprep.subr.mxu0 0.0
    %301 = vmatpush1.msra.mxu0 0.0
    %302 = vmatprep.subr.mxu0 0.0
    %303 = vmatpush1.msra.mxu0 0.0
    %304 = vmatprep.subr.mxu0 0.0
    %305 = vmatpush1.msra.mxu0 0.0
    %306 = vmatprep.subr.mxu0 0.0
    %307 = vmatpush1.msra.mxu0 %v266
    %308 = vmatprep.subr.mxu0 0.0
    %309 = vmatpush1.msra.mxu0 %v265
    %310 = vmatprep.subr.mxu0 0.0
    %311 = vmatpush2.msra.mxu0 0.0
    %312 = vmatprep.subr.mxu0 0.0
    %313 = vmatpush2.msra.mxu0 0.0
    %314 = vmatprep.subr.mxu0 0.0
    %315 = vmatpush2.msra.mxu0 0.0
    %316 = vmatprep.subr.mxu0 0.0
    %317 = vmatpush2.msra.mxu0 0.0
    %318 = vmatprep.subr.mxu0 0.0
    %319 = vmatpush2.msra.mxu0 0.0
    %320 = vmatprep.subr.mxu0 0.0
    %321 = vmatpush2.msra.mxu0 0.0
    %322 = vmatprep.subr.mxu0 0.0
    %323 = vmatpush2.msra.mxu0 0.0
    %324 = vmatprep.subr.mxu0 0.0
    %325 = vmatpush2.msra.mxu0 0.0
    %326 = vmatprep.subr.mxu0 0.0
    %327 = vmatpush2.msra.mxu0 0.0
    %328 = vmatprep.subr.mxu0 0.0
    %329 = vmatpush2.msra.mxu0 0.0
    %330 = vmatprep.subr.mxu0 0.0
    %331 = vmatpush2.msra.mxu0 0.0
    %332 = vmatprep.subr.mxu0 0.0
    %333 = vmatpush2.msra.mxu0 0.0
    %334 = vmatprep.subr.mxu0 0.0
    %335 = vmatpush2.msra.mxu0 0.0
    %336 = vmatprep.subr.mxu0 0.0
    %337 = vmatpush2.msra.mxu0 0.0
    %338 = vmatprep.subr.mxu0 0.0
    %339 = vmatpush2.msra.mxu0 0.0
    %340 = vmatprep.subr.mxu0 0.0
    %341 = vmatpush2.msra.mxu0 0.0
    %342 = vmatprep.mubr.f32.mxu0 0.0
    %343 = vmatmul.mubr.f32.gmra.mxu0 %v276
    %v344 = vpop.f32.mrf.mxu0
    %v345 = vadd.f32 %v272, %v344
    %v346 = vpop.f32.mrf.mxu0
    %347 = vdwg.mxu0
    %vm348 = vcmp.gt.f32.partialorder %v345, 0.0
    %v349 = vstv %s252
    %v350 = vmul.f32 %v349, %v345
    %v351 = vsel %vm348, %v345, %v350
    %v352 = vmul.f32 %v351, %v351
    %vm353 = vcmask 254976
    %v354 = vsel %vm353, %v352, 0.0
    %355 = vadd.xlane.f32.xlu0 %v354
    %v356 = vpop.xlane.xlu0 %355
    %v357 = vrsqrt.pop %v356
    %v358 = vmul.f32 %v356, %v357
    %vm359 = vcmp.eq.f32.partialorder %v356, inf
    %v360 = vsel %vm359, %v356, %v358
    %vm361 = vcmp.eq.f32.partialorder %v356, 0.0
    %v362 = vand.u32 %v356, 2147483648
    %v363 = vsel %vm361, %v362, %v360
    %v364 = vmax.f32 %v363, 1e-12
    %v365 = vrcp.pop %v364
    %v366 = vmul.f32 %v351, %v365
    %v367 = vld [vmem:[#allocation13] sm:$0xff]
    %v368 = vld [vmem:[#allocation13 + $0x8] sm:$0xff]
    %v369 = vld [vmem:[#allocation15] sm:$0x1]
    %v371 = vlaneseq
    %v372 = vshrl.u32 %v371, 7
    %v373 = vsub.s32 0, %v372
    %v374 = vrot.slane %v369, %v373
    %v377 = vsel %vm274, %v259, 0
    %v380 = vsel %vm274, %v260, 0
    %382 = vmatprep.subr.mxu0 0.0
    %383 = vmatpush1.msra.mxu0 0.0
    %384 = vmatprep.subr.mxu0 0.0
    %385 = vmatpush1.msra.mxu0 0.0
    %386 = vmatprep.subr.mxu0 0.0
    %387 = vmatpush1.msra.mxu0 0.0
    %388 = vmatprep.subr.mxu0 0.0
    %389 = vmatpush1.msra.mxu0 0.0
    %390 = vmatprep.subr.mxu0 0.0
    %391 = vmatpush1.msra.mxu0 0.0
    %392 = vmatprep.subr.mxu0 0.0
    %393 = vmatpush1.msra.mxu0 0.0
    %394 = vmatprep.subr.mxu0 0.0
    %395 = vmatpush1.msra.mxu0 0.0
    %396 = vmatprep.subr.mxu0 0.0
    %397 = vmatpush1.msra.mxu0 0.0
    %398 = vmatprep.subr.mxu0 0.0
    %399 = vmatpush1.msra.mxu0 0.0
    %400 = vmatprep.subr.mxu0 0.0
    %401 = vmatpush1.msra.mxu0 0.0
    %402 = vmatprep.subr.mxu0 0.0
    %403 = vmatpush1.msra.mxu0 0.0
    %404 = vmatprep.subr.mxu0 0.0
    %405 = vmatpush1.msra.mxu0 0.0
    %406 = vmatprep.subr.mxu0 0.0
    %407 = vmatpush1.msra.mxu0 0.0
    %408 = vmatprep.subr.mxu0 0.0
    %409 = vmatpush1.msra.mxu0 0.0
    %410 = vmatprep.subr.mxu0 0.0
    %411 = vmatpush1.msra.mxu0 %v368
    %412 = vmatprep.subr.mxu0 0.0
    %413 = vmatpush1.msra.mxu0 %v367
    %414 = vmatprep.subr.mxu0 0.0
    %415 = vmatpush2.msra.mxu0 0.0
    %416 = vmatprep.subr.mxu0 0.0
    %417 = vmatpush2.msra.mxu0 0.0
    %418 = vmatprep.subr.mxu0 0.0
    %419 = vmatpush2.msra.mxu0 0.0
    %420 = vmatprep.subr.mxu0 0.0
    %421 = vmatpush2.msra.mxu0 0.0
    %422 = vmatprep.subr.mxu0 0.0
    %423 = vmatpush2.msra.mxu0 0.0
    %424 = vmatprep.subr.mxu0 0.0
    %425 = vmatpush2.msra.mxu0 0.0
    %426 = vmatprep.subr.mxu0 0.0
    %427 = vmatpush2.msra.mxu0 0.0
    %428 = vmatprep.subr.mxu0 0.0
    %429 = vmatpush2.msra.mxu0 0.0
    %430 = vmatprep.subr.mxu0 0.0
    %431 = vmatpush2.msra.mxu0 0.0
    %432 = vmatprep.subr.mxu0 0.0
    %433 = vmatpush2.msra.mxu0 0.0
    %434 = vmatprep.subr.mxu0 0.0
    %435 = vmatpush2.msra.mxu0 0.0
    %436 = vmatprep.subr.mxu0 0.0
    %437 = vmatpush2.msra.mxu0 0.0
    %438 = vmatprep.subr.mxu0 0.0
    %439 = vmatpush2.msra.mxu0 0.0
    %440 = vmatprep.subr.mxu0 0.0
    %441 = vmatpush2.msra.mxu0 0.0
    %442 = vmatprep.subr.mxu0 0.0
    %443 = vmatpush2.msra.mxu0 0.0
    %444 = vmatprep.subr.mxu0 0.0
    %445 = vmatpush2.msra.mxu0 0.0
    %446 = vmatprep.mubr.f32.mxu0 0.0
    %447 = vmatmul.mubr.f32.gmra.mxu0 %v377
    %v448 = vpop.f32.mrf.mxu0
    %v449 = vadd.f32 %v374, %v448
    %v450 = vpop.f32.mrf.mxu0
    %451 = vmatprep.mubr.f32.mxu0 0.0
    %452 = vmatmul.mubr.f32.gmra.mxu0 %v380
    %v453 = vpop.f32.mrf.mxu0
    %v454 = vadd.f32 %v374, %v453
    %v455 = vpop.f32.mrf.mxu0
    %456 = vdwg.mxu0
    %vm457 = vcmp.gt.f32.partialorder %v449, 0.0
    %vm458 = vcmp.gt.f32.partialorder %v454, 0.0
    %v459 = vstv %s253
    %v460 = vmul.f32 %v459, %v449
    %v461 = vmul.f32 %v459, %v454
    %v462 = vsel %vm457, %v449, %v460
    %v463 = vsel %vm458, %v454, %v461
    %v464 = vmul.f32 %v462, %v462
    %v465 = vmul.f32 %v463, %v463
    %vm466 = vcmask 261120
    %v467 = vsel %vm466, %v464, 0.0
    %468 = vadd.xlane.f32.xlu0 %v467
    %v469 = vpop.xlane.xlu0 %468
    %v470 = vsel %vm466, %v465, 0.0
    %471 = vadd.xlane.f32.xlu0 %v470
    %v472 = vpop.xlane.xlu0 %471
    %v473 = vrsqrt.pop %v469
    %v474 = vmul.f32 %v469, %v473
    %vm475 = vcmp.eq.f32.partialorder %v469, inf
    %v476 = vsel %vm475, %v469, %v474
    %vm477 = vcmp.eq.f32.partialorder %v469, 0.0
    %v478 = vand.u32 %v469, 2147483648
    %v479 = vsel %vm477, %v478, %v476
    %v480 = vrsqrt.pop %v472
    %v481 = vmul.f32 %v472, %v480
    %vm482 = vcmp.eq.f32.partialorder %v472, inf
    %v483 = vsel %vm482, %v472, %v481
    %vm484 = vcmp.eq.f32.partialorder %v472, 0.0
    %v485 = vand.u32 %v472, 2147483648
    %v486 = vsel %vm484, %v485, %v483
    %v487 = vmax.f32 %v479, 1e-12
    %v488 = vmax.f32 %v486, 1e-12
    %v489 = vrcp.pop %v487
    %v490 = vmul.f32 %v462, %v489
    %v491 = vrcp.pop %v488
    %v492 = vmul.f32 %v463, %v491
    %v493 = vld [vmem:[#allocation16] sm:$0xff]
    %v494 = vld [vmem:[#allocation16 + $0x8] sm:$0xff]
    %v495 = vld [vmem:[#allocation18] sm:$0x1]
    %v497 = vlaneseq
    %v498 = vshrl.u32 %v497, 7
    %v499 = vsub.s32 0, %v498
    %v500 = vrot.slane %v495, %v499
    %v503 = vsel %vm274, %v261, 0
    %v506 = vsel %vm274, %v262, 0
    %508 = vmatprep.subr.mxu0 0.0
    %509 = vmatpush1.msra.mxu0 0.0
    %510 = vmatprep.subr.mxu0 0.0
    %511 = vmatpush1.msra.mxu0 0.0
    %512 = vmatprep.subr.mxu0 0.0
    %513 = vmatpush1.msra.mxu0 0.0
    %514 = vmatprep.subr.mxu0 0.0
    %515 = vmatpush1.msra.mxu0 0.0
    %516 = vmatprep.subr.mxu0 0.0
    %517 = vmatpush1.msra.mxu0 0.0
    %518 = vmatprep.subr.mxu0 0.0
    %519 = vmatpush1.msra.mxu0 0.0
    %520 = vmatprep.subr.mxu0 0.0
    %521 = vmatpush1.msra.mxu0 0.0
    %522 = vmatprep.subr.mxu0 0.0
    %523 = vmatpush1.msra.mxu0 0.0
    %524 = vmatprep.subr.mxu0 0.0
    %525 = vmatpush1.msra.mxu0 0.0
    %526 = vmatprep.subr.mxu0 0.0
    %527 = vmatpush1.msra.mxu0 0.0
    %528 = vmatprep.subr.mxu0 0.0
    %529 = vmatpush1.msra.mxu0 0.0
    %530 = vmatprep.subr.mxu0 0.0
    %531 = vmatpush1.msra.mxu0 0.0
    %532 = vmatprep.subr.mxu0 0.0
    %533 = vmatpush1.msra.mxu0 0.0
    %534 = vmatprep.subr.mxu0 0.0
    %535 = vmatpush1.msra.mxu0 0.0
    %536 = vmatprep.subr.mxu0 0.0
    %537 = vmatpush1.msra.mxu0 %v494
    %538 = vmatprep.subr.mxu0 0.0
    %539 = vmatpush1.msra.mxu0 %v493
    %540 = vmatprep.subr.mxu0 0.0
    %541 = vmatpush2.msra.mxu0 0.0
    %542 = vmatprep.subr.mxu0 0.0
    %543 = vmatpush2.msra.mxu0 0.0
    %544 = vmatprep.subr.mxu0 0.0
    %545 = vmatpush2.msra.mxu0 0.0
    %546 = vmatprep.subr.mxu0 0.0
    %547 = vmatpush2.msra.mxu0 0.0
    %548 = vmatprep.subr.mxu0 0.0
    %549 = vmatpush2.msra.mxu0 0.0
    %550 = vmatprep.subr.mxu0 0.0
    %551 = vmatpush2.msra.mxu0 0.0
    %552 = vmatprep.subr.mxu0 0.0
    %553 = vmatpush2.msra.mxu0 0.0
    %554 = vmatprep.subr.mxu0 0.0
    %555 = vmatpush2.msra.mxu0 0.0
    %556 = vmatprep.subr.mxu0 0.0
    %557 = vmatpush2.msra.mxu0 0.0
    %558 = vmatprep.subr.mxu0 0.0
    %559 = vmatpush2.msra.mxu0 0.0
    %560 = vmatprep.subr.mxu0 0.0
    %561 = vmatpush2.msra.mxu0 0.0
    %562 = vmatprep.subr.mxu0 0.0
    %563 = vmatpush2.msra.mxu0 0.0
    %564 = vmatprep.subr.mxu0 0.0
    %565 = vmatpush2.msra.mxu0 0.0
    %566 = vmatprep.subr.mxu0 0.0
    %567 = vmatpush2.msra.mxu0 0.0
    %568 = vmatprep.subr.mxu0 0.0
    %569 = vmatpush2.msra.mxu0 0.0
    %570 = vmatprep.subr.mxu0 0.0
    %571 = vmatpush2.msra.mxu0 0.0
    %572 = vmatprep.mubr.f32.mxu0 0.0
    %573 = vmatmul.mubr.f32.gmra.mxu0 %v503
    %v574 = vpop.f32.mrf.mxu0
    %v575 = vadd.f32 %v500, %v574
    %v576 = vpop.f32.mrf.mxu0
    %577 = vmatprep.mubr.f32.mxu0 0.0
    %578 = vmatmul.mubr.f32.gmra.mxu0 %v506
    %v579 = vpop.f32.mrf.mxu0
    %v580 = vadd.f32 %v500, %v579
    %v581 = vpop.f32.mrf.mxu0
    %582 = vdwg.mxu0
    %vm583 = vcmp.gt.f32.partialorder %v575, 0.0
    %vm584 = vcmp.gt.f32.partialorder %v580, 0.0
    %v585 = vstv %s254
    %v586 = vmul.f32 %v585, %v575
    %v587 = vmul.f32 %v585, %v580
    %v588 = vsel %vm583, %v575, %v586
    %v589 = vsel %vm584, %v580, %v587
    %v590 = vmul.f32 %v588, %v588
    %v591 = vmul.f32 %v589, %v589
    %v592 = vsel %vm466, %v590, 0.0
    %593 = vadd.xlane.f32.xlu0 %v592
    %v594 = vpop.xlane.xlu0 %593
    %v595 = vsel %vm466, %v591, 0.0
    %596 = vadd.xlane.f32.xlu0 %v595
    %v597 = vpop.xlane.xlu0 %596
    %v598 = vrsqrt.pop %v594
    %v599 = vmul.f32 %v594, %v598
    %vm600 = vcmp.eq.f32.partialorder %v594, inf
    %v601 = vsel %vm600, %v594, %v599
    %vm602 = vcmp.eq.f32.partialorder %v594, 0.0
    %v603 = vand.u32 %v594, 2147483648
    %v604 = vsel %vm602, %v603, %v601
    %v605 = vrsqrt.pop %v597
    %v606 = vmul.f32 %v597, %v605
    %vm607 = vcmp.eq.f32.partialorder %v597, inf
    %v608 = vsel %vm607, %v597, %v606
    %vm609 = vcmp.eq.f32.partialorder %v597, 0.0
    %v610 = vand.u32 %v597, 2147483648
    %v611 = vsel %vm609, %v610, %v608
    %v612 = vmax.f32 %v604, 1e-12
    %v613 = vmax.f32 %v611, 1e-12
    %v614 = vrcp.pop %v612
    %v615 = vmul.f32 %v588, %v614
    %v616 = vrcp.pop %v613
    %v617 = vmul.f32 %v589, %v616
    %v618 = vld [vmem:[#allocation19] sm:$0xff]
    %v619 = vld [vmem:[#allocation19 + $0x8] sm:$0xff]
    %v620 = vld [vmem:[#allocation19 + $0x10] sm:$0xff]
    %v621 = vld [vmem:[#allocation19 + $0x18] sm:$0xff]
    %v622 = vld [vmem:[#allocation19 + $0x20] sm:$0xff]
    %v623 = vld [vmem:[#allocation19 + $0x28] sm:$0xff]
    %v624 = vld [vmem:[#allocation19 + $0x30] sm:$0xff]
    %v625 = vld [vmem:[#allocation19 + $0x38] sm:$0xff]
    %v626 = vld [vmem:[#allocation19 + $0x40] sm:$0xff]
    %v627 = vld [vmem:[#allocation19 + $0x48] sm:$0xff]
    %v628 = vld [vmem:[#allocation19 + $0x50] sm:$0xff]
    %v629 = vld [vmem:[#allocation21] sm:$0x1]
    %v631 = vlaneseq
    %v632 = vshrl.u32 %v631, 7
    %v633 = vsub.s32 0, %v632
    %v634 = vrot.slane %v629, %v633
    %vm636 = vcmask 195584
    %v638 = vsel %vm636, %v263, 0
    %640 = vmatprep.subr.mxu0 0.0
    %641 = vmatpush1.msra.mxu0 0.0
    %642 = vmatprep.subr.mxu0 0.0
    %643 = vmatpush1.msra.mxu0 0.0
    %644 = vmatprep.subr.mxu0 0.0
    %645 = vmatpush1.msra.mxu0 0.0
    %646 = vmatprep.subr.mxu0 0.0
    %647 = vmatpush1.msra.mxu0 0.0
    %648 = vmatprep.subr.mxu0 0.0
    %649 = vmatpush1.msra.mxu0 0.0
    %650 = vmatprep.subr.mxu0 0.0
    %651 = vmatpush1.msra.mxu0 0.0
    %652 = vmatprep.subr.mxu0 0.0
    %653 = vmatpush1.msra.mxu0 0.0
    %654 = vmatprep.subr.mxu0 0.0
    %655 = vmatpush1.msra.mxu0 0.0
    %656 = vmatprep.subr.mxu0 0.0
    %657 = vmatpush1.msra.mxu0 0.0
    %658 = vmatprep.subr.mxu0 0.0
    %659 = vmatpush1.msra.mxu0 0.0
    %660 = vmatprep.subr.mxu0 0.0
    %661 = vmatpush1.msra.mxu0 0.0
    %662 = vmatprep.subr.mxu0 0.0
    %663 = vmatpush1.msra.mxu0 0.0
    %664 = vmatprep.subr.mxu0 0.0
    %665 = vmatpush1.msra.mxu0 0.0
    %666 = vmatprep.subr.mxu0 0.0
    %667 = vmatpush1.msra.mxu0 %v628
    %668 = vmatprep.subr.mxu0 0.0
    %669 = vmatpush1.msra.mxu0 %v627
    %670 = vmatprep.subr.mxu0 0.0
    %671 = vmatpush1.msra.mxu0 %v626
    %672 = vmatprep.subr.mxu0 0.0
    %673 = vmatpush2.msra.mxu0 0.0
    %674 = vmatprep.subr.mxu0 0.0
    %675 = vmatpush2.msra.mxu0 0.0
    %676 = vmatprep.subr.mxu0 0.0
    %677 = vmatpush2.msra.mxu0 0.0
    %678 = vmatprep.subr.mxu0 0.0
    %679 = vmatpush2.msra.mxu0 0.0
    %680 = vmatprep.subr.mxu0 0.0
    %681 = vmatpush2.msra.mxu0 0.0
    %682 = vmatprep.subr.mxu0 0.0
    %683 = vmatpush2.msra.mxu0 0.0
    %684 = vmatprep.subr.mxu0 0.0
    %685 = vmatpush2.msra.mxu0 0.0
    %686 = vmatprep.subr.mxu0 0.0
    %687 = vmatpush2.msra.mxu0 0.0
    %688 = vmatprep.subr.mxu0 0.0
    %689 = vmatpush2.msra.mxu0 0.0
    %690 = vmatprep.subr.mxu0 0.0
    %691 = vmatpush2.msra.mxu0 0.0
    %692 = vmatprep.subr.mxu0 0.0
    %693 = vmatpush2.msra.mxu0 0.0
    %694 = vmatprep.subr.mxu0 0.0
    %695 = vmatpush2.msra.mxu0 0.0
    %696 = vmatprep.subr.mxu0 0.0
    %697 = vmatpush2.msra.mxu0 0.0
    %698 = vmatprep.subr.mxu0 0.0
    %699 = vmatpush2.msra.mxu0 0.0
    %700 = vmatprep.subr.mxu0 0.0
    %701 = vmatpush2.msra.mxu0 0.0
    %702 = vmatprep.subr.mxu0 0.0
    %703 = vmatpush2.msra.mxu0 0.0
    %704 = vmatprep.mubr.f32.mxu0 0.0
    %705 = vmatmul.mubr.f32.gmra.mxu0 %v638
    %v706 = vpop.f32.mrf.mxu0
    %v707 = vadd.f32 %v634, %v706
    %v708 = vpop.f32.mrf.mxu0
    %709 = vdwg.mxu0
    %v711 = vsel %vm274, %v366, 0
    %713 = vmatprep.subr.mxu0 0.0
    %714 = vmatpush1.msra.mxu0 0.0
    %715 = vmatprep.subr.mxu0 0.0
    %716 = vmatpush1.msra.mxu0 0.0
    %717 = vmatprep.subr.mxu0 0.0
    %718 = vmatpush1.msra.mxu0 0.0
    %719 = vmatprep.subr.mxu0 0.0
    %720 = vmatpush1.msra.mxu0 0.0
    %721 = vmatprep.subr.mxu0 0.0
    %722 = vmatpush1.msra.mxu0 0.0
    %723 = vmatprep.subr.mxu0 0.0
    %724 = vmatpush1.msra.mxu0 0.0
    %725 = vmatprep.subr.mxu0 0.0
    %726 = vmatpush1.msra.mxu0 0.0
    %727 = vmatprep.subr.mxu0 0.0
    %728 = vmatpush1.msra.mxu0 0.0
    %729 = vmatprep.subr.mxu0 0.0
    %730 = vmatpush1.msra.mxu0 0.0
    %731 = vmatprep.subr.mxu0 0.0
    %732 = vmatpush1.msra.mxu0 0.0
    %733 = vmatprep.subr.mxu0 0.0
    %734 = vmatpush1.msra.mxu0 0.0
    %735 = vmatprep.subr.mxu0 0.0
    %736 = vmatpush1.msra.mxu0 0.0
    %737 = vmatprep.subr.mxu0 0.0
    %738 = vmatpush1.msra.mxu0 0.0
    %739 = vmatprep.subr.mxu0 0.0
    %740 = vmatpush1.msra.mxu0 0.0
    %741 = vmatprep.subr.mxu0 0.0
    %742 = vmatpush1.msra.mxu0 %v625
    %743 = vmatprep.subr.mxu0 0.0
    %744 = vmatpush1.msra.mxu0 %v624
    %745 = vmatprep.subr.mxu0 0.0
    %746 = vmatpush2.msra.mxu0 0.0
    %747 = vmatprep.subr.mxu0 0.0
    %748 = vmatpush2.msra.mxu0 0.0
    %749 = vmatprep.subr.mxu0 0.0
    %750 = vmatpush2.msra.mxu0 0.0
    %751 = vmatprep.subr.mxu0 0.0
    %752 = vmatpush2.msra.mxu0 0.0
    %753 = vmatprep.subr.mxu0 0.0
    %754 = vmatpush2.msra.mxu0 0.0
    %755 = vmatprep.subr.mxu0 0.0
    %756 = vmatpush2.msra.mxu0 0.0
    %757 = vmatprep.subr.mxu0 0.0
    %758 = vmatpush2.msra.mxu0 0.0
    %759 = vmatprep.subr.mxu0 0.0
    %760 = vmatpush2.msra.mxu0 0.0
    %761 = vmatprep.subr.mxu0 0.0
    %762 = vmatpush2.msra.mxu0 0.0
    %763 = vmatprep.subr.mxu0 0.0
    %764 = vmatpush2.msra.mxu0 0.0
    %765 = vmatprep.subr.mxu0 0.0
    %766 = vmatpush2.msra.mxu0 0.0
    %767 = vmatprep.subr.mxu0 0.0
    %768 = vmatpush2.msra.mxu0 0.0
    %769 = vmatprep.subr.mxu0 0.0
    %770 = vmatpush2.msra.mxu0 0.0
    %771 = vmatprep.subr.mxu0 0.0
    %772 = vmatpush2.msra.mxu0 0.0
    %773 = vmatprep.subr.mxu0 0.0
    %774 = vmatpush2.msra.mxu0 0.0
    %775 = vmatprep.subr.mxu0 0.0
    %776 = vmatpush2.msra.mxu0 0.0
    %777 = vmatprep.mubr.f32.mxu0 0.0
    %778 = vmatmul.mubr.f32.gmra.mxu0 %v711
    %v779 = vpop.f32.mrf.mxu0
    %v780 = vadd.f32 0.0, %v779
    %v781 = vpop.f32.mrf.mxu0
    %782 = vdwg.mxu0
    %v783 = vadd.f32 %v707, %v780
    %v785 = vunpack.c.l.s4 1966171168
    %v786 = vunpack.c.0.s8 %v785
    %v787 = vlaneseq
    %v788 = vshrl.u32 %v787, 7
    %v789 = vsub.s32 %v786, %v788
    %v790 = vrot.slane %v366, %v789
    %v791 = vcombine.high %v790, %v790
    %v793 = vunpack.c.l.s4 1966171168
    %v794 = vunpack.c.0.s8 %v793
    %v795 = vlaneseq
    %v796 = vshrl.u32 %v795, 7
    %v797 = vsub.s32 %v794, %v796
    %v798 = vrot.slane %v790, %v797
    %v800 = vunpack.c.l.s4 1966171168
    %v801 = vunpack.c.0.s8 %v800
    %v802 = vlaneseq
    %v803 = vshrl.u32 %v802, 7
    %v804 = vsub.s32 %v801, %v803
    %v805 = vrot.slane %v791, %v804
    %v806 = vlaneseq
    %v807 = vshrl.u32 %v806, 7
    %v808 = vsub.s32 0, %v807
    %v809 = vrot.slane %v798, %v808
    %v810 = vlaneseq
    %v811 = vshrl.u32 %v810, 7
    %v812 = vsub.s32 0, %v811
    %v813 = vrot.slane %v805, %v812
    %v816 = vmul.f32 %v490, %v809
    %v817 = vmul.f32 %v492, %v813
    %v818 = vsub.f32 %v490, %v809
    %v819 = vsub.f32 %v492, %v813
    %v821 = vsel %vm274, %v816, 0
    %v824 = vsel %vm274, %v817, 0
    %826 = vmatprep.subr.mxu0 0.0
    %827 = vmatpush1.msra.mxu0 0.0
    %828 = vmatprep.subr.mxu0 0.0
    %829 = vmatpush1.msra.mxu0 0.0
    %830 = vmatprep.subr.mxu0 0.0
    %831 = vmatpush1.msra.mxu0 0.0
    %832 = vmatprep.subr.mxu0 0.0
    %833 = vmatpush1.msra.mxu0 0.0
    %834 = vmatprep.subr.mxu0 0.0
    %835 = vmatpush1.msra.mxu0 0.0
    %836 = vmatprep.subr.mxu0 0.0
    %837 = vmatpush1.msra.mxu0 0.0
    %838 = vmatprep.subr.mxu0 0.0
    %839 = vmatpush1.msra.mxu0 0.0
    %840 = vmatprep.subr.mxu0 0.0
    %841 = vmatpush1.msra.mxu0 0.0
    %842 = vmatprep.subr.mxu0 0.0
    %843 = vmatpush1.msra.mxu0 0.0
    %844 = vmatprep.subr.mxu0 0.0
    %845 = vmatpush1.msra.mxu0 0.0
    %846 = vmatprep.subr.mxu0 0.0
    %847 = vmatpush1.msra.mxu0 0.0
    %848 = vmatprep.subr.mxu0 0.0
    %849 = vmatpush1.msra.mxu0 0.0
    %850 = vmatprep.subr.mxu0 0.0
    %851 = vmatpush1.msra.mxu0 0.0
    %852 = vmatprep.subr.mxu0 0.0
    %853 = vmatpush1.msra.mxu0 0.0
    %854 = vmatprep.subr.mxu0 0.0
    %855 = vmatpush1.msra.mxu0 %v621
    %856 = vmatprep.subr.mxu0 0.0
    %857 = vmatpush1.msra.mxu0 %v620
    %858 = vmatprep.subr.mxu0 0.0
    %859 = vmatpush2.msra.mxu0 0.0
    %860 = vmatprep.subr.mxu0 0.0
    %861 = vmatpush2.msra.mxu0 0.0
    %862 = vmatprep.subr.mxu0 0.0
    %863 = vmatpush2.msra.mxu0 0.0
    %864 = vmatprep.subr.mxu0 0.0
    %865 = vmatpush2.msra.mxu0 0.0
    %866 = vmatprep.subr.mxu0 0.0
    %867 = vmatpush2.msra.mxu0 0.0
    %868 = vmatprep.subr.mxu0 0.0
    %869 = vmatpush2.msra.mxu0 0.0
    %870 = vmatprep.subr.mxu0 0.0
    %871 = vmatpush2.msra.mxu0 0.0
    %872 = vmatprep.subr.mxu0 0.0
    %873 = vmatpush2.msra.mxu0 0.0
    %874 = vmatprep.subr.mxu0 0.0
    %875 = vmatpush2.msra.mxu0 0.0
    %876 = vmatprep.subr.mxu0 0.0
    %877 = vmatpush2.msra.mxu0 0.0
    %878 = vmatprep.subr.mxu0 0.0
    %879 = vmatpush2.msra.mxu0 0.0
    %880 = vmatprep.subr.mxu0 0.0
    %881 = vmatpush2.msra.mxu0 0.0
    %882 = vmatprep.subr.mxu0 0.0
    %883 = vmatpush2.msra.mxu0 0.0
    %884 = vmatprep.subr.mxu0 0.0
    %885 = vmatpush2.msra.mxu0 0.0
    %886 = vmatprep.subr.mxu0 0.0
    %887 = vmatpush2.msra.mxu0 0.0
    %888 = vmatprep.subr.mxu0 0.0
    %889 = vmatpush2.msra.mxu0 0.0
    %890 = vmatprep.mubr.f32.mxu0 0.0
    %891 = vmatmul.mubr.f32.gmra.mxu0 %v821
    %v892 = vpop.f32.mrf.mxu0
    %v893 = vadd.f32 0.0, %v892
    %v894 = vpop.f32.mrf.mxu0
    %895 = vmatprep.mubr.f32.mxu0 0.0
    %896 = vmatmul.mubr.f32.gmra.mxu0 %v824
    %v897 = vpop.f32.mrf.mxu0
    %v898 = vadd.f32 0.0, %v897
    %v899 = vpop.f32.mrf.mxu0
    %900 = vdwg.mxu0
    %v902 = vsel %vm274, %v490, 0
    %v905 = vsel %vm274, %v492, 0
    %907 = vmatprep.subr.mxu0 0.0
    %908 = vmatpush1.msra.mxu0 0.0
    %909 = vmatprep.subr.mxu0 0.0
    %910 = vmatpush1.msra.mxu0 0.0
    %911 = vmatprep.subr.mxu0 0.0
    %912 = vmatpush1.msra.mxu0 0.0
    %913 = vmatprep.subr.mxu0 0.0
    %914 = vmatpush1.msra.mxu0 0.0
    %915 = vmatprep.subr.mxu0 0.0
    %916 = vmatpush1.msra.mxu0 0.0
    %917 = vmatprep.subr.mxu0 0.0
    %918 = vmatpush1.msra.mxu0 0.0
    %919 = vmatprep.subr.mxu0 0.0
    %920 = vmatpush1.msra.mxu0 0.0
    %921 = vmatprep.subr.mxu0 0.0
    %922 = vmatpush1.msra.mxu0 0.0
    %923 = vmatprep.subr.mxu0 0.0
    %924 = vmatpush1.msra.mxu0 0.0
    %925 = vmatprep.subr.mxu0 0.0
    %926 = vmatpush1.msra.mxu0 0.0
    %927 = vmatprep.subr.mxu0 0.0
    %928 = vmatpush1.msra.mxu0 0.0
    %929 = vmatprep.subr.mxu0 0.0
    %930 = vmatpush1.msra.mxu0 0.0
    %931 = vmatprep.subr.mxu0 0.0
    %932 = vmatpush1.msra.mxu0 0.0
    %933 = vmatprep.subr.mxu0 0.0
    %934 = vmatpush1.msra.mxu0 0.0
    %935 = vmatprep.subr.mxu0 0.0
    %936 = vmatpush1.msra.mxu0 %v619
    %937 = vmatprep.subr.mxu0 0.0
    %938 = vmatpush1.msra.mxu0 %v618
    %939 = vmatprep.subr.mxu0 0.0
    %940 = vmatpush2.msra.mxu0 0.0
    %941 = vmatprep.subr.mxu0 0.0
    %942 = vmatpush2.msra.mxu0 0.0
    %943 = vmatprep.subr.mxu0 0.0
    %944 = vmatpush2.msra.mxu0 0.0
    %945 = vmatprep.subr.mxu0 0.0
    %946 = vmatpush2.msra.mxu0 0.0
    %947 = vmatprep.subr.mxu0 0.0
    %948 = vmatpush2.msra.mxu0 0.0
    %949 = vmatprep.subr.mxu0 0.0
    %950 = vmatpush2.msra.mxu0 0.0
    %951 = vmatprep.subr.mxu0 0.0
    %952 = vmatpush2.msra.mxu0 0.0
    %953 = vmatprep.subr.mxu0 0.0
    %954 = vmatpush2.msra.mxu0 0.0
    %955 = vmatprep.subr.mxu0 0.0
    %956 = vmatpush2.msra.mxu0 0.0
    %957 = vmatprep.subr.mxu0 0.0
    %958 = vmatpush2.msra.mxu0 0.0
    %959 = vmatprep.subr.mxu0 0.0
    %960 = vmatpush2.msra.mxu0 0.0
    %961 = vmatprep.subr.mxu0 0.0
    %962 = vmatpush2.msra.mxu0 0.0
    %963 = vmatprep.subr.mxu0 0.0
    %964 = vmatpush2.msra.mxu0 0.0
    %965 = vmatprep.subr.mxu0 0.0
    %966 = vmatpush2.msra.mxu0 0.0
    %967 = vmatprep.subr.mxu0 0.0
    %968 = vmatpush2.msra.mxu0 0.0
    %969 = vmatprep.subr.mxu0 0.0
    %970 = vmatpush2.msra.mxu0 0.0
    %971 = vmatprep.mubr.f32.mxu0 0.0
    %972 = vmatmul.mubr.f32.gmra.mxu0 %v902
    %v973 = vpop.f32.mrf.mxu0
    %v974 = vadd.f32 %v893, %v973
    %v975 = vpop.f32.mrf.mxu0
    %976 = vmatprep.mubr.f32.mxu0 0.0
    %977 = vmatmul.mubr.f32.gmra.mxu0 %v905
    %v978 = vpop.f32.mrf.mxu0
    %v979 = vadd.f32 %v898, %v978
    %v980 = vpop.f32.mrf.mxu0
    %981 = vdwg.mxu0
    %v983 = vsel %vm274, %v818, 0
    %v986 = vsel %vm274, %v819, 0
    %988 = vmatprep.subr.mxu0 0.0
    %989 = vmatpush1.msra.mxu0 0.0
    %990 = vmatprep.subr.mxu0 0.0
    %991 = vmatpush1.msra.mxu0 0.0
    %992 = vmatprep.subr.mxu0 0.0
    %993 = vmatpush1.msra.mxu0 0.0
    %994 = vmatprep.subr.mxu0 0.0
    %995 = vmatpush1.msra.mxu0 0.0
    %996 = vmatprep.subr.mxu0 0.0
    %997 = vmatpush1.msra.mxu0 0.0
    %998 = vmatprep.subr.mxu0 0.0
    %999 = vmatpush1.msra.mxu0 0.0
    %1000 = vmatprep.subr.mxu0 0.0
    %1001 = vmatpush1.msra.mxu0 0.0
    %1002 = vmatprep.subr.mxu0 0.0
    %1003 = vmatpush1.msra.mxu0 0.0
    %1004 = vmatprep.subr.mxu0 0.0
    %1005 = vmatpush1.msra.mxu0 0.0
    %1006 = vmatprep.subr.mxu0 0.0
    %1007 = vmatpush1.msra.mxu0 0.0
    %1008 = vmatprep.subr.mxu0 0.0
    %1009 = vmatpush1.msra.mxu0 0.0
    %1010 = vmatprep.subr.mxu0 0.0
    %1011 = vmatpush1.msra.mxu0 0.0
    %1012 = vmatprep.subr.mxu0 0.0
    %1013 = vmatpush1.msra.mxu0 0.0
    %1014 = vmatprep.subr.mxu0 0.0
    %1015 = vmatpush1.msra.mxu0 0.0
    %1016 = vmatprep.subr.mxu0 0.0
    %1017 = vmatpush1.msra.mxu0 %v623
    %1018 = vmatprep.subr.mxu0 0.0
    %1019 = vmatpush1.msra.mxu0 %v622
    %1020 = vmatprep.subr.mxu0 0.0
    %1021 = vmatpush2.msra.mxu0 0.0
    %1022 = vmatprep.subr.mxu0 0.0
    %1023 = vmatpush2.msra.mxu0 0.0
    %1024 = vmatprep.subr.mxu0 0.0
    %1025 = vmatpush2.msra.mxu0 0.0
    %1026 = vmatprep.subr.mxu0 0.0
    %1027 = vmatpush2.msra.mxu0 0.0
    %1028 = vmatprep.subr.mxu0 0.0
    %1029 = vmatpush2.msra.mxu0 0.0
    %1030 = vmatprep.subr.mxu0 0.0
    %1031 = vmatpush2.msra.mxu0 0.0
    %1032 = vmatprep.subr.mxu0 0.0
    %1033 = vmatpush2.msra.mxu0 0.0
    %1034 = vmatprep.subr.mxu0 0.0
    %1035 = vmatpush2.msra.mxu0 0.0
    %1036 = vmatprep.subr.mxu0 0.0
    %1037 = vmatpush2.msra.mxu0 0.0
    %1038 = vmatprep.subr.mxu0 0.0
    %1039 = vmatpush2.msra.mxu0 0.0
    %1040 = vmatprep.subr.mxu0 0.0
    %1041 = vmatpush2.msra.mxu0 0.0
    %1042 = vmatprep.subr.mxu0 0.0
    %1043 = vmatpush2.msra.mxu0 0.0
    %1044 = vmatprep.subr.mxu0 0.0
    %1045 = vmatpush2.msra.mxu0 0.0
    %1046 = vmatprep.subr.mxu0 0.0
    %1047 = vmatpush2.msra.mxu0 0.0
    %1048 = vmatprep.subr.mxu0 0.0
    %1049 = vmatpush2.msra.mxu0 0.0
    %1050 = vmatprep.subr.mxu0 0.0
    %1051 = vmatpush2.msra.mxu0 0.0
    %1052 = vmatprep.mubr.f32.mxu0 0.0
    %1053 = vmatmul.mubr.f32.gmra.mxu0 %v983
    %v1054 = vpop.f32.mrf.mxu0
    %v1055 = vadd.f32 0.0, %v1054
    %v1056 = vpop.f32.mrf.mxu0
    %1057 = vmatprep.mubr.f32.mxu0 0.0
    %1058 = vmatmul.mubr.f32.gmra.mxu0 %v986
    %v1059 = vpop.f32.mrf.mxu0
    %v1060 = vadd.f32 0.0, %v1059
    %v1061 = vpop.f32.mrf.mxu0
    %1062 = vdwg.mxu0
    %v1063 = vadd.f32 %v974, %v1055
    %v1064 = vadd.f32 %v979, %v1060
    %v1067 = vunpack.c.l.s4 1966171168
    %v1068 = vunpack.c.0.s8 %v1067
    %v1069 = vlaneseq
    %v1070 = vshrl.u32 %v1069, 7
    %v1071 = vsub.s32 %v1068, %v1070
    %v1072 = vrot.slane %v783, %v1071
    %v1073 = vcombine.high %v1072, %v1072
    %v1075 = vunpack.c.l.s4 1966171168
    %v1076 = vunpack.c.0.s8 %v1075
    %v1077 = vlaneseq
    %v1078 = vshrl.u32 %v1077, 7
    %v1079 = vsub.s32 %v1076, %v1078
    %v1080 = vrot.slane %v1072, %v1079
    %v1082 = vunpack.c.l.s4 1966171168
    %v1083 = vunpack.c.0.s8 %v1082
    %v1084 = vlaneseq
    %v1085 = vshrl.u32 %v1084, 7
    %v1086 = vsub.s32 %v1083, %v1085
    %v1087 = vrot.slane %v1073, %v1086
    %v1088 = vlaneseq
    %v1089 = vshrl.u32 %v1088, 7
    %v1090 = vsub.s32 0, %v1089
    %v1091 = vrot.slane %v1080, %v1090
    %v1092 = vlaneseq
    %v1093 = vshrl.u32 %v1092, 7
    %v1094 = vsub.s32 0, %v1093
    %v1095 = vrot.slane %v1087, %v1094
    %v1098 = vadd.f32 %v1063, %v1091
    %v1099 = vadd.f32 %v1064, %v1095
    %vm1100 = vcmp.gt.f32.partialorder %v1098, 0.0
    %vm1101 = vcmp.gt.f32.partialorder %v1099, 0.0
    %v1102 = vstv %s255
    %v1103 = vmul.f32 %v1102, %v1098
    %v1104 = vmul.f32 %v1102, %v1099
    %v1105 = vsel %vm1100, %v1098, %v1103
    %v1106 = vsel %vm1101, %v1099, %v1104
    %v1107 = vld [vmem:[#allocation22] sm:$0xff]
    %v1108 = vld [vmem:[#allocation22 + $0x8] sm:$0xff]
    %v1109 = vld [vmem:[#allocation22 + $0x10] sm:$0xff]
    %v1110 = vld [vmem:[#allocation22 + $0x18] sm:$0xff]
    %v1111 = vld [vmem:[#allocation22 + $0x20] sm:$0xff]
    %v1112 = vstv %s256
    %vm1113 = vcmask 326656
    %v1115 = vsel %vm1113, %v1105, 0
    %v1118 = vsel %vm1113, %v1106, 0
    %1120 = vmatprep.subr.mxu0 0.0
    %1121 = vmatpush1.msra.mxu0 0.0
    %1122 = vmatprep.subr.mxu0 0.0
    %1123 = vmatpush1.msra.mxu0 0.0
    %1124 = vmatprep.subr.mxu0 0.0
    %1125 = vmatpush1.msra.mxu0 0.0
    %1126 = vmatprep.subr.mxu0 0.0
    %1127 = vmatpush1.msra.mxu0 0.0
    %1128 = vmatprep.subr.mxu0 0.0
    %1129 = vmatpush1.msra.mxu0 0.0
    %1130 = vmatprep.subr.mxu0 0.0
    %1131 = vmatpush1.msra.mxu0 0.0
    %1132 = vmatprep.subr.mxu0 0.0
    %1133 = vmatpush1.msra.mxu0 0.0
    %1134 = vmatprep.subr.mxu0 0.0
    %1135 = vmatpush1.msra.mxu0 0.0
    %1136 = vmatprep.subr.mxu0 0.0
    %1137 = vmatpush1.msra.mxu0 0.0
    %1138 = vmatprep.subr.mxu0 0.0
    %1139 = vmatpush1.msra.mxu0 0.0
    %1140 = vmatprep.subr.mxu0 0.0
    %1141 = vmatpush1.msra.mxu0 0.0
    %1142 = vmatprep.subr.mxu0 0.0
    %1143 = vmatpush1.msra.mxu0 %v1111
    %1144 = vmatprep.subr.mxu0 0.0
    %1145 = vmatpush1.msra.mxu0 %v1110
    %1146 = vmatprep.subr.mxu0 0.0
    %1147 = vmatpush1.msra.mxu0 %v1109
    %1148 = vmatprep.subr.mxu0 0.0
    %1149 = vmatpush1.msra.mxu0 %v1108
    %1150 = vmatprep.subr.mxu0 0.0
    %1151 = vmatpush1.msra.mxu0 %v1107
    %1152 = vmatprep.subr.mxu0 0.0
    %1153 = vmatpush2.msra.mxu0 0.0
    %1154 = vmatprep.subr.mxu0 0.0
    %1155 = vmatpush2.msra.mxu0 0.0
    %1156 = vmatprep.subr.mxu0 0.0
    %1157 = vmatpush2.msra.mxu0 0.0
    %1158 = vmatprep.subr.mxu0 0.0
    %1159 = vmatpush2.msra.mxu0 0.0
    %1160 = vmatprep.subr.mxu0 0.0
    %1161 = vmatpush2.msra.mxu0 0.0
    %1162 = vmatprep.subr.mxu0 0.0
    %1163 = vmatpush2.msra.mxu0 0.0
    %1164 = vmatprep.subr.mxu0 0.0
    %1165 = vmatpush2.msra.mxu0 0.0
    %1166 = vmatprep.subr.mxu0 0.0
    %1167 = vmatpush2.msra.mxu0 0.0
    %1168 = vmatprep.subr.mxu0 0.0
    %1169 = vmatpush2.msra.mxu0 0.0
    %1170 = vmatprep.subr.mxu0 0.0
    %1171 = vmatpush2.msra.mxu0 0.0
    %1172 = vmatprep.subr.mxu0 0.0
    %1173 = vmatpush2.msra.mxu0 0.0
    %1174 = vmatprep.subr.mxu0 0.0
    %1175 = vmatpush2.msra.mxu0 0.0
    %1176 = vmatprep.subr.mxu0 0.0
    %1177 = vmatpush2.msra.mxu0 0.0
    %1178 = vmatprep.subr.mxu0 0.0
    %1179 = vmatpush2.msra.mxu0 0.0
    %1180 = vmatprep.subr.mxu0 0.0
    %1181 = vmatpush2.msra.mxu0 0.0
    %1182 = vmatprep.subr.mxu0 0.0
    %1183 = vmatpush2.msra.mxu0 0.0
    %1184 = vmatprep.mubr.f32.mxu0 0.0
    %1185 = vmatmul.mubr.f32.gmra.mxu0 %v1115
    %v1186 = vpop.f32.mrf.mxu0
    %v1187 = vadd.f32 %v1112, %v1186
    %v1188 = vpop.f32.mrf.mxu0
    %1189 = vmatprep.mubr.f32.mxu0 0.0
    %1190 = vmatmul.mubr.f32.gmra.mxu0 %v1118
    %v1191 = vpop.f32.mrf.mxu0
    %v1192 = vadd.f32 %v1112, %v1191
    %v1193 = vpop.f32.mrf.mxu0
    %1194 = vdwg.mxu0
    %1197 = vset.pattern.permute.xlu0 0
    %1198 = vperm.xlu0 %1197, %v1187
    %v1199 = vpop.permute.xlu0 %1198
    %1200 = vset.pattern.permute.xlu0 0
    %1201 = vperm.xlu0 %1200, %v1192
    %v1202 = vpop.permute.xlu0 %1201
    %v1203 = vlaneseq
    %v1204 = vand.u32 %v1203, 127
    %v1205 = vlaneseq
    %v1206 = vshrl.u32 %v1205, 7
    %v1207 = vsub.s32 %v1204, %v1206
    %v1208 = vrot.slane %v1199, %v1207
    %v1209 = vlaneseq
    %v1210 = vshrl.u32 %v1209, 7
    %v1211 = vsub.s32 %v1204, %v1210
    %v1212 = vrot.slane %v1202, %v1211
    %vm1215 = vcmask 57344
    %1216 = vst.msk [vmem:[#allocation30] sm:$0x1] %vm1215, %v1208
    %1217 = vst.msk [vmem:[#allocation30 + $0x2] sm:$0x1] %vm1215, %v1212
    %v1220 = vmul.f32 %v490, %v1199
    %v1221 = vmul.f32 %v492, %v1202
    %v1222 = vsel %vm274, %v1220, 0.0
    %v1223 = vrot.slane %v1222, 4
    %v1224 = vadd.f32 %v1222, %v1223
    %v1225 = vrot.slane %v1224, 2
    %v1226 = vadd.f32 %v1224, %v1225
    %v1227 = vrot.slane %v1226, 1
    %v1228 = vadd.f32 %v1226, %v1227
    %v1229 = vsel %vm274, %v1221, 0.0
    %v1230 = vrot.slane %v1229, 4
    %v1231 = vadd.f32 %v1229, %v1230
    %v1232 = vrot.slane %v1231, 2
    %v1233 = vadd.f32 %v1231, %v1232
    %v1234 = vrot.slane %v1233, 1
    %v1235 = vadd.f32 %v1233, %v1234
    %vm1238 = vcmask 1041409
    %v1239 = vsel %vm1238, %v1235, %v1228
    %vm1241 = vcmask 123904
    %1242 = vst.msk [vmem:[#allocation27] sm:$0x3] %vm1241, %v1239
    %1243 = vrot.lane.b32.xlu0 %v366, 112
    %v1244 = vpop.permute.xlu0 %1243
    %v1245 = vsel %vm274, %v1244, 0
    %1247 = vmatprep.subr.mxu0 0.0
    %1248 = vmatpush1.msra.mxu0 0.0
    %1249 = vmatprep.subr.mxu0 0.0
    %1250 = vmatpush1.msra.mxu0 0.0
    %1251 = vmatprep.subr.mxu0 0.0
    %1252 = vmatpush1.msra.mxu0 0.0
    %1253 = vmatprep.subr.mxu0 0.0
    %1254 = vmatpush1.msra.mxu0 0.0
    %1255 = vmatprep.subr.mxu0 0.0
    %1256 = vmatpush1.msra.mxu0 0.0
    %1257 = vmatprep.subr.mxu0 0.0
    %1258 = vmatpush1.msra.mxu0 0.0
    %1259 = vmatprep.subr.mxu0 0.0
    %1260 = vmatpush1.msra.mxu0 0.0
    %1261 = vmatprep.subr.mxu0 0.0
    %1262 = vmatpush1.msra.mxu0 0.0
    %1263 = vmatprep.subr.mxu0 0.0
    %1264 = vmatpush1.msra.mxu0 0.0
    %1265 = vmatprep.subr.mxu0 0.0
    %1266 = vmatpush1.msra.mxu0 0.0
    %1267 = vmatprep.subr.mxu0 0.0
    %1268 = vmatpush1.msra.mxu0 0.0
    %1269 = vmatprep.subr.mxu0 0.0
    %1270 = vmatpush1.msra.mxu0 0.0
    %1271 = vmatprep.subr.mxu0 0.0
    %1272 = vmatpush1.msra.mxu0 0.0
    %1273 = vmatprep.subr.mxu0 0.0
    %1274 = vmatpush1.msra.mxu0 0.0
    %1275 = vmatprep.subr.mxu0 0.0
    %1276 = vmatpush1.msra.mxu0 %v625
    %1277 = vmatprep.subr.mxu0 0.0
    %1278 = vmatpush1.msra.mxu0 %v624
    %1279 = vmatprep.subr.mxu0 0.0
    %1280 = vmatpush2.msra.mxu0 0.0
    %1281 = vmatprep.subr.mxu0 0.0
    %1282 = vmatpush2.msra.mxu0 0.0
    %1283 = vmatprep.subr.mxu0 0.0
    %1284 = vmatpush2.msra.mxu0 0.0
    %1285 = vmatprep.subr.mxu0 0.0
    %1286 = vmatpush2.msra.mxu0 0.0
    %1287 = vmatprep.subr.mxu0 0.0
    %1288 = vmatpush2.msra.mxu0 0.0
    %1289 = vmatprep.subr.mxu0 0.0
    %1290 = vmatpush2.msra.mxu0 0.0
    %1291 = vmatprep.subr.mxu0 0.0
    %1292 = vmatpush2.msra.mxu0 0.0
    %1293 = vmatprep.subr.mxu0 0.0
    %1294 = vmatpush2.msra.mxu0 0.0
    %1295 = vmatprep.subr.mxu0 0.0
    %1296 = vmatpush2.msra.mxu0 0.0
    %1297 = vmatprep.subr.mxu0 0.0
    %1298 = vmatpush2.msra.mxu0 0.0
    %1299 = vmatprep.subr.mxu0 0.0
    %1300 = vmatpush2.msra.mxu0 0.0
    %1301 = vmatprep.subr.mxu0 0.0
    %1302 = vmatpush2.msra.mxu0 0.0
    %1303 = vmatprep.subr.mxu0 0.0
    %1304 = vmatpush2.msra.mxu0 0.0
    %1305 = vmatprep.subr.mxu0 0.0
    %1306 = vmatpush2.msra.mxu0 0.0
    %1307 = vmatprep.subr.mxu0 0.0
    %1308 = vmatpush2.msra.mxu0 0.0
    %1309 = vmatprep.subr.mxu0 0.0
    %1310 = vmatpush2.msra.mxu0 0.0
    %1311 = vmatprep.mubr.f32.mxu0 0.0
    %1312 = vmatmul.mubr.f32.gmra.mxu0 %v1245
    %v1313 = vpop.f32.mrf.mxu0
    %v1314 = vadd.f32 0.0, %v1313
    %v1315 = vpop.f32.mrf.mxu0
    %1316 = vdwg.mxu0
    %v1317 = vadd.f32 %v707, %v1314
    %1318 = vrot.lane.b32.xlu0 %v816, 112
    %v1319 = vpop.permute.xlu0 %1318
    %1320 = vrot.lane.b32.xlu0 %v817, 112
    %v1321 = vpop.permute.xlu0 %1320
    %v1322 = vsel %vm274, %v1319, 0
    %v1324 = vsel %vm274, %v1321, 0
    %1326 = vmatprep.subr.mxu0 0.0
    %1327 = vmatpush1.msra.mxu0 0.0
    %1328 = vmatprep.subr.mxu0 0.0
    %1329 = vmatpush1.msra.mxu0 0.0
    %1330 = vmatprep.subr.mxu0 0.0
    %1331 = vmatpush1.msra.mxu0 0.0
    %1332 = vmatprep.subr.mxu0 0.0
    %1333 = vmatpush1.msra.mxu0 0.0
    %1334 = vmatprep.subr.mxu0 0.0
    %1335 = vmatpush1.msra.mxu0 0.0
    %1336 = vmatprep.subr.mxu0 0.0
    %1337 = vmatpush1.msra.mxu0 0.0
    %1338 = vmatprep.subr.mxu0 0.0
    %1339 = vmatpush1.msra.mxu0 0.0
    %1340 = vmatprep.subr.mxu0 0.0
    %1341 = vmatpush1.msra.mxu0 0.0
    %1342 = vmatprep.subr.mxu0 0.0
    %1343 = vmatpush1.msra.mxu0 0.0
    %1344 = vmatprep.subr.mxu0 0.0
    %1345 = vmatpush1.msra.mxu0 0.0
    %1346 = vmatprep.subr.mxu0 0.0
    %1347 = vmatpush1.msra.mxu0 0.0
    %1348 = vmatprep.subr.mxu0 0.0
    %1349 = vmatpush1.msra.mxu0 0.0
    %1350 = vmatprep.subr.mxu0 0.0
    %1351 = vmatpush1.msra.mxu0 0.0
    %1352 = vmatprep.subr.mxu0 0.0
    %1353 = vmatpush1.msra.mxu0 0.0
    %1354 = vmatprep.subr.mxu0 0.0
    %1355 = vmatpush1.msra.mxu0 %v621
    %1356 = vmatprep.subr.mxu0 0.0
    %1357 = vmatpush1.msra.mxu0 %v620
    %1358 = vmatprep.subr.mxu0 0.0
    %1359 = vmatpush2.msra.mxu0 0.0
    %1360 = vmatprep.subr.mxu0 0.0
    %1361 = vmatpush2.msra.mxu0 0.0
    %1362 = vmatprep.subr.mxu0 0.0
    %1363 = vmatpush2.msra.mxu0 0.0
    %1364 = vmatprep.subr.mxu0 0.0
    %1365 = vmatpush2.msra.mxu0 0.0
    %1366 = vmatprep.subr.mxu0 0.0
    %1367 = vmatpush2.msra.mxu0 0.0
    %1368 = vmatprep.subr.mxu0 0.0
    %1369 = vmatpush2.msra.mxu0 0.0
    %1370 = vmatprep.subr.mxu0 0.0
    %1371 = vmatpush2.msra.mxu0 0.0
    %1372 = vmatprep.subr.mxu0 0.0
    %1373 = vmatpush2.msra.mxu0 0.0
    %1374 = vmatprep.subr.mxu0 0.0
    %1375 = vmatpush2.msra.mxu0 0.0
    %1376 = vmatprep.subr.mxu0 0.0
    %1377 = vmatpush2.msra.mxu0 0.0
    %1378 = vmatprep.subr.mxu0 0.0
    %1379 = vmatpush2.msra.mxu0 0.0
    %1380 = vmatprep.subr.mxu0 0.0
    %1381 = vmatpush2.msra.mxu0 0.0
    %1382 = vmatprep.subr.mxu0 0.0
    %1383 = vmatpush2.msra.mxu0 0.0
    %1384 = vmatprep.subr.mxu0 0.0
    %1385 = vmatpush2.msra.mxu0 0.0
    %1386 = vmatprep.subr.mxu0 0.0
    %1387 = vmatpush2.msra.mxu0 0.0
    %1388 = vmatprep.subr.mxu0 0.0
    %1389 = vmatpush2.msra.mxu0 0.0
    %1390 = vmatprep.mubr.f32.mxu0 0.0
    %1391 = vmatmul.mubr.f32.gmra.mxu0 %v1322
    %v1392 = vpop.f32.mrf.mxu0
    %v1393 = vadd.f32 0.0, %v1392
    %v1394 = vpop.f32.mrf.mxu0
    %1395 = vmatprep.mubr.f32.mxu0 0.0
    %1396 = vmatmul.mubr.f32.gmra.mxu0 %v1324
    %v1397 = vpop.f32.mrf.mxu0
    %v1398 = vadd.f32 0.0, %v1397
    %v1399 = vpop.f32.mrf.mxu0
    %1400 = vdwg.mxu0
    %1401 = vrot.lane.b32.xlu0 %v490, 112
    %v1402 = vpop.permute.xlu0 %1401
    %1403 = vrot.lane.b32.xlu0 %v492, 112
    %v1404 = vpop.permute.xlu0 %1403
    %v1405 = vsel %vm274, %v1402, 0
    %v1407 = vsel %vm274, %v1404, 0
    %1409 = vmatprep.subr.mxu0 0.0
    %1410 = vmatpush1.msra.mxu0 0.0
    %1411 = vmatprep.subr.mxu0 0.0
    %1412 = vmatpush1.msra.mxu0 0.0
    %1413 = vmatprep.subr.mxu0 0.0
    %1414 = vmatpush1.msra.mxu0 0.0
    %1415 = vmatprep.subr.mxu0 0.0
    %1416 = vmatpush1.msra.mxu0 0.0
    %1417 = vmatprep.subr.mxu0 0.0
    %1418 = vmatpush1.msra.mxu0 0.0
    %1419 = vmatprep.subr.mxu0 0.0
    %1420 = vmatpush1.msra.mxu0 0.0
    %1421 = vmatprep.subr.mxu0 0.0
    %1422 = vmatpush1.msra.mxu0 0.0
    %1423 = vmatprep.subr.mxu0 0.0
    %1424 = vmatpush1.msra.mxu0 0.0
    %1425 = vmatprep.subr.mxu0 0.0
    %1426 = vmatpush1.msra.mxu0 0.0
    %1427 = vmatprep.subr.mxu0 0.0
    %1428 = vmatpush1.msra.mxu0 0.0
    %1429 = vmatprep.subr.mxu0 0.0
    %1430 = vmatpush1.msra.mxu0 0.0
    %1431 = vmatprep.subr.mxu0 0.0
    %1432 = vmatpush1.msra.mxu0 0.0
    %1433 = vmatprep.subr.mxu0 0.0
    %1434 = vmatpush1.msra.mxu0 0.0
    %1435 = vmatprep.subr.mxu0 0.0
    %1436 = vmatpush1.msra.mxu0 0.0
    %1437 = vmatprep.subr.mxu0 0.0
    %1438 = vmatpush1.msra.mxu0 %v619
    %1439 = vmatprep.subr.mxu0 0.0
    %1440 = vmatpush1.msra.mxu0 %v618
    %1441 = vmatprep.subr.mxu0 0.0
    %1442 = vmatpush2.msra.mxu0 0.0
    %1443 = vmatprep.subr.mxu0 0.0
    %1444 = vmatpush2.msra.mxu0 0.0
    %1445 = vmatprep.subr.mxu0 0.0
    %1446 = vmatpush2.msra.mxu0 0.0
    %1447 = vmatprep.subr.mxu0 0.0
    %1448 = vmatpush2.msra.mxu0 0.0
    %1449 = vmatprep.subr.mxu0 0.0
    %1450 = vmatpush2.msra.mxu0 0.0
    %1451 = vmatprep.subr.mxu0 0.0
    %1452 = vmatpush2.msra.mxu0 0.0
    %1453 = vmatprep.subr.mxu0 0.0
    %1454 = vmatpush2.msra.mxu0 0.0
    %1455 = vmatprep.subr.mxu0 0.0
    %1456 = vmatpush2.msra.mxu0 0.0
    %1457 = vmatprep.subr.mxu0 0.0
    %1458 = vmatpush2.msra.mxu0 0.0
    %1459 = vmatprep.subr.mxu0 0.0
    %1460 = vmatpush2.msra.mxu0 0.0
    %1461 = vmatprep.subr.mxu0 0.0
    %1462 = vmatpush2.msra.mxu0 0.0
    %1463 = vmatprep.subr.mxu0 0.0
    %1464 = vmatpush2.msra.mxu0 0.0
    %1465 = vmatprep.subr.mxu0 0.0
    %1466 = vmatpush2.msra.mxu0 0.0
    %1467 = vmatprep.subr.mxu0 0.0
    %1468 = vmatpush2.msra.mxu0 0.0
    %1469 = vmatprep.subr.mxu0 0.0
    %1470 = vmatpush2.msra.mxu0 0.0
    %1471 = vmatprep.subr.mxu0 0.0
    %1472 = vmatpush2.msra.mxu0 0.0
    %1473 = vmatprep.mubr.f32.mxu0 0.0
    %1474 = vmatmul.mubr.f32.gmra.mxu0 %v1405
    %v1475 = vpop.f32.mrf.mxu0
    %v1476 = vadd.f32 %v1393, %v1475
    %v1477 = vpop.f32.mrf.mxu0
    %1478 = vmatprep.mubr.f32.mxu0 0.0
    %1479 = vmatmul.mubr.f32.gmra.mxu0 %v1407
    %v1480 = vpop.f32.mrf.mxu0
    %v1481 = vadd.f32 %v1398, %v1480
    %v1482 = vpop.f32.mrf.mxu0
    %1483 = vdwg.mxu0
    %1484 = vrot.lane.b32.xlu0 %v818, 112
    %v1485 = vpop.permute.xlu0 %1484
    %1486 = vrot.lane.b32.xlu0 %v819, 112
    %v1487 = vpop.permute.xlu0 %1486
    %v1488 = vsel %vm274, %v1485, 0
    %v1490 = vsel %vm274, %v1487, 0
    %1492 = vmatprep.subr.mxu0 0.0
    %1493 = vmatpush1.msra.mxu0 0.0
    %1494 = vmatprep.subr.mxu0 0.0
    %1495 = vmatpush1.msra.mxu0 0.0
    %1496 = vmatprep.subr.mxu0 0.0
    %1497 = vmatpush1.msra.mxu0 0.0
    %1498 = vmatprep.subr.mxu0 0.0
    %1499 = vmatpush1.msra.mxu0 0.0
    %1500 = vmatprep.subr.mxu0 0.0
    %1501 = vmatpush1.msra.mxu0 0.0
    %1502 = vmatprep.subr.mxu0 0.0
    %1503 = vmatpush1.msra.mxu0 0.0
    %1504 = vmatprep.subr.mxu0 0.0
    %1505 = vmatpush1.msra.mxu0 0.0
    %1506 = vmatprep.subr.mxu0 0.0
    %1507 = vmatpush1.msra.mxu0 0.0
    %1508 = vmatprep.subr.mxu0 0.0
    %1509 = vmatpush1.msra.mxu0 0.0
    %1510 = vmatprep.subr.mxu0 0.0
    %1511 = vmatpush1.msra.mxu0 0.0
    %1512 = vmatprep.subr.mxu0 0.0
    %1513 = vmatpush1.msra.mxu0 0.0
    %1514 = vmatprep.subr.mxu0 0.0
    %1515 = vmatpush1.msra.mxu0 0.0
    %1516 = vmatprep.subr.mxu0 0.0
    %1517 = vmatpush1.msra.mxu0 0.0
    %1518 = vmatprep.subr.mxu0 0.0
    %1519 = vmatpush1.msra.mxu0 0.0
    %1520 = vmatprep.subr.mxu0 0.0
    %1521 = vmatpush1.msra.mxu0 %v623
    %1522 = vmatprep.subr.mxu0 0.0
    %1523 = vmatpush1.msra.mxu0 %v622
    %1524 = vmatprep.subr.mxu0 0.0
    %1525 = vmatpush2.msra.mxu0 0.0
    %1526 = vmatprep.subr.mxu0 0.0
    %1527 = vmatpush2.msra.mxu0 0.0
    %1528 = vmatprep.subr.mxu0 0.0
    %1529 = vmatpush2.msra.mxu0 0.0
    %1530 = vmatprep.subr.mxu0 0.0
    %1531 = vmatpush2.msra.mxu0 0.0
    %1532 = vmatprep.subr.mxu0 0.0
    %1533 = vmatpush2.msra.mxu0 0.0
    %1534 = vmatprep.subr.mxu0 0.0
    %1535 = vmatpush2.msra.mxu0 0.0
    %1536 = vmatprep.subr.mxu0 0.0
    %1537 = vmatpush2.msra.mxu0 0.0
    %1538 = vmatprep.subr.mxu0 0.0
    %1539 = vmatpush2.msra.mxu0 0.0
    %1540 = vmatprep.subr.mxu0 0.0
    %1541 = vmatpush2.msra.mxu0 0.0
    %1542 = vmatprep.subr.mxu0 0.0
    %1543 = vmatpush2.msra.mxu0 0.0
    %1544 = vmatprep.subr.mxu0 0.0
    %1545 = vmatpush2.msra.mxu0 0.0
    %1546 = vmatprep.subr.mxu0 0.0
    %1547 = vmatpush2.msra.mxu0 0.0
    %1548 = vmatprep.subr.mxu0 0.0
    %1549 = vmatpush2.msra.mxu0 0.0
    %1550 = vmatprep.subr.mxu0 0.0
    %1551 = vmatpush2.msra.mxu0 0.0
    %1552 = vmatprep.subr.mxu0 0.0
    %1553 = vmatpush2.msra.mxu0 0.0
    %1554 = vmatprep.subr.mxu0 0.0
    %1555 = vmatpush2.msra.mxu0 0.0
    %1556 = vmatprep.mubr.f32.mxu0 0.0
    %1557 = vmatmul.mubr.f32.gmra.mxu0 %v1488
    %v1558 = vpop.f32.mrf.mxu0
    %v1559 = vadd.f32 0.0, %v1558
    %v1560 = vpop.f32.mrf.mxu0
    %1561 = vmatprep.mubr.f32.mxu0 0.0
    %1562 = vmatmul.mubr.f32.gmra.mxu0 %v1490
    %v1563 = vpop.f32.mrf.mxu0
    %v1564 = vadd.f32 0.0, %v1563
    %v1565 = vpop.f32.mrf.mxu0
    %1566 = vdwg.mxu0
    %v1567 = vadd.f32 %v1476, %v1559
    %v1568 = vadd.f32 %v1481, %v1564
    %v1571 = vunpack.c.l.s4 1966171168
    %v1572 = vunpack.c.0.s8 %v1571
    %v1573 = vlaneseq
    %v1574 = vshrl.u32 %v1573, 7
    %v1575 = vsub.s32 %v1572, %v1574
    %v1576 = vrot.slane %v1317, %v1575
    %v1577 = vcombine.high %v1576, %v1576
    %v1579 = vunpack.c.l.s4 1966171168
    %v1580 = vunpack.c.0.s8 %v1579
    %v1581 = vlaneseq
    %v1582 = vshrl.u32 %v1581, 7
    %v1583 = vsub.s32 %v1580, %v1582
    %v1584 = vrot.slane %v1576, %v1583
    %v1586 = vunpack.c.l.s4 1966171168
    %v1587 = vunpack.c.0.s8 %v1586
    %v1588 = vlaneseq
    %v1589 = vshrl.u32 %v1588, 7
    %v1590 = vsub.s32 %v1587, %v1589
    %v1591 = vrot.slane %v1577, %v1590
    %v1592 = vlaneseq
    %v1593 = vshrl.u32 %v1592, 7
    %v1594 = vsub.s32 0, %v1593
    %v1595 = vrot.slane %v1584, %v1594
    %v1596 = vlaneseq
    %v1597 = vshrl.u32 %v1596, 7
    %v1598 = vsub.s32 0, %v1597
    %v1599 = vrot.slane %v1591, %v1598
    %v1602 = vadd.f32 %v1567, %v1595
    %v1603 = vadd.f32 %v1568, %v1599
    %vm1604 = vcmp.gt.f32.partialorder %v1602, 0.0
    %vm1605 = vcmp.gt.f32.partialorder %v1603, 0.0
    %v1606 = vmul.f32 %v1102, %v1602
    %v1607 = vmul.f32 %v1102, %v1603
    %v1608 = vsel %vm1604, %v1602, %v1606
    %v1609 = vsel %vm1605, %v1603, %v1607
    %v1610 = vld [vmem:[#allocation22] sm:$0xff]
    %v1611 = vld [vmem:[#allocation22 + $0x8] sm:$0xff]
    %v1612 = vld [vmem:[#allocation22 + $0x10] sm:$0xff]
    %v1613 = vld [vmem:[#allocation22 + $0x18] sm:$0xff]
    %v1614 = vld [vmem:[#allocation22 + $0x20] sm:$0xff]
    %v1616 = vsel %vm1113, %v1608, 0
    %v1619 = vsel %vm1113, %v1609, 0
    %1621 = vmatprep.subr.mxu0 0.0
    %1622 = vmatpush1.msra.mxu0 0.0
    %1623 = vmatprep.subr.mxu0 0.0
    %1624 = vmatpush1.msra.mxu0 0.0
    %1625 = vmatprep.subr.mxu0 0.0
    %1626 = vmatpush1.msra.mxu0 0.0
    %1627 = vmatprep.subr.mxu0 0.0
    %1628 = vmatpush1.msra.mxu0 0.0
    %1629 = vmatprep.subr.mxu0 0.0
    %1630 = vmatpush1.msra.mxu0 0.0
    %1631 = vmatprep.subr.mxu0 0.0
    %1632 = vmatpush1.msra.mxu0 0.0
    %1633 = vmatprep.subr.mxu0 0.0
    %1634 = vmatpush1.msra.mxu0 0.0
    %1635 = vmatprep.subr.mxu0 0.0
    %1636 = vmatpush1.msra.mxu0 0.0
    %1637 = vmatprep.subr.mxu0 0.0
    %1638 = vmatpush1.msra.mxu0 0.0
    %1639 = vmatprep.subr.mxu0 0.0
    %1640 = vmatpush1.msra.mxu0 0.0
    %1641 = vmatprep.subr.mxu0 0.0
    %1642 = vmatpush1.msra.mxu0 0.0
    %1643 = vmatprep.subr.mxu0 0.0
    %1644 = vmatpush1.msra.mxu0 %v1614
    %1645 = vmatprep.subr.mxu0 0.0
    %1646 = vmatpush1.msra.mxu0 %v1613
    %1647 = vmatprep.subr.mxu0 0.0
    %1648 = vmatpush1.msra.mxu0 %v1612
    %1649 = vmatprep.subr.mxu0 0.0
    %1650 = vmatpush1.msra.mxu0 %v1611
    %1651 = vmatprep.subr.mxu0 0.0
    %1652 = vmatpush1.msra.mxu0 %v1610
    %1653 = vmatprep.subr.mxu0 0.0
    %1654 = vmatpush2.msra.mxu0 0.0
    %1655 = vmatprep.subr.mxu0 0.0
    %1656 = vmatpush2.msra.mxu0 0.0
    %1657 = vmatprep.subr.mxu0 0.0
    %1658 = vmatpush2.msra.mxu0 0.0
    %1659 = vmatprep.subr.mxu0 0.0
    %1660 = vmatpush2.msra.mxu0 0.0
    %1661 = vmatprep.subr.mxu0 0.0
    %1662 = vmatpush2.msra.mxu0 0.0
    %1663 = vmatprep.subr.mxu0 0.0
    %1664 = vmatpush2.msra.mxu0 0.0
    %1665 = vmatprep.subr.mxu0 0.0
    %1666 = vmatpush2.msra.mxu0 0.0
    %1667 = vmatprep.subr.mxu0 0.0
    %1668 = vmatpush2.msra.mxu0 0.0
    %1669 = vmatprep.subr.mxu0 0.0
    %1670 = vmatpush2.msra.mxu0 0.0
    %1671 = vmatprep.subr.mxu0 0.0
    %1672 = vmatpush2.msra.mxu0 0.0
    %1673 = vmatprep.subr.mxu0 0.0
    %1674 = vmatpush2.msra.mxu0 0.0
    %1675 = vmatprep.subr.mxu0 0.0
    %1676 = vmatpush2.msra.mxu0 0.0
    %1677 = vmatprep.subr.mxu0 0.0
    %1678 = vmatpush2.msra.mxu0 0.0
    %1679 = vmatprep.subr.mxu0 0.0
    %1680 = vmatpush2.msra.mxu0 0.0
    %1681 = vmatprep.subr.mxu0 0.0
    %1682 = vmatpush2.msra.mxu0 0.0
    %1683 = vmatprep.subr.mxu0 0.0
    %1684 = vmatpush2.msra.mxu0 0.0
    %1685 = vmatprep.mubr.f32.mxu0 0.0
    %1686 = vmatmul.mubr.f32.gmra.mxu0 %v1616
    %v1687 = vpop.f32.mrf.mxu0
    %v1688 = vadd.f32 %v1112, %v1687
    %v1689 = vpop.f32.mrf.mxu0
    %1690 = vmatprep.mubr.f32.mxu0 0.0
    %1691 = vmatmul.mubr.f32.gmra.mxu0 %v1619
    %v1692 = vpop.f32.mrf.mxu0
    %v1693 = vadd.f32 %v1112, %v1692
    %v1694 = vpop.f32.mrf.mxu0
    %1695 = vdwg.mxu0
    %1698 = vset.pattern.permute.xlu0 0
    %1699 = vperm.xlu0 %1698, %v1688
    %v1700 = vpop.permute.xlu0 %1699
    %1701 = vset.pattern.permute.xlu0 0
    %1702 = vperm.xlu0 %1701, %v1693
    %v1703 = vpop.permute.xlu0 %1702
    %v1704 = vlaneseq
    %v1705 = vshrl.u32 %v1704, 7
    %v1706 = vsub.s32 %v1204, %v1705
    %v1707 = vrot.slane %v1700, %v1706
    %v1708 = vlaneseq
    %v1709 = vshrl.u32 %v1708, 7
    %v1710 = vsub.s32 %v1204, %v1709
    %v1711 = vrot.slane %v1703, %v1710
    %1714 = vst.msk [vmem:[#allocation30 + $0x1] sm:$0x1] %vm1215, %v1707
    %1715 = vst.msk [vmem:[#allocation30 + $0x3] sm:$0x1] %vm1215, %v1711
    %v1718 = vmul.f32 %v490, %v1700
    %v1719 = vmul.f32 %v492, %v1703
    %vm1720 = vcmask 261248
    %v1721 = vsel %vm1720, %v1718, 0.0
    %v1722 = vrot.slane %v1721, 4
    %v1723 = vadd.f32 %v1721, %v1722
    %v1724 = vrot.slane %v1723, 2
    %v1725 = vadd.f32 %v1723, %v1724
    %v1726 = vrot.slane %v1725, 1
    %v1727 = vadd.f32 %v1725, %v1726
    %v1728 = vsel %vm1720, %v1719, 0.0
    %v1729 = vrot.slane %v1728, 4
    %v1730 = vadd.f32 %v1728, %v1729
    %v1731 = vrot.slane %v1730, 2
    %v1732 = vadd.f32 %v1730, %v1731
    %v1733 = vrot.slane %v1732, 1
    %v1734 = vadd.f32 %v1732, %v1733
    %v1737 = vsel %vm1238, %v1734, %v1727
    %vm1739 = vcmask 255104
    %1740 = vst.msk [vmem:[#allocation27] sm:$0x3] %vm1739, %v1737
    %v1741 = vld [vmem:[#allocation24] sm:$0xff]
    %v1742 = vld [vmem:[#allocation24 + $0x8] sm:$0xff]
    %v1743 = vld [vmem:[#allocation24 + $0x10] sm:$0xff]
    %v1744 = vld [vmem:[#allocation24 + $0x18] sm:$0xff]
    %v1745 = vld [vmem:[#allocation24 + $0x20] sm:$0xff]
    %v1746 = vld [vmem:[#allocation24 + $0x28] sm:$0xff]
    %v1747 = vld [vmem:[#allocation24 + $0x30] sm:$0xff]
    %v1748 = vld [vmem:[#allocation24 + $0x38] sm:$0xff]
    %v1749 = vld [vmem:[#allocation24 + $0x40] sm:$0xff]
    %v1750 = vld [vmem:[#allocation24 + $0x48] sm:$0xff]
    %v1751 = vld [vmem:[#allocation24 + $0x50] sm:$0xff]
    %v1752 = vld [vmem:[#allocation25] sm:$0x1]
    %v1754 = vlaneseq
    %v1755 = vshrl.u32 %v1754, 7
    %v1756 = vsub.s32 0, %v1755
    %v1757 = vrot.slane %v1752, %v1756
    %1759 = vmatprep.subr.mxu0 0.0
    %1760 = vmatpush1.msra.mxu0 0.0
    %1761 = vmatprep.subr.mxu0 0.0
    %1762 = vmatpush1.msra.mxu0 0.0
    %1763 = vmatprep.subr.mxu0 0.0
    %1764 = vmatpush1.msra.mxu0 0.0
    %1765 = vmatprep.subr.mxu0 0.0
    %1766 = vmatpush1.msra.mxu0 0.0
    %1767 = vmatprep.subr.mxu0 0.0
    %1768 = vmatpush1.msra.mxu0 0.0
    %1769 = vmatprep.subr.mxu0 0.0
    %1770 = vmatpush1.msra.mxu0 0.0
    %1771 = vmatprep.subr.mxu0 0.0
    %1772 = vmatpush1.msra.mxu0 0.0
    %1773 = vmatprep.subr.mxu0 0.0
    %1774 = vmatpush1.msra.mxu0 0.0
    %1775 = vmatprep.subr.mxu0 0.0
    %1776 = vmatpush1.msra.mxu0 0.0
    %1777 = vmatprep.subr.mxu0 0.0
    %1778 = vmatpush1.msra.mxu0 0.0
    %1779 = vmatprep.subr.mxu0 0.0
    %1780 = vmatpush1.msra.mxu0 0.0
    %1781 = vmatprep.subr.mxu0 0.0
    %1782 = vmatpush1.msra.mxu0 0.0
    %1783 = vmatprep.subr.mxu0 0.0
    %1784 = vmatpush1.msra.mxu0 0.0
    %1785 = vmatprep.subr.mxu0 0.0
    %1786 = vmatpush1.msra.mxu0 %v1751
    %1787 = vmatprep.subr.mxu0 0.0
    %1788 = vmatpush1.msra.mxu0 %v1750
    %1789 = vmatprep.subr.mxu0 0.0
    %1790 = vmatpush1.msra.mxu0 %v1749
    %1791 = vmatprep.subr.mxu0 0.0
    %1792 = vmatpush2.msra.mxu0 0.0
    %1793 = vmatprep.subr.mxu0 0.0
    %1794 = vmatpush2.msra.mxu0 0.0
    %1795 = vmatprep.subr.mxu0 0.0
    %1796 = vmatpush2.msra.mxu0 0.0
    %1797 = vmatprep.subr.mxu0 0.0
    %1798 = vmatpush2.msra.mxu0 0.0
    %1799 = vmatprep.subr.mxu0 0.0
    %1800 = vmatpush2.msra.mxu0 0.0
    %1801 = vmatprep.subr.mxu0 0.0
    %1802 = vmatpush2.msra.mxu0 0.0
    %1803 = vmatprep.subr.mxu0 0.0
    %1804 = vmatpush2.msra.mxu0 0.0
    %1805 = vmatprep.subr.mxu0 0.0
    %1806 = vmatpush2.msra.mxu0 0.0
    %1807 = vmatprep.subr.mxu0 0.0
    %1808 = vmatpush2.msra.mxu0 0.0
    %1809 = vmatprep.subr.mxu0 0.0
    %1810 = vmatpush2.msra.mxu0 0.0
    %1811 = vmatprep.subr.mxu0 0.0
    %1812 = vmatpush2.msra.mxu0 0.0
    %1813 = vmatprep.subr.mxu0 0.0
    %1814 = vmatpush2.msra.mxu0 0.0
    %1815 = vmatprep.subr.mxu0 0.0
    %1816 = vmatpush2.msra.mxu0 0.0
    %1817 = vmatprep.subr.mxu0 0.0
    %1818 = vmatpush2.msra.mxu0 0.0
    %1819 = vmatprep.subr.mxu0 0.0
    %1820 = vmatpush2.msra.mxu0 0.0
    %1821 = vmatprep.subr.mxu0 0.0
    %1822 = vmatpush2.msra.mxu0 0.0
    %1823 = vmatprep.mubr.f32.mxu0 0.0
    %1824 = vmatmul.mubr.f32.gmra.mxu0 %v638
    %v1825 = vpop.f32.mrf.mxu0
    %v1826 = vadd.f32 %v1757, %v1825
    %v1827 = vpop.f32.mrf.mxu0
    %1828 = vdwg.mxu0
    %1829 = vmatprep.subr.mxu0 0.0
    %1830 = vmatpush1.msra.mxu0 0.0
    %1831 = vmatprep.subr.mxu0 0.0
    %1832 = vmatpush1.msra.mxu0 0.0
    %1833 = vmatprep.subr.mxu0 0.0
    %1834 = vmatpush1.msra.mxu0 0.0
    %1835 = vmatprep.subr.mxu0 0.0
    %1836 = vmatpush1.msra.mxu0 0.0
    %1837 = vmatprep.subr.mxu0 0.0
    %1838 = vmatpush1.msra.mxu0 0.0
    %1839 = vmatprep.subr.mxu0 0.0
    %1840 = vmatpush1.msra.mxu0 0.0
    %1841 = vmatprep.subr.mxu0 0.0
    %1842 = vmatpush1.msra.mxu0 0.0
    %1843 = vmatprep.subr.mxu0 0.0
    %1844 = vmatpush1.msra.mxu0 0.0
    %1845 = vmatprep.subr.mxu0 0.0
    %1846 = vmatpush1.msra.mxu0 0.0
    %1847 = vmatprep.subr.mxu0 0.0
    %1848 = vmatpush1.msra.mxu0 0.0
    %1849 = vmatprep.subr.mxu0 0.0
    %1850 = vmatpush1.msra.mxu0 0.0
    %1851 = vmatprep.subr.mxu0 0.0
    %1852 = vmatpush1.msra.mxu0 0.0
    %1853 = vmatprep.subr.mxu0 0.0
    %1854 = vmatpush1.msra.mxu0 0.0
    %1855 = vmatprep.subr.mxu0 0.0
    %1856 = vmatpush1.msra.mxu0 0.0
    %1857 = vmatprep.subr.mxu0 0.0
    %1858 = vmatpush1.msra.mxu0 %v1748
    %1859 = vmatprep.subr.mxu0 0.0
    %1860 = vmatpush1.msra.mxu0 %v1747
    %1861 = vmatprep.subr.mxu0 0.0
    %1862 = vmatpush2.msra.mxu0 0.0
    %1863 = vmatprep.subr.mxu0 0.0
    %1864 = vmatpush2.msra.mxu0 0.0
    %1865 = vmatprep.subr.mxu0 0.0
    %1866 = vmatpush2.msra.mxu0 0.0
    %1867 = vmatprep.subr.mxu0 0.0
    %1868 = vmatpush2.msra.mxu0 0.0
    %1869 = vmatprep.subr.mxu0 0.0
    %1870 = vmatpush2.msra.mxu0 0.0
    %1871 = vmatprep.subr.mxu0 0.0
    %1872 = vmatpush2.msra.mxu0 0.0
    %1873 = vmatprep.subr.mxu0 0.0
    %1874 = vmatpush2.msra.mxu0 0.0
    %1875 = vmatprep.subr.mxu0 0.0
    %1876 = vmatpush2.msra.mxu0 0.0
    %1877 = vmatprep.subr.mxu0 0.0
    %1878 = vmatpush2.msra.mxu0 0.0
    %1879 = vmatprep.subr.mxu0 0.0
    %1880 = vmatpush2.msra.mxu0 0.0
    %1881 = vmatprep.subr.mxu0 0.0
    %1882 = vmatpush2.msra.mxu0 0.0
    %1883 = vmatprep.subr.mxu0 0.0
    %1884 = vmatpush2.msra.mxu0 0.0
    %1885 = vmatprep.subr.mxu0 0.0
    %1886 = vmatpush2.msra.mxu0 0.0
    %1887 = vmatprep.subr.mxu0 0.0
    %1888 = vmatpush2.msra.mxu0 0.0
    %1889 = vmatprep.subr.mxu0 0.0
    %1890 = vmatpush2.msra.mxu0 0.0
    %1891 = vmatprep.subr.mxu0 0.0
    %1892 = vmatpush2.msra.mxu0 0.0
    %1893 = vmatprep.mubr.f32.mxu0 0.0
    %1894 = vmatmul.mubr.f32.gmra.mxu0 %v711
    %v1895 = vpop.f32.mrf.mxu0
    %v1896 = vadd.f32 0.0, %v1895
    %v1897 = vpop.f32.mrf.mxu0
    %1898 = vdwg.mxu0
    %v1899 = vadd.f32 %v1826, %v1896
    %v1900 = vmul.f32 %v615, %v809
    %v1901 = vmul.f32 %v617, %v813
    %v1902 = vsub.f32 %v615, %v809
    %v1903 = vsub.f32 %v617, %v813
    %v1905 = vsel %vm274, %v1900, 0
    %v1908 = vsel %vm274, %v1901, 0
    %1910 = vmatprep.subr.mxu0 0.0
    %1911 = vmatpush1.msra.mxu0 0.0
    %1912 = vmatprep.subr.mxu0 0.0
    %1913 = vmatpush1.msra.mxu0 0.0
    %1914 = vmatprep.subr.mxu0 0.0
    %1915 = vmatpush1.msra.mxu0 0.0
    %1916 = vmatprep.subr.mxu0 0.0
    %1917 = vmatpush1.msra.mxu0 0.0
    %1918 = vmatprep.subr.mxu0 0.0
    %1919 = vmatpush1.msra.mxu0 0.0
    %1920 = vmatprep.subr.mxu0 0.0
    %1921 = vmatpush1.msra.mxu0 0.0
    %1922 = vmatprep.subr.mxu0 0.0
    %1923 = vmatpush1.msra.mxu0 0.0
    %1924 = vmatprep.subr.mxu0 0.0
    %1925 = vmatpush1.msra.mxu0 0.0
    %1926 = vmatprep.subr.mxu0 0.0
    %1927 = vmatpush1.msra.mxu0 0.0
    %1928 = vmatprep.subr.mxu0 0.0
    %1929 = vmatpush1.msra.mxu0 0.0
    %1930 = vmatprep.subr.mxu0 0.0
    %1931 = vmatpush1.msra.mxu0 0.0
    %1932 = vmatprep.subr.mxu0 0.0
    %1933 = vmatpush1.msra.mxu0 0.0
    %1934 = vmatprep.subr.mxu0 0.0
    %1935 = vmatpush1.msra.mxu0 0.0
    %1936 = vmatprep.subr.mxu0 0.0
    %1937 = vmatpush1.msra.mxu0 0.0
    %1938 = vmatprep.subr.mxu0 0.0
    %1939 = vmatpush1.msra.mxu0 %v1744
    %1940 = vmatprep.subr.mxu0 0.0
    %1941 = vmatpush1.msra.mxu0 %v1743
    %1942 = vmatprep.subr.mxu0 0.0
    %1943 = vmatpush2.msra.mxu0 0.0
    %1944 = vmatprep.subr.mxu0 0.0
    %1945 = vmatpush2.msra.mxu0 0.0
    %1946 = vmatprep.subr.mxu0 0.0
    %1947 = vmatpush2.msra.mxu0 0.0
    %1948 = vmatprep.subr.mxu0 0.0
    %1949 = vmatpush2.msra.mxu0 0.0
    %1950 = vmatprep.subr.mxu0 0.0
    %1951 = vmatpush2.msra.mxu0 0.0
    %1952 = vmatprep.subr.mxu0 0.0
    %1953 = vmatpush2.msra.mxu0 0.0
    %1954 = vmatprep.subr.mxu0 0.0
    %1955 = vmatpush2.msra.mxu0 0.0
    %1956 = vmatprep.subr.mxu0 0.0
    %1957 = vmatpush2.msra.mxu0 0.0
    %1958 = vmatprep.subr.mxu0 0.0
    %1959 = vmatpush2.msra.mxu0 0.0
    %1960 = vmatprep.subr.mxu0 0.0
    %1961 = vmatpush2.msra.mxu0 0.0
    %1962 = vmatprep.subr.mxu0 0.0
    %1963 = vmatpush2.msra.mxu0 0.0
    %1964 = vmatprep.subr.mxu0 0.0
    %1965 = vmatpush2.msra.mxu0 0.0
    %1966 = vmatprep.subr.mxu0 0.0
    %1967 = vmatpush2.msra.mxu0 0.0
    %1968 = vmatprep.subr.mxu0 0.0
    %1969 = vmatpush2.msra.mxu0 0.0
    %1970 = vmatprep.subr.mxu0 0.0
    %1971 = vmatpush2.msra.mxu0 0.0
    %1972 = vmatprep.subr.mxu0 0.0
    %1973 = vmatpush2.msra.mxu0 0.0
    %1974 = vmatprep.mubr.f32.mxu0 0.0
    %1975 = vmatmul.mubr.f32.gmra.mxu0 %v1905
    %v1976 = vpop.f32.mrf.mxu0
    %v1977 = vadd.f32 0.0, %v1976
    %v1978 = vpop.f32.mrf.mxu0
    %1979 = vmatprep.mubr.f32.mxu0 0.0
    %1980 = vmatmul.mubr.f32.gmra.mxu0 %v1908
    %v1981 = vpop.f32.mrf.mxu0
    %v1982 = vadd.f32 0.0, %v1981
    %v1983 = vpop.f32.mrf.mxu0
    %1984 = vdwg.mxu0
    %v1986 = vsel %vm274, %v615, 0
    %v1989 = vsel %vm274, %v617, 0
    %1991 = vmatprep.subr.mxu0 0.0
    %1992 = vmatpush1.msra.mxu0 0.0
    %1993 = vmatprep.subr.mxu0 0.0
    %1994 = vmatpush1.msra.mxu0 0.0
    %1995 = vmatprep.subr.mxu0 0.0
    %1996 = vmatpush1.msra.mxu0 0.0
    %1997 = vmatprep.subr.mxu0 0.0
    %1998 = vmatpush1.msra.mxu0 0.0
    %1999 = vmatprep.subr.mxu0 0.0
    %2000 = vmatpush1.msra.mxu0 0.0
    %2001 = vmatprep.subr.mxu0 0.0
    %2002 = vmatpush1.msra.mxu0 0.0
    %2003 = vmatprep.subr.mxu0 0.0
    %2004 = vmatpush1.msra.mxu0 0.0
    %2005 = vmatprep.subr.mxu0 0.0
    %2006 = vmatpush1.msra.mxu0 0.0
    %2007 = vmatprep.subr.mxu0 0.0
    %2008 = vmatpush1.msra.mxu0 0.0
    %2009 = vmatprep.subr.mxu0 0.0
    %2010 = vmatpush1.msra.mxu0 0.0
    %2011 = vmatprep.subr.mxu0 0.0
    %2012 = vmatpush1.msra.mxu0 0.0
    %2013 = vmatprep.subr.mxu0 0.0
    %2014 = vmatpush1.msra.mxu0 0.0
    %2015 = vmatprep.subr.mxu0 0.0
    %2016 = vmatpush1.msra.mxu0 0.0
    %2017 = vmatprep.subr.mxu0 0.0
    %2018 = vmatpush1.msra.mxu0 0.0
    %2019 = vmatprep.subr.mxu0 0.0
    %2020 = vmatpush1.msra.mxu0 %v1742
    %2021 = vmatprep.subr.mxu0 0.0
    %2022 = vmatpush1.msra.mxu0 %v1741
    %2023 = vmatprep.subr.mxu0 0.0
    %2024 = vmatpush2.msra.mxu0 0.0
    %2025 = vmatprep.subr.mxu0 0.0
    %2026 = vmatpush2.msra.mxu0 0.0
    %2027 = vmatprep.subr.mxu0 0.0
    %2028 = vmatpush2.msra.mxu0 0.0
    %2029 = vmatprep.subr.mxu0 0.0
    %2030 = vmatpush2.msra.mxu0 0.0
    %2031 = vmatprep.subr.mxu0 0.0
    %2032 = vmatpush2.msra.mxu0 0.0
    %2033 = vmatprep.subr.mxu0 0.0
    %2034 = vmatpush2.msra.mxu0 0.0
    %2035 = vmatprep.subr.mxu0 0.0
    %2036 = vmatpush2.msra.mxu0 0.0
    %2037 = vmatprep.subr.mxu0 0.0
    %2038 = vmatpush2.msra.mxu0 0.0
    %2039 = vmatprep.subr.mxu0 0.0
    %2040 = vmatpush2.msra.mxu0 0.0
    %2041 = vmatprep.subr.mxu0 0.0
    %2042 = vmatpush2.msra.mxu0 0.0
    %2043 = vmatprep.subr.mxu0 0.0
    %2044 = vmatpush2.msra.mxu0 0.0
    %2045 = vmatprep.subr.mxu0 0.0
    %2046 = vmatpush2.msra.mxu0 0.0
    %2047 = vmatprep.subr.mxu0 0.0
    %2048 = vmatpush2.msra.mxu0 0.0
    %2049 = vmatprep.subr.mxu0 0.0
    %2050 = vmatpush2.msra.mxu0 0.0
    %2051 = vmatprep.subr.mxu0 0.0
    %2052 = vmatpush2.msra.mxu0 0.0
    %2053 = vmatprep.subr.mxu0 0.0
    %2054 = vmatpush2.msra.mxu0 0.0
    %2055 = vmatprep.mubr.f32.mxu0 0.0
    %2056 = vmatmul.mubr.f32.gmra.mxu0 %v1986
    %v2057 = vpop.f32.mrf.mxu0
    %v2058 = vadd.f32 %v1977, %v2057
    %v2059 = vpop.f32.mrf.mxu0
    %2060 = vmatprep.mubr.f32.mxu0 0.0
    %2061 = vmatmul.mubr.f32.gmra.mxu0 %v1989
    %v2062 = vpop.f32.mrf.mxu0
    %v2063 = vadd.f32 %v1982, %v2062
    %v2064 = vpop.f32.mrf.mxu0
    %2065 = vdwg.mxu0
    %v2067 = vsel %vm274, %v1902, 0
    %v2070 = vsel %vm274, %v1903, 0
    %2072 = vmatprep.subr.mxu0 0.0
    %2073 = vmatpush1.msra.mxu0 0.0
    %2074 = vmatprep.subr.mxu0 0.0
    %2075 = vmatpush1.msra.mxu0 0.0
    %2076 = vmatprep.subr.mxu0 0.0
    %2077 = vmatpush1.msra.mxu0 0.0
    %2078 = vmatprep.subr.mxu0 0.0
    %2079 = vmatpush1.msra.mxu0 0.0
    %2080 = vmatprep.subr.mxu0 0.0
    %2081 = vmatpush1.msra.mxu0 0.0
    %2082 = vmatprep.subr.mxu0 0.0
    %2083 = vmatpush1.msra.mxu0 0.0
    %2084 = vmatprep.subr.mxu0 0.0
    %2085 = vmatpush1.msra.mxu0 0.0
    %2086 = vmatprep.subr.mxu0 0.0
    %2087 = vmatpush1.msra.mxu0 0.0
    %2088 = vmatprep.subr.mxu0 0.0
    %2089 = vmatpush1.msra.mxu0 0.0
    %2090 = vmatprep.subr.mxu0 0.0
    %2091 = vmatpush1.msra.mxu0 0.0
    %2092 = vmatprep.subr.mxu0 0.0
    %2093 = vmatpush1.msra.mxu0 0.0
    %2094 = vmatprep.subr.mxu0 0.0
    %2095 = vmatpush1.msra.mxu0 0.0
    %2096 = vmatprep.subr.mxu0 0.0
    %2097 = vmatpush1.msra.mxu0 0.0
    %2098 = vmatprep.subr.mxu0 0.0
    %2099 = vmatpush1.msra.mxu0 0.0
    %2100 = vmatprep.subr.mxu0 0.0
    %2101 = vmatpush1.msra.mxu0 %v1746
    %2102 = vmatprep.subr.mxu0 0.0
    %2103 = vmatpush1.msra.mxu0 %v1745
    %2104 = vmatprep.subr.mxu0 0.0
    %2105 = vmatpush2.msra.mxu0 0.0
    %2106 = vmatprep.subr.mxu0 0.0
    %2107 = vmatpush2.msra.mxu0 0.0
    %2108 = vmatprep.subr.mxu0 0.0
    %2109 = vmatpush2.msra.mxu0 0.0
    %2110 = vmatprep.subr.mxu0 0.0
    %2111 = vmatpush2.msra.mxu0 0.0
    %2112 = vmatprep.subr.mxu0 0.0
    %2113 = vmatpush2.msra.mxu0 0.0
    %2114 = vmatprep.subr.mxu0 0.0
    %2115 = vmatpush2.msra.mxu0 0.0
    %2116 = vmatprep.subr.mxu0 0.0
    %2117 = vmatpush2.msra.mxu0 0.0
    %2118 = vmatprep.subr.mxu0 0.0
    %2119 = vmatpush2.msra.mxu0 0.0
    %2120 = vmatprep.subr.mxu0 0.0
    %2121 = vmatpush2.msra.mxu0 0.0
    %2122 = vmatprep.subr.mxu0 0.0
    %2123 = vmatpush2.msra.mxu0 0.0
    %2124 = vmatprep.subr.mxu0 0.0
    %2125 = vmatpush2.msra.mxu0 0.0
    %2126 = vmatprep.subr.mxu0 0.0
    %2127 = vmatpush2.msra.mxu0 0.0
    %2128 = vmatprep.subr.mxu0 0.0
    %2129 = vmatpush2.msra.mxu0 0.0
    %2130 = vmatprep.subr.mxu0 0.0
    %2131 = vmatpush2.msra.mxu0 0.0
    %2132 = vmatprep.subr.mxu0 0.0
    %2133 = vmatpush2.msra.mxu0 0.0
    %2134 = vmatprep.subr.mxu0 0.0
    %2135 = vmatpush2.msra.mxu0 0.0
    %2136 = vmatprep.mubr.f32.mxu0 0.0
    %2137 = vmatmul.mubr.f32.gmra.mxu0 %v2067
    %v2138 = vpop.f32.mrf.mxu0
    %v2139 = vadd.f32 0.0, %v2138
    %v2140 = vpop.f32.mrf.mxu0
    %2141 = vmatprep.mubr.f32.mxu0 0.0
    %2142 = vmatmul.mubr.f32.gmra.mxu0 %v2070
    %v2143 = vpop.f32.mrf.mxu0
    %v2144 = vadd.f32 0.0, %v2143
    %v2145 = vpop.f32.mrf.mxu0
    %2146 = vdwg.mxu0
    %v2147 = vadd.f32 %v2058, %v2139
    %v2148 = vadd.f32 %v2063, %v2144
    %v2151 = vunpack.c.l.s4 1966171168
    %v2152 = vunpack.c.0.s8 %v2151
    %v2153 = vlaneseq
    %v2154 = vshrl.u32 %v2153, 7
    %v2155 = vsub.s32 %v2152, %v2154
    %v2156 = vrot.slane %v1899, %v2155
    %v2157 = vcombine.high %v2156, %v2156
    %v2159 = vunpack.c.l.s4 1966171168
    %v2160 = vunpack.c.0.s8 %v2159
    %v2161 = vlaneseq
    %v2162 = vshrl.u32 %v2161, 7
    %v2163 = vsub.s32 %v2160, %v2162
    %v2164 = vrot.slane %v2156, %v2163
    %v2166 = vunpack.c.l.s4 1966171168
    %v2167 = vunpack.c.0.s8 %v2166
    %v2168 = vlaneseq
    %v2169 = vshrl.u32 %v2168, 7
    %v2170 = vsub.s32 %v2167, %v2169
    %v2171 = vrot.slane %v2157, %v2170
    %v2172 = vlaneseq
    %v2173 = vshrl.u32 %v2172, 7
    %v2174 = vsub.s32 0, %v2173
    %v2175 = vrot.slane %v2164, %v2174
    %v2176 = vlaneseq
    %v2177 = vshrl.u32 %v2176, 7
    %v2178 = vsub.s32 0, %v2177
    %v2179 = vrot.slane %v2171, %v2178
    %v2182 = vadd.f32 %v2147, %v2175
    %v2183 = vadd.f32 %v2148, %v2179
    %vm2184 = vcmp.gt.f32.partialorder %v2182, 0.0
    %vm2185 = vcmp.gt.f32.partialorder %v2183, 0.0
    %v2186 = vstv %s257
    %v2187 = vmul.f32 %v2186, %v2182
    %v2188 = vmul.f32 %v2186, %v2183
    %v2189 = vsel %vm2184, %v2182, %v2187
    %v2190 = vsel %vm2185, %v2183, %v2188
    %v2191 = vld [vmem:[%s16] sm:$0xff]
    %v2192 = vld [vmem:[%s16 + $0x8] sm:$0xff]
    %v2193 = vld [vmem:[%s16 + $0x10] sm:$0xff]
    %v2194 = vld [vmem:[%s16 + $0x18] sm:$0xff]
    %v2195 = vld [vmem:[%s16 + $0x20] sm:$0xff]
    %v2196 = vstv %s258
    %v2198 = vsel %vm1113, %v2189, 0
    %v2201 = vsel %vm1113, %v2190, 0
    %2203 = vmatprep.subr.mxu0 0.0
    %2204 = vmatpush1.msra.mxu0 0.0
    %2205 = vmatprep.subr.mxu0 0.0
    %2206 = vmatpush1.msra.mxu0 0.0
    %2207 = vmatprep.subr.mxu0 0.0
    %2208 = vmatpush1.msra.mxu0 0.0
    %2209 = vmatprep.subr.mxu0 0.0
    %2210 = vmatpush1.msra.mxu0 0.0
    %2211 = vmatprep.subr.mxu0 0.0
    %2212 = vmatpush1.msra.mxu0 0.0
    %2213 = vmatprep.subr.mxu0 0.0
    %2214 = vmatpush1.msra.mxu0 0.0
    %2215 = vmatprep.subr.mxu0 0.0
    %2216 = vmatpush1.msra.mxu0 0.0
    %2217 = vmatprep.subr.mxu0 0.0
    %2218 = vmatpush1.msra.mxu0 0.0
    %2219 = vmatprep.subr.mxu0 0.0
    %2220 = vmatpush1.msra.mxu0 0.0
    %2221 = vmatprep.subr.mxu0 0.0
    %2222 = vmatpush1.msra.mxu0 0.0
    %2223 = vmatprep.subr.mxu0 0.0
    %2224 = vmatpush1.msra.mxu0 0.0
    %2225 = vmatprep.subr.mxu0 0.0
    %2226 = vmatpush1.msra.mxu0 %v2195
    %2227 = vmatprep.subr.mxu0 0.0
    %2228 = vmatpush1.msra.mxu0 %v2194
    %2229 = vmatprep.subr.mxu0 0.0
    %2230 = vmatpush1.msra.mxu0 %v2193
    %2231 = vmatprep.subr.mxu0 0.0
    %2232 = vmatpush1.msra.mxu0 %v2192
    %2233 = vmatprep.subr.mxu0 0.0
    %2234 = vmatpush1.msra.mxu0 %v2191
    %2235 = vmatprep.subr.mxu0 0.0
    %2236 = vmatpush2.msra.mxu0 0.0
    %2237 = vmatprep.subr.mxu0 0.0
    %2238 = vmatpush2.msra.mxu0 0.0
    %2239 = vmatprep.subr.mxu0 0.0
    %2240 = vmatpush2.msra.mxu0 0.0
    %2241 = vmatprep.subr.mxu0 0.0
    %2242 = vmatpush2.msra.mxu0 0.0
    %2243 = vmatprep.subr.mxu0 0.0
    %2244 = vmatpush2.msra.mxu0 0.0
    %2245 = vmatprep.subr.mxu0 0.0
    %2246 = vmatpush2.msra.mxu0 0.0
    %2247 = vmatprep.subr.mxu0 0.0
    %2248 = vmatpush2.msra.mxu0 0.0
    %2249 = vmatprep.subr.mxu0 0.0
    %2250 = vmatpush2.msra.mxu0 0.0
    %2251 = vmatprep.subr.mxu0 0.0
    %2252 = vmatpush2.msra.mxu0 0.0
    %2253 = vmatprep.subr.mxu0 0.0
    %2254 = vmatpush2.msra.mxu0 0.0
    %2255 = vmatprep.subr.mxu0 0.0
    %2256 = vmatpush2.msra.mxu0 0.0
    %2257 = vmatprep.subr.mxu0 0.0
    %2258 = vmatpush2.msra.mxu0 0.0
    %2259 = vmatprep.subr.mxu0 0.0
    %2260 = vmatpush2.msra.mxu0 0.0
    %2261 = vmatprep.subr.mxu0 0.0
    %2262 = vmatpush2.msra.mxu0 0.0
    %2263 = vmatprep.subr.mxu0 0.0
    %2264 = vmatpush2.msra.mxu0 0.0
    %2265 = vmatprep.subr.mxu0 0.0
    %2266 = vmatpush2.msra.mxu0 0.0
    %2267 = vmatprep.mubr.f32.mxu0 0.0
    %2268 = vmatmul.mubr.f32.gmra.mxu0 %v2198
    %v2269 = vpop.f32.mrf.mxu0
    %v2270 = vadd.f32 %v2196, %v2269
    %v2271 = vpop.f32.mrf.mxu0
    %2272 = vmatprep.mubr.f32.mxu0 0.0
    %2273 = vmatmul.mubr.f32.gmra.mxu0 %v2201
    %v2274 = vpop.f32.mrf.mxu0
    %v2275 = vadd.f32 %v2196, %v2274
    %v2276 = vpop.f32.mrf.mxu0
    %2277 = vdwg.mxu0
    %2280 = vset.pattern.permute.xlu0 0
    %2281 = vperm.xlu0 %2280, %v2270
    %v2282 = vpop.permute.xlu0 %2281
    %2283 = vset.pattern.permute.xlu0 0
    %2284 = vperm.xlu0 %2283, %v2275
    %v2285 = vpop.permute.xlu0 %2284
    %v2286 = vlaneseq
    %v2287 = vshrl.u32 %v2286, 7
    %v2288 = vsub.s32 %v1204, %v2287
    %v2289 = vrot.slane %v2282, %v2288
    %v2290 = vlaneseq
    %v2291 = vshrl.u32 %v2290, 7
    %v2292 = vsub.s32 %v1204, %v2291
    %v2293 = vrot.slane %v2285, %v2292
    %2296 = vst.msk [vmem:[#allocation31] sm:$0x1] %vm1215, %v2289
    %2297 = vst.msk [vmem:[#allocation31 + $0x2] sm:$0x1] %vm1215, %v2293
    %v2300 = vmul.f32 %v615, %v2282
    %v2301 = vmul.f32 %v617, %v2285
    %v2302 = vsel %vm274, %v2300, 0.0
    %v2303 = vrot.slane %v2302, 4
    %v2304 = vadd.f32 %v2302, %v2303
    %v2305 = vrot.slane %v2304, 2
    %v2306 = vadd.f32 %v2304, %v2305
    %v2307 = vrot.slane %v2306, 1
    %v2308 = vadd.f32 %v2306, %v2307
    %v2309 = vsel %vm274, %v2301, 0.0
    %v2310 = vrot.slane %v2309, 4
    %v2311 = vadd.f32 %v2309, %v2310
    %v2312 = vrot.slane %v2311, 2
    %v2313 = vadd.f32 %v2311, %v2312
    %v2314 = vrot.slane %v2313, 1
    %v2315 = vadd.f32 %v2313, %v2314
    %v2318 = vsel %vm1238, %v2315, %v2308
    %2320 = vst.msk [vmem:[#allocation28] sm:$0x3] %vm1241, %v2318
    %2321 = vmatprep.subr.mxu0 0.0
    %2322 = vmatpush1.msra.mxu0 0.0
    %2323 = vmatprep.subr.mxu0 0.0
    %2324 = vmatpush1.msra.mxu0 0.0
    %2325 = vmatprep.subr.mxu0 0.0
    %2326 = vmatpush1.msra.mxu0 0.0
    %2327 = vmatprep.subr.mxu0 0.0
    %2328 = vmatpush1.msra.mxu0 0.0
    %2329 = vmatprep.subr.mxu0 0.0
    %2330 = vmatpush1.msra.mxu0 0.0
    %2331 = vmatprep.subr.mxu0 0.0
    %2332 = vmatpush1.msra.mxu0 0.0
    %2333 = vmatprep.subr.mxu0 0.0
    %2334 = vmatpush1.msra.mxu0 0.0
    %2335 = vmatprep.subr.mxu0 0.0
    %2336 = vmatpush1.msra.mxu0 0.0
    %2337 = vmatprep.subr.mxu0 0.0
    %2338 = vmatpush1.msra.mxu0 0.0
    %2339 = vmatprep.subr.mxu0 0.0
    %2340 = vmatpush1.msra.mxu0 0.0
    %2341 = vmatprep.subr.mxu0 0.0
    %2342 = vmatpush1.msra.mxu0 0.0
    %2343 = vmatprep.subr.mxu0 0.0
    %2344 = vmatpush1.msra.mxu0 0.0
    %2345 = vmatprep.subr.mxu0 0.0
    %2346 = vmatpush1.msra.mxu0 0.0
    %2347 = vmatprep.subr.mxu0 0.0
    %2348 = vmatpush1.msra.mxu0 0.0
    %2349 = vmatprep.subr.mxu0 0.0
    %2350 = vmatpush1.msra.mxu0 %v1748
    %2351 = vmatprep.subr.mxu0 0.0
    %2352 = vmatpush1.msra.mxu0 %v1747
    %2353 = vmatprep.subr.mxu0 0.0
    %2354 = vmatpush2.msra.mxu0 0.0
    %2355 = vmatprep.subr.mxu0 0.0
    %2356 = vmatpush2.msra.mxu0 0.0
    %2357 = vmatprep.subr.mxu0 0.0
    %2358 = vmatpush2.msra.mxu0 0.0
    %2359 = vmatprep.subr.mxu0 0.0
    %2360 = vmatpush2.msra.mxu0 0.0
    %2361 = vmatprep.subr.mxu0 0.0
    %2362 = vmatpush2.msra.mxu0 0.0
    %2363 = vmatprep.subr.mxu0 0.0
    %2364 = vmatpush2.msra.mxu0 0.0
    %2365 = vmatprep.subr.mxu0 0.0
    %2366 = vmatpush2.msra.mxu0 0.0
    %2367 = vmatprep.subr.mxu0 0.0
    %2368 = vmatpush2.msra.mxu0 0.0
    %2369 = vmatprep.subr.mxu0 0.0
    %2370 = vmatpush2.msra.mxu0 0.0
    %2371 = vmatprep.subr.mxu0 0.0
    %2372 = vmatpush2.msra.mxu0 0.0
    %2373 = vmatprep.subr.mxu0 0.0
    %2374 = vmatpush2.msra.mxu0 0.0
    %2375 = vmatprep.subr.mxu0 0.0
    %2376 = vmatpush2.msra.mxu0 0.0
    %2377 = vmatprep.subr.mxu0 0.0
    %2378 = vmatpush2.msra.mxu0 0.0
    %2379 = vmatprep.subr.mxu0 0.0
    %2380 = vmatpush2.msra.mxu0 0.0
    %2381 = vmatprep.subr.mxu0 0.0
    %2382 = vmatpush2.msra.mxu0 0.0
    %2383 = vmatprep.subr.mxu0 0.0
    %2384 = vmatpush2.msra.mxu0 0.0
    %2385 = vmatprep.mubr.f32.mxu0 0.0
    %2386 = vmatmul.mubr.f32.gmra.mxu0 %v1245
    %v2387 = vpop.f32.mrf.mxu0
    %v2388 = vadd.f32 0.0, %v2387
    %v2389 = vpop.f32.mrf.mxu0
    %2390 = vdwg.mxu0
    %v2391 = vadd.f32 %v1826, %v2388
    %2392 = vrot.lane.b32.xlu0 %v1900, 112
    %v2393 = vpop.permute.xlu0 %2392
    %2394 = vrot.lane.b32.xlu0 %v1901, 112
    %v2395 = vpop.permute.xlu0 %2394
    %v2396 = vsel %vm274, %v2393, 0
    %v2398 = vsel %vm274, %v2395, 0
    %2400 = vmatprep.subr.mxu0 0.0
    %2401 = vmatpush1.msra.mxu0 0.0
    %2402 = vmatprep.subr.mxu0 0.0
    %2403 = vmatpush1.msra.mxu0 0.0
    %2404 = vmatprep.subr.mxu0 0.0
    %2405 = vmatpush1.msra.mxu0 0.0
    %2406 = vmatprep.subr.mxu0 0.0
    %2407 = vmatpush1.msra.mxu0 0.0
    %2408 = vmatprep.subr.mxu0 0.0
    %2409 = vmatpush1.msra.mxu0 0.0
    %2410 = vmatprep.subr.mxu0 0.0
    %2411 = vmatpush1.msra.mxu0 0.0
    %2412 = vmatprep.subr.mxu0 0.0
    %2413 = vmatpush1.msra.mxu0 0.0
    %2414 = vmatprep.subr.mxu0 0.0
    %2415 = vmatpush1.msra.mxu0 0.0
    %2416 = vmatprep.subr.mxu0 0.0
    %2417 = vmatpush1.msra.mxu0 0.0
    %2418 = vmatprep.subr.mxu0 0.0
    %2419 = vmatpush1.msra.mxu0 0.0
    %2420 = vmatprep.subr.mxu0 0.0
    %2421 = vmatpush1.msra.mxu0 0.0
    %2422 = vmatprep.subr.mxu0 0.0
    %2423 = vmatpush1.msra.mxu0 0.0
    %2424 = vmatprep.subr.mxu0 0.0
    %2425 = vmatpush1.msra.mxu0 0.0
    %2426 = vmatprep.subr.mxu0 0.0
    %2427 = vmatpush1.msra.mxu0 0.0
    %2428 = vmatprep.subr.mxu0 0.0
    %2429 = vmatpush1.msra.mxu0 %v1744
    %2430 = vmatprep.subr.mxu0 0.0
    %2431 = vmatpush1.msra.mxu0 %v1743
    %2432 = vmatprep.subr.mxu0 0.0
    %2433 = vmatpush2.msra.mxu0 0.0
    %2434 = vmatprep.subr.mxu0 0.0
    %2435 = vmatpush2.msra.mxu0 0.0
    %2436 = vmatprep.subr.mxu0 0.0
    %2437 = vmatpush2.msra.mxu0 0.0
    %2438 = vmatprep.subr.mxu0 0.0
    %2439 = vmatpush2.msra.mxu0 0.0
    %2440 = vmatprep.subr.mxu0 0.0
    %2441 = vmatpush2.msra.mxu0 0.0
    %2442 = vmatprep.subr.mxu0 0.0
    %2443 = vmatpush2.msra.mxu0 0.0
    %2444 = vmatprep.subr.mxu0 0.0
    %2445 = vmatpush2.msra.mxu0 0.0
    %2446 = vmatprep.subr.mxu0 0.0
    %2447 = vmatpush2.msra.mxu0 0.0
    %2448 = vmatprep.subr.mxu0 0.0
    %2449 = vmatpush2.msra.mxu0 0.0
    %2450 = vmatprep.subr.mxu0 0.0
    %2451 = vmatpush2.msra.mxu0 0.0
    %2452 = vmatprep.subr.mxu0 0.0
    %2453 = vmatpush2.msra.mxu0 0.0
    %2454 = vmatprep.subr.mxu0 0.0
    %2455 = vmatpush2.msra.mxu0 0.0
    %2456 = vmatprep.subr.mxu0 0.0
    %2457 = vmatpush2.msra.mxu0 0.0
    %2458 = vmatprep.subr.mxu0 0.0
    %2459 = vmatpush2.msra.mxu0 0.0
    %2460 = vmatprep.subr.mxu0 0.0
    %2461 = vmatpush2.msra.mxu0 0.0
    %2462 = vmatprep.subr.mxu0 0.0
    %2463 = vmatpush2.msra.mxu0 0.0
    %2464 = vmatprep.mubr.f32.mxu0 0.0
    %2465 = vmatmul.mubr.f32.gmra.mxu0 %v2396
    %v2466 = vpop.f32.mrf.mxu0
    %v2467 = vadd.f32 0.0, %v2466
    %v2468 = vpop.f32.mrf.mxu0
    %2469 = vmatprep.mubr.f32.mxu0 0.0
    %2470 = vmatmul.mubr.f32.gmra.mxu0 %v2398
    %v2471 = vpop.f32.mrf.mxu0
    %v2472 = vadd.f32 0.0, %v2471
    %v2473 = vpop.f32.mrf.mxu0
    %2474 = vdwg.mxu0
    %2475 = vrot.lane.b32.xlu0 %v615, 112
    %v2476 = vpop.permute.xlu0 %2475
    %2477 = vrot.lane.b32.xlu0 %v617, 112
    %v2478 = vpop.permute.xlu0 %2477
    %v2479 = vsel %vm274, %v2476, 0
    %v2481 = vsel %vm274, %v2478, 0
    %2483 = vmatprep.subr.mxu0 0.0
    %2484 = vmatpush1.msra.mxu0 0.0
    %2485 = vmatprep.subr.mxu0 0.0
    %2486 = vmatpush1.msra.mxu0 0.0
    %2487 = vmatprep.subr.mxu0 0.0
    %2488 = vmatpush1.msra.mxu0 0.0
    %2489 = vmatprep.subr.mxu0 0.0
    %2490 = vmatpush1.msra.mxu0 0.0
    %2491 = vmatprep.subr.mxu0 0.0
    %2492 = vmatpush1.msra.mxu0 0.0
    %2493 = vmatprep.subr.mxu0 0.0
    %2494 = vmatpush1.msra.mxu0 0.0
    %2495 = vmatprep.subr.mxu0 0.0
    %2496 = vmatpush1.msra.mxu0 0.0
    %2497 = vmatprep.subr.mxu0 0.0
    %2498 = vmatpush1.msra.mxu0 0.0
    %2499 = vmatprep.subr.mxu0 0.0
    %2500 = vmatpush1.msra.mxu0 0.0
    %2501 = vmatprep.subr.mxu0 0.0
    %2502 = vmatpush1.msra.mxu0 0.0
    %2503 = vmatprep.subr.mxu0 0.0
    %2504 = vmatpush1.msra.mxu0 0.0
    %2505 = vmatprep.subr.mxu0 0.0
    %2506 = vmatpush1.msra.mxu0 0.0
    %2507 = vmatprep.subr.mxu0 0.0
    %2508 = vmatpush1.msra.mxu0 0.0
    %2509 = vmatprep.subr.mxu0 0.0
    %2510 = vmatpush1.msra.mxu0 0.0
    %2511 = vmatprep.subr.mxu0 0.0
    %2512 = vmatpush1.msra.mxu0 %v1742
    %2513 = vmatprep.subr.mxu0 0.0
    %2514 = vmatpush1.msra.mxu0 %v1741
    %2515 = vmatprep.subr.mxu0 0.0
    %2516 = vmatpush2.msra.mxu0 0.0
    %2517 = vmatprep.subr.mxu0 0.0
    %2518 = vmatpush2.msra.mxu0 0.0
    %2519 = vmatprep.subr.mxu0 0.0
    %2520 = vmatpush2.msra.mxu0 0.0
    %2521 = vmatprep.subr.mxu0 0.0
    %2522 = vmatpush2.msra.mxu0 0.0
    %2523 = vmatprep.subr.mxu0 0.0
    %2524 = vmatpush2.msra.mxu0 0.0
    %2525 = vmatprep.subr.mxu0 0.0
    %2526 = vmatpush2.msra.mxu0 0.0
    %2527 = vmatprep.subr.mxu0 0.0
    %2528 = vmatpush2.msra.mxu0 0.0
    %2529 = vmatprep.subr.mxu0 0.0
    %2530 = vmatpush2.msra.mxu0 0.0
    %2531 = vmatprep.subr.mxu0 0.0
    %2532 = vmatpush2.msra.mxu0 0.0
    %2533 = vmatprep.subr.mxu0 0.0
    %2534 = vmatpush2.msra.mxu0 0.0
    %2535 = vmatprep.subr.mxu0 0.0
    %2536 = vmatpush2.msra.mxu0 0.0
    %2537 = vmatprep.subr.mxu0 0.0
    %2538 = vmatpush2.msra.mxu0 0.0
    %2539 = vmatprep.subr.mxu0 0.0
    %2540 = vmatpush2.msra.mxu0 0.0
    %2541 = vmatprep.subr.mxu0 0.0
    %2542 = vmatpush2.msra.mxu0 0.0
    %2543 = vmatprep.subr.mxu0 0.0
    %2544 = vmatpush2.msra.mxu0 0.0
    %2545 = vmatprep.subr.mxu0 0.0
    %2546 = vmatpush2.msra.mxu0 0.0
    %2547 = vmatprep.mubr.f32.mxu0 0.0
    %2548 = vmatmul.mubr.f32.gmra.mxu0 %v2479
    %v2549 = vpop.f32.mrf.mxu0
    %v2550 = vadd.f32 %v2467, %v2549
    %v2551 = vpop.f32.mrf.mxu0
    %2552 = vmatprep.mubr.f32.mxu0 0.0
    %2553 = vmatmul.mubr.f32.gmra.mxu0 %v2481
    %v2554 = vpop.f32.mrf.mxu0
    %v2555 = vadd.f32 %v2472, %v2554
    %v2556 = vpop.f32.mrf.mxu0
    %2557 = vdwg.mxu0
    %2558 = vrot.lane.b32.xlu0 %v1902, 112
    %v2559 = vpop.permute.xlu0 %2558
    %2560 = vrot.lane.b32.xlu0 %v1903, 112
    %v2561 = vpop.permute.xlu0 %2560
    %v2562 = vsel %vm274, %v2559, 0
    %v2564 = vsel %vm274, %v2561, 0
    %2566 = vmatprep.subr.mxu0 0.0
    %2567 = vmatpush1.msra.mxu0 0.0
    %2568 = vmatprep.subr.mxu0 0.0
    %2569 = vmatpush1.msra.mxu0 0.0
    %2570 = vmatprep.subr.mxu0 0.0
    %2571 = vmatpush1.msra.mxu0 0.0
    %2572 = vmatprep.subr.mxu0 0.0
    %2573 = vmatpush1.msra.mxu0 0.0
    %2574 = vmatprep.subr.mxu0 0.0
    %2575 = vmatpush1.msra.mxu0 0.0
    %2576 = vmatprep.subr.mxu0 0.0
    %2577 = vmatpush1.msra.mxu0 0.0
    %2578 = vmatprep.subr.mxu0 0.0
    %2579 = vmatpush1.msra.mxu0 0.0
    %2580 = vmatprep.subr.mxu0 0.0
    %2581 = vmatpush1.msra.mxu0 0.0
    %2582 = vmatprep.subr.mxu0 0.0
    %2583 = vmatpush1.msra.mxu0 0.0
    %2584 = vmatprep.subr.mxu0 0.0
    %2585 = vmatpush1.msra.mxu0 0.0
    %2586 = vmatprep.subr.mxu0 0.0
    %2587 = vmatpush1.msra.mxu0 0.0
    %2588 = vmatprep.subr.mxu0 0.0
    %2589 = vmatpush1.msra.mxu0 0.0
    %2590 = vmatprep.subr.mxu0 0.0
    %2591 = vmatpush1.msra.mxu0 0.0
    %2592 = vmatprep.subr.mxu0 0.0
    %2593 = vmatpush1.msra.mxu0 0.0
    %2594 = vmatprep.subr.mxu0 0.0
    %2595 = vmatpush1.msra.mxu0 %v1746
    %2596 = vmatprep.subr.mxu0 0.0
    %2597 = vmatpush1.msra.mxu0 %v1745
    %2598 = vmatprep.subr.mxu0 0.0
    %2599 = vmatpush2.msra.mxu0 0.0
    %2600 = vmatprep.subr.mxu0 0.0
    %2601 = vmatpush2.msra.mxu0 0.0
    %2602 = vmatprep.subr.mxu0 0.0
    %2603 = vmatpush2.msra.mxu0 0.0
    %2604 = vmatprep.subr.mxu0 0.0
    %2605 = vmatpush2.msra.mxu0 0.0
    %2606 = vmatprep.subr.mxu0 0.0
    %2607 = vmatpush2.msra.mxu0 0.0
    %2608 = vmatprep.subr.mxu0 0.0
    %2609 = vmatpush2.msra.mxu0 0.0
    %2610 = vmatprep.subr.mxu0 0.0
    %2611 = vmatpush2.msra.mxu0 0.0
    %2612 = vmatprep.subr.mxu0 0.0
    %2613 = vmatpush2.msra.mxu0 0.0
    %2614 = vmatprep.subr.mxu0 0.0
    %2615 = vmatpush2.msra.mxu0 0.0
    %2616 = vmatprep.subr.mxu0 0.0
    %2617 = vmatpush2.msra.mxu0 0.0
    %2618 = vmatprep.subr.mxu0 0.0
    %2619 = vmatpush2.msra.mxu0 0.0
    %2620 = vmatprep.subr.mxu0 0.0
    %2621 = vmatpush2.msra.mxu0 0.0
    %2622 = vmatprep.subr.mxu0 0.0
    %2623 = vmatpush2.msra.mxu0 0.0
    %2624 = vmatprep.subr.mxu0 0.0
    %2625 = vmatpush2.msra.mxu0 0.0
    %2626 = vmatprep.subr.mxu0 0.0
    %2627 = vmatpush2.msra.mxu0 0.0
    %2628 = vmatprep.subr.mxu0 0.0
    %2629 = vmatpush2.msra.mxu0 0.0
    %2630 = vmatprep.mubr.f32.mxu0 0.0
    %2631 = vmatmul.mubr.f32.gmra.mxu0 %v2562
    %v2632 = vpop.f32.mrf.mxu0
    %v2633 = vadd.f32 0.0, %v2632
    %v2634 = vpop.f32.mrf.mxu0
    %2635 = vmatprep.mubr.f32.mxu0 0.0
    %2636 = vmatmul.mubr.f32.gmra.mxu0 %v2564
    %v2637 = vpop.f32.mrf.mxu0
    %v2638 = vadd.f32 0.0, %v2637
    %v2639 = vpop.f32.mrf.mxu0
    %2640 = vdwg.mxu0
    %v2641 = vadd.f32 %v2550, %v2633
    %v2642 = vadd.f32 %v2555, %v2638
    %v2645 = vunpack.c.l.s4 1966171168
    %v2646 = vunpack.c.0.s8 %v2645
    %v2647 = vlaneseq
    %v2648 = vshrl.u32 %v2647, 7
    %v2649 = vsub.s32 %v2646, %v2648
    %v2650 = vrot.slane %v2391, %v2649
    %v2651 = vcombine.high %v2650, %v2650
    %v2653 = vunpack.c.l.s4 1966171168
    %v2654 = vunpack.c.0.s8 %v2653
    %v2655 = vlaneseq
    %v2656 = vshrl.u32 %v2655, 7
    %v2657 = vsub.s32 %v2654, %v2656
    %v2658 = vrot.slane %v2650, %v2657
    %v2660 = vunpack.c.l.s4 1966171168
    %v2661 = vunpack.c.0.s8 %v2660
    %v2662 = vlaneseq
    %v2663 = vshrl.u32 %v2662, 7
    %v2664 = vsub.s32 %v2661, %v2663
    %v2665 = vrot.slane %v2651, %v2664
    %v2666 = vlaneseq
    %v2667 = vshrl.u32 %v2666, 7
    %v2668 = vsub.s32 0, %v2667
    %v2669 = vrot.slane %v2658, %v2668
    %v2670 = vlaneseq
    %v2671 = vshrl.u32 %v2670, 7
    %v2672 = vsub.s32 0, %v2671
    %v2673 = vrot.slane %v2665, %v2672
    %v2676 = vadd.f32 %v2641, %v2669
    %v2677 = vadd.f32 %v2642, %v2673
    %vm2678 = vcmp.gt.f32.partialorder %v2676, 0.0
    %vm2679 = vcmp.gt.f32.partialorder %v2677, 0.0
    %v2680 = vmul.f32 %v2186, %v2676
    %v2681 = vmul.f32 %v2186, %v2677
    %v2682 = vsel %vm2678, %v2676, %v2680
    %v2683 = vsel %vm2679, %v2677, %v2681
    %v2684 = vld [vmem:[%s16] sm:$0xff]
    %v2685 = vld [vmem:[%s16 + $0x8] sm:$0xff]
    %v2686 = vld [vmem:[%s16 + $0x10] sm:$0xff]
    %v2687 = vld [vmem:[%s16 + $0x18] sm:$0xff]
    %v2688 = vld [vmem:[%s16 + $0x20] sm:$0xff]
    %v2690 = vsel %vm1113, %v2682, 0
    %v2693 = vsel %vm1113, %v2683, 0
    %2695 = vmatprep.subr.mxu0 0.0
    %2696 = vmatpush1.msra.mxu0 0.0
    %2697 = vmatprep.subr.mxu0 0.0
    %2698 = vmatpush1.msra.mxu0 0.0
    %2699 = vmatprep.subr.mxu0 0.0
    %2700 = vmatpush1.msra.mxu0 0.0
    %2701 = vmatprep.subr.mxu0 0.0
    %2702 = vmatpush1.msra.mxu0 0.0
    %2703 = vmatprep.subr.mxu0 0.0
    %2704 = vmatpush1.msra.mxu0 0.0
    %2705 = vmatprep.subr.mxu0 0.0
    %2706 = vmatpush1.msra.mxu0 0.0
    %2707 = vmatprep.subr.mxu0 0.0
    %2708 = vmatpush1.msra.mxu0 0.0
    %2709 = vmatprep.subr.mxu0 0.0
    %2710 = vmatpush1.msra.mxu0 0.0
    %2711 = vmatprep.subr.mxu0 0.0
    %2712 = vmatpush1.msra.mxu0 0.0
    %2713 = vmatprep.subr.mxu0 0.0
    %2714 = vmatpush1.msra.mxu0 0.0
    %2715 = vmatprep.subr.mxu0 0.0
    %2716 = vmatpush1.msra.mxu0 0.0
    %2717 = vmatprep.subr.mxu0 0.0
    %2718 = vmatpush1.msra.mxu0 %v2688
    %2719 = vmatprep.subr.mxu0 0.0
    %2720 = vmatpush1.msra.mxu0 %v2687
    %2721 = vmatprep.subr.mxu0 0.0
    %2722 = vmatpush1.msra.mxu0 %v2686
    %2723 = vmatprep.subr.mxu0 0.0
    %2724 = vmatpush1.msra.mxu0 %v2685
    %2725 = vmatprep.subr.mxu0 0.0
    %2726 = vmatpush1.msra.mxu0 %v2684
    %2727 = vmatprep.subr.mxu0 0.0
    %2728 = vmatpush2.msra.mxu0 0.0
    %2729 = vmatprep.subr.mxu0 0.0
    %2730 = vmatpush2.msra.mxu0 0.0
    %2731 = vmatprep.subr.mxu0 0.0
    %2732 = vmatpush2.msra.mxu0 0.0
    %2733 = vmatprep.subr.mxu0 0.0
    %2734 = vmatpush2.msra.mxu0 0.0
    %2735 = vmatprep.subr.mxu0 0.0
    %2736 = vmatpush2.msra.mxu0 0.0
    %2737 = vmatprep.subr.mxu0 0.0
    %2738 = vmatpush2.msra.mxu0 0.0
    %2739 = vmatprep.subr.mxu0 0.0
    %2740 = vmatpush2.msra.mxu0 0.0
    %2741 = vmatprep.subr.mxu0 0.0
    %2742 = vmatpush2.msra.mxu0 0.0
    %2743 = vmatprep.subr.mxu0 0.0
    %2744 = vmatpush2.msra.mxu0 0.0
    %2745 = vmatprep.subr.mxu0 0.0
    %2746 = vmatpush2.msra.mxu0 0.0
    %2747 = vmatprep.subr.mxu0 0.0
    %2748 = vmatpush2.msra.mxu0 0.0
    %2749 = vmatprep.subr.mxu0 0.0
    %2750 = vmatpush2.msra.mxu0 0.0
    %2751 = vmatprep.subr.mxu0 0.0
    %2752 = vmatpush2.msra.mxu0 0.0
    %2753 = vmatprep.subr.mxu0 0.0
    %2754 = vmatpush2.msra.mxu0 0.0
    %2755 = vmatprep.subr.mxu0 0.0
    %2756 = vmatpush2.msra.mxu0 0.0
    %2757 = vmatprep.subr.mxu0 0.0
    %2758 = vmatpush2.msra.mxu0 0.0
    %2759 = vmatprep.mubr.f32.mxu0 0.0
    %2760 = vmatmul.mubr.f32.gmra.mxu0 %v2690
    %v2761 = vpop.f32.mrf.mxu0
    %v2762 = vadd.f32 %v2196, %v2761
    %v2763 = vpop.f32.mrf.mxu0
    %2764 = vmatprep.mubr.f32.mxu0 0.0
    %2765 = vmatmul.mubr.f32.gmra.mxu0 %v2693
    %v2766 = vpop.f32.mrf.mxu0
    %v2767 = vadd.f32 %v2196, %v2766
    %v2768 = vpop.f32.mrf.mxu0
    %2769 = vdwg.mxu0
    %2772 = vset.pattern.permute.xlu0 0
    %2773 = vperm.xlu0 %2772, %v2762
    %v2774 = vpop.permute.xlu0 %2773
    %2775 = vset.pattern.permute.xlu0 0
    %2776 = vperm.xlu0 %2775, %v2767
    %v2777 = vpop.permute.xlu0 %2776
    %v2778 = vlaneseq
    %v2779 = vshrl.u32 %v2778, 7
    %v2780 = vsub.s32 %v1204, %v2779
    %v2781 = vrot.slane %v2774, %v2780
    %v2782 = vlaneseq
    %v2783 = vshrl.u32 %v2782, 7
    %v2784 = vsub.s32 %v1204, %v2783
    %v2785 = vrot.slane %v2777, %v2784
    %2788 = vst.msk [vmem:[#allocation31 + $0x1] sm:$0x1] %vm1215, %v2781
    %2789 = vst.msk [vmem:[#allocation31 + $0x3] sm:$0x1] %vm1215, %v2785
    %v2792 = vmul.f32 %v615, %v2774
    %v2793 = vmul.f32 %v617, %v2777
    %v2794 = vsel %vm1720, %v2792, 0.0
    %v2795 = vrot.slane %v2794, 4
    %v2796 = vadd.f32 %v2794, %v2795
    %v2797 = vrot.slane %v2796, 2
    %v2798 = vadd.f32 %v2796, %v2797
    %v2799 = vrot.slane %v2798, 1
    %v2800 = vadd.f32 %v2798, %v2799
    %v2801 = vsel %vm1720, %v2793, 0.0
    %v2802 = vrot.slane %v2801, 4
    %v2803 = vadd.f32 %v2801, %v2802
    %v2804 = vrot.slane %v2803, 2
    %v2805 = vadd.f32 %v2803, %v2804
    %v2806 = vrot.slane %v2805, 1
    %v2807 = vadd.f32 %v2805, %v2806
    %v2810 = vsel %vm1238, %v2807, %v2800
    %2812 = vst.msk [vmem:[#allocation28] sm:$0x3] %vm1739, %v2810
    // Predicated region
    $region130: #{_lambda_.1} parent=1 // pred_check
      _
    $region131: #{_lambda_.1} parent=1 // pred_check_branch
      %2814 = sbr.rel (0) target = $region133
    $region132: #{_lambda_.1} parent=1 // pred_region
      %s2816 = ssub.s32 32, 32
      %2817 = vsyncadd [#allocation4], %s2816
      %s2819 = sshll.u32 [#allocation27], 4
      %s2820 = int_to_ptr.vmem [resolvable:$true] %s2819
      %2822 = dma.vmem_to_hbm [thread:$0]  %s2820, 32, %s17, [#allocation4]
    $region133: #{_lambda_.1} parent=1 // pred_fallthru
      _
    // Predicated region
    $region134: #{_lambda_.1} parent=1 // pred_check
      _
    $region135: #{_lambda_.1} parent=1 // pred_check_branch
      %2824 = sbr.rel (0) target = $region137
    $region136: #{_lambda_.1} parent=1 // pred_region
      %s2826 = ssub.s32 32, 32
      %2827 = vsyncadd [#allocation29], %s2826
      %s2829 = sshll.u32 [#allocation28], 4
      %s2830 = int_to_ptr.vmem [resolvable:$true] %s2829
      %2832 = dma.vmem_to_hbm [thread:$0]  %s2830, 32, %s18, [#allocation29]
    $region137: #{_lambda_.1} parent=1 // pred_fallthru
      _
    // Predicated region
    $region138: #{_lambda_.1} parent=1 // pred_check
      _
    $region139: #{_lambda_.1} parent=1 // pred_check_branch
      %2834 = sbr.rel (0) target = $region141
    $region140: #{_lambda_.1} parent=1 // pred_region
      %s2836 = ssub.s32 64, 64
      %2837 = vsyncadd [#allocation29], %s2836
      %s2838 = sshll.u32 [#allocation30], 4
      %s2839 = int_to_ptr.vmem [resolvable:$true] %s2838
      %2844 = dma.vmem_to_hbm [thread:$0]  %s2839, 64, %s19, [#allocation29], 32, 32, 2
    $region141: #{_lambda_.1} parent=1 // pred_fallthru
      _
    // Predicated region
    $region142: #{_lambda_.1} parent=1 // pred_check
      _
    $region143: #{_lambda_.1} parent=1 // pred_check_branch
      %2846 = sbr.rel (0) target = $region145
    $region144: #{_lambda_.1} parent=1 // pred_region
      %s2848 = ssub.s32 64, 64
      %2849 = vsyncadd [#allocation32], %s2848
      %s2850 = sshll.u32 [#allocation31], 4
      %s2851 = int_to_ptr.vmem [resolvable:$true] %s2850
      %2856 = dma.vmem_to_hbm [thread:$0]  %s2851, 64, %s20, [#allocation32], 32, 32, 2
    $region145: #{_lambda_.1} parent=1 // pred_fallthru
      _
    // Predicated region
    $region146: #{_lambda_.1} parent=1 // pred_check
      _
    $region147: #{_lambda_.1} parent=1 // pred_check_branch
      %2858 = sbr.rel (0) target = $region149
    $region148: #{_lambda_.1} parent=1 // pred_region
      %2859 = dma.done [#allocation4], 32
    $region149: #{_lambda_.1} parent=1 // pred_fallthru
      _
    // Predicated region
    $region150: #{_lambda_.1} parent=1 // pred_check
      _
    $region151: #{_lambda_.1} parent=1 // pred_check_branch
      %2861 = sbr.rel (0) target = $region153
    $region152: #{_lambda_.1} parent=1 // pred_region
      %2862 = dma.done [#allocation29], 32
    $region153: #{_lambda_.1} parent=1 // pred_fallthru
      _
    // Predicated region
    $region154: #{_lambda_.1} parent=1 // pred_check
      _
    $region155: #{_lambda_.1} parent=1 // pred_check_branch
      %2864 = sbr.rel (0) target = $region157
    $region156: #{_lambda_.1} parent=1 // pred_region
      %2865 = dma.done [#allocation29], 64
    $region157: #{_lambda_.1} parent=1 // pred_fallthru
      _
    // Predicated region
    $region158: #{_lambda_.1} parent=1 // pred_check
      _
    $region159: #{_lambda_.1} parent=1 // pred_check_branch
      %2867 = sbr.rel (0) target = $region161
    $region160: #{_lambda_.1} parent=1 // pred_region
      %2868 = dma.done [#allocation32], 64
    $region161: #{_lambda_.1} parent=1 // pred_fallthru
      _
    %2869 = vsyncpa [#allocation3], 1
    %2870 = vsyncpa [#allocation8], 1
    %2871 = vsyncpa [#allocation11], 1
    %2872 = vsyncpa [#allocation14], 1
    %2873 = vsyncpa [#allocation17], 1
    %2874 = vsyncpa [#allocation20], 1
    %2875 = vsyncpa [#allocation23], 1
    %2876 = vsyncpa [#allocation26], 1
    %2877 = vsyncpa [#allocation4], 1
    %2878 = vsyncpa [#allocation29], 1
    %2879 = vsyncpa [#allocation32], 1
    %2880 = vsyncpa [#allocation5], 1

</llo_original>
